<compile_context>
chip_gen: v7x
topology: tpu7x:2x2x1
jax: 0.10.0
libtpu: 0.0.40
codegen_flags: <defaults>
</compile_context>

<pallas_src>
import math
from functools import partial

import jax
import jax.numpy as jnp
from jax import lax
from jax.experimental import pallas as pl
from jax.experimental.pallas import tpu as pltpu

# ---- config (consistent with TransformerEncoderLayer(d_model, nhead, dim_feedforward)) ----
D_MODEL = 32
NHEAD = 4
DIM_FF = 64
NUM_LAYERS = 2
SEQ = 8
BATCH = 2
LN_EPS = 1e-5
SLAB_W = 128   # lane-padded width of the packed parameter slab

_VMEM = pl.BlockSpec(memory_space=pltpu.MemorySpace.VMEM)

# TODO(synk): src_mask / src_key_padding_mask are not implemented (forward is exercised with
# None); they would fold into the same additive (R, R) attention bias built in-kernel.


def _layernorm(x, w, b):
    mu = jnp.mean(x, axis=-1, keepdims=True)
    var = jnp.mean((x - mu) ** 2, axis=-1, keepdims=True)
    return (x - mu) * lax.rsqrt(var + LN_EPS) * w + b


def encoder_kernel(x_ref, w_ref, o_ref, *, num_layers, nhead, d_model, d_ff, batch,
                   has_final_norm):
    D, FF, H = d_model, d_ff, nhead
    hd = D // H
    R = x_ref.shape[0]
    layer_rows = 3 * D + FF + 8          # wqkv | woT | w1T | w2T | 8 vector rows

    # Batch-separation bias generated in-kernel (row = s*batch + b): 0 where the two rows
    # share a batch index, -1e30 otherwise.  A few VPU ops instead of an input DMA.
    ri = lax.broadcasted_iota(jnp.int32, (R, R), 0)
    rj = lax.broadcasted_iota(jnp.int32, (R, R), 1)
    attn_bias = jnp.where((ri % batch) == (rj % batch), 0.0, -1e30).astype(jnp.float32)

    x = x_ref[...].astype(jnp.float32)   # activation stays resident across all layers

    for layer in range(num_layers):      # static unroll over layers (fused stack)
        base = layer * layer_rows
        wqkv = w_ref[base:base + D, :3 * D]                  # (D, 3D), softmax scale folded in
        woT = w_ref[base + D:base + 2 * D, :D]               # (D, D)
        w1T = w_ref[base + 2 * D:base + 3 * D, :FF]          # (D, FF)
        w2T = w_ref[base + 3 * D:base + 3 * D + FF, :D]      # (FF, D)
        vec = w_ref[base + 3 * D + FF:base + layer_rows, :]  # (8, SLAB_W) vector params
        bqkv = vec[0:1, :3 * D]
        bo = vec[1:2, :D]
        ln1w = vec[2:3, :D]
        ln1b = vec[3:4, :D]
        b1 = vec[4:5, :FF]
        b2 = vec[5:6, :D]
        ln2w = vec[6:7, :D]
        ln2b = vec[7:8, :D]

        # --- fused QKV projection: one lane-dense (R, D) @ (D, 3D) MXU push ---
        qkv = jnp.dot(x, wqkv, preferred_element_type=jnp.float32) + bqkv   # (R, 3D)

        # --- per-head attention on static lane slices of the fused projection ---
        ctx_heads = []
        for h in range(H):
            qh = qkv[:, h * hd:(h + 1) * hd]                  # (R, hd), already scaled
            kh = qkv[:, D + h * hd:D + (h + 1) * hd]          # (R, hd)
            vh = qkv[:, 2 * D + h * hd:2 * D + (h + 1) * hd]  # (R, hd)
            s = lax.dot_general(qh, kh, (((1,), (1,)), ((), ())),
                                preferred_element_type=jnp.float32) + attn_bias
            s = s - jnp.max(s, axis=-1, keepdims=True)
            e = jnp.exp(s)
            denom = jnp.sum(e, axis=-1, keepdims=True)        # (R, 1), >= 1 (diag unmasked)
            c = jnp.dot(e, vh, preferred_element_type=jnp.float32)
            ctx_heads.append(c * pl.reciprocal(denom, approx=True))   # divide on the EUP
        ctx = jnp.concatenate(ctx_heads, axis=-1)             # (R, D), head-major lane order

        # --- fused output projection: one lane-dense (R, D) @ (D, D) MXU push ---
        attn = jnp.dot(ctx, woT, preferred_element_type=jnp.float32) + bo
        x1 = _layernorm(x + attn, ln1w, ln1b)                 # dropout == identity (eval)

        # --- feed-forward (pre-transposed weights -> plain row-major dots) ---
        hmid = jnp.maximum(jnp.dot(x1, w1T, preferred_element_type=jnp.float32) + b1, 0.0)
        ff = jnp.dot(hmid, w2T, preferred_element_type=jnp.float32) + b2
        x = _layernorm(x1 + ff, ln2w, ln2b)

    if has_final_norm:
        base = num_layers * layer_rows
        x = _layernorm(x, w_ref[base:base + 1, :D], w_ref[base + 1:base + 2, :D])

    o_ref[...] = x.astype(o_ref.dtype)


def _pack_params(layer_params, norm_params, nhead):
    """PyTorch-layout params -> one lane-padded (rows, SLAB_W) f32 slab (host-side, free)."""
    D = layer_params[0][2].shape[0]      # wo is (D, D)
    FF = layer_params[0][6].shape[0]     # w1 is (FF, D)
    hd = D // nhead
    scale = 1.0 / math.sqrt(hd)

    def pad2d(a):
        a = jnp.asarray(a, jnp.float32)
        _, c = a.shape
        return jnp.zeros((a.shape[0], SLAB_W), jnp.float32).at[:, :c].set(a)

    blocks = []
    for p in layer_params:
        wqkv, bqkv, wo, bo, ln1w, ln1b, w1, b1, w2, b2, ln2w, ln2b = p
        wq, wk, wv = wqkv[:D], wqkv[D:2 * D], wqkv[2 * D:]
        bq, bk, bv = bqkv[:D], bqkv[D:2 * D], bqkv[2 * D:]
        # fold the 1/sqrt(head_dim) softmax scale into Wq / bq (host-side constant fold)
        wqkv_f = jnp.concatenate([wq.T * scale, wk.T, wv.T], axis=1)   # (D, 3D)
        bqkv_f = jnp.concatenate([bq * scale, bk, bv])                 # (3D,)
        blocks.append(pad2d(wqkv_f))     # D rows
        blocks.append(pad2d(wo.T))       # D rows
        blocks.append(pad2d(w1.T))       # D rows  (D, FF)
        blocks.append(pad2d(w2.T))       # FF rows (FF, D)
        vec = jnp.zeros((8, SLAB_W), jnp.float32)
        vec = vec.at[0, :3 * D].set(bqkv_f)
        vec = vec.at[1, :D].set(bo)
        vec = vec.at[2, :D].set(ln1w)
        vec = vec.at[3, :D].set(ln1b)
        vec = vec.at[4, :FF].set(b1)
        vec = vec.at[5, :D].set(b2)
        vec = vec.at[6, :D].set(ln2w)
        vec = vec.at[7, :D].set(ln2b)
        blocks.append(vec)
    if norm_params is not None:
        nvec = jnp.zeros((8, SLAB_W), jnp.float32)
        nvec = nvec.at[0, :D].set(norm_params[0])
        nvec = nvec.at[1, :D].set(norm_params[1])
        blocks.append(nvec)
    return jnp.concatenate(blocks, axis=0)


def transformer_encoder(src, layer_params, norm_params, *, nhead=NHEAD):
    """src: (S, B, D) -> (S, B, D). Whole encoder stack in a single pallas_call."""
    S, B, D = src.shape
    assert D % nhead == 0
    FF = layer_params[0][6].shape[0]
    x2d = src.reshape(S * B, D)          # free view (no transpose); row = s*B + b
    slab = _pack_params(layer_params, norm_params, nhead)

    kernel = partial(encoder_kernel,
                     num_layers=len(layer_params), nhead=nhead, d_model=D, d_ff=FF,
                     batch=B, has_final_norm=norm_params is not None)
    out2d = pl.pallas_call(
        kernel,
        out_shape=jax.ShapeDtypeStruct((S * B, D), src.dtype),
        in_specs=[_VMEM, _VMEM],         # 2 input DMAs total: activation + packed weight slab
        out_specs=_VMEM,
    )(x2d, slab)
    return out2d.reshape(S, B, D)


# ---------------- pure-JAX reference (PyTorch-layout weights, PyTorch math) ----------------
def _ln_ref(x, w, b):
    mu = jnp.mean(x, axis=-1, keepdims=True)
    var = jnp.mean((x - mu) ** 2, axis=-1, keepdims=True)
    return (x - mu) * lax.rsqrt(var + LN_EPS) * w + b


def _ref_layer(x, p, nhead):
    wqkv, bqkv, wo, bo, ln1w, ln1b, w1, b1, w2, b2, ln2w, ln2b = p
    B, S, D = x.shape
    hd = D // nhead
    qkv = x @ wqkv.T + bqkv
    q, k, v = jnp.split(qkv, 3, axis=-1)
    q = q.reshape(B, S, nhead, hd)
    k = k.reshape(B, S, nhead, hd)
    v = v.reshape(B, S, nhead, hd)
    s = jnp.einsum('bqhd,bkhd->bhqk', q, k) / math.sqrt(hd)
    a = jax.nn.softmax(s, axis=-1)
    ctx = jnp.einsum('bhqk,bkhd->bqhd', a, v).reshape(B, S, D)
    attn = ctx @ wo.T + bo
    x1 = _ln_ref(x + attn, ln1w, ln1b)
    h1 = jax.nn.relu(x1 @ w1.T + b1)
    ff = h1 @ w2.T + b2
    return _ln_ref(x1 + ff, ln2w, ln2b)


def _ref_encoder(src, layer_params, norm_params, nhead=NHEAD):
    x = jnp.transpose(src, (1, 0, 2))
    for p in layer_params:
        x = _ref_layer(x, p, nhead)
    if norm_params is not None:
        x = _ln_ref(x, norm_params[0], norm_params[1])
    return jnp.transpose(x, (1, 0, 2))


# ---------------- deterministic parameter init (PyTorch layout) ----------------
def init_layer_params(key):
    ks = jax.random.split(key, 8)
    f32 = jnp.float32
    wqkv = 0.05 * jax.random.normal(ks[0], (3 * D_MODEL, D_MODEL), f32)
    bqkv = 0.05 * jax.random.normal(ks[1], (3 * D_MODEL,), f32)
    wo = 0.05 * jax.random.normal(ks[2], (D_MODEL, D_MODEL), f32)
    bo = 0.05 * jax.random.normal(ks[3], (D_MODEL,), f32)
    ln1w = jnp.ones((D_MODEL,), f32)
    ln1b = jnp.zeros((D_MODEL,), f32)
    w1 = 0.05 * jax.random.normal(ks[4], (DIM_FF, D_MODEL), f32)
    b1 = 0.05 * jax.random.normal(ks[5], (DIM_FF,), f32)
    w2 = 0.05 * jax.random.normal(ks[6], (D_MODEL, DIM_FF), f32)
    b2 = 0.05 * jax.random.normal(ks[7], (D_MODEL,), f32)
    ln2w = jnp.ones((D_MODEL,), f32)
    ln2b = jnp.zeros((D_MODEL,), f32)
    return (wqkv, bqkv, wo, bo, ln1w, ln1b, w1, b1, w2, b2, ln2w, ln2b)


if __name__ == "__main__":
    root = jax.random.PRNGKey(0)
    k_src, k_layers = jax.random.split(root)

    src = jax.random.normal(k_src, (SEQ, BATCH, D_MODEL), jnp.float32)  # (S, B, D)

    layer_keys = jax.random.split(k_layers, NUM_LAYERS)
    layer_params = [init_layer_params(k) for k in layer_keys]
    norm_params = (jnp.ones((D_MODEL,), jnp.float32),
                   jnp.zeros((D_MODEL,), jnp.float32))

    out = transformer_encoder(src, layer_params, norm_params)
    out = jax.block_until_ready(out)

    ref = _ref_encoder(src, layer_params, norm_params)
    assert out.shape == (SEQ, BATCH, D_MODEL)
    # pl.reciprocal(approx=True) in the softmax introduces ~1e-4 relative error; 2e-3 is ample.
    err = float(jnp.max(jnp.abs(out - ref)))
    assert err < 2e-3, f"mismatch vs pure-JAX reference: {err}"

    print("KERNEL_OK")
</pallas_src>

<mosaic_0001>
module attributes {stable_mosaic.version = 11 : i64} {
  func.func @encoder_kernel(%arg0: memref<16x32xf32, #tpu.memory_space<vmem>>, %arg1: memref<344x128xf32, #tpu.memory_space<vmem>>, %arg2: memref<16x32xf32, #tpu.memory_space<vmem>>) attributes {dimension_semantics = [], scalar_prefetch = 0 : i64, scratch_operands = 0 : i64, tpu.core_type = #tpu.core_type<tc>} {
    %0 = tpu.iota {dimensions = array<i32: 0>} : vector<16x16xi32>
    %1 = tpu.iota {dimensions = array<i32: 1>} : vector<16x16xi32>
    %c2_i32 = arith.constant 2 : i32
    %c0_i32 = arith.constant 0 : i32
    %2 = arith.cmpi eq, %c2_i32, %c0_i32 : i32
    %c1_i32 = arith.constant 1 : i32
    %3 = arith.select %2, %c1_i32, %c2_i32 : i32
    %4 = vector.broadcast %3 : i32 to vector<16x16xi32>
    %5 = arith.remsi %0, %4 : vector<16x16xi32>
    %c0_i32_0 = arith.constant 0 : i32
    %6 = vector.broadcast %c0_i32_0 : i32 to vector<16x16xi32>
    %7 = arith.cmpi ne, %5, %6 : vector<16x16xi32>
    %c0_i32_1 = arith.constant 0 : i32
    %8 = vector.broadcast %c0_i32_1 : i32 to vector<16x16xi32>
    %9 = arith.cmpi slt, %5, %8 : vector<16x16xi32>
    %c0_i32_2 = arith.constant 0 : i32
    %10 = arith.cmpi slt, %3, %c0_i32_2 : i32
    %11 = vector.broadcast %10 : i1 to vector<16x16xi1>
    %12 = vector.broadcast %11 : vector<16x16xi1> to vector<16x16xi1>
    %13 = arith.xori %9, %12 : vector<16x16xi1>
    %14 = arith.andi %13, %7 : vector<16x16xi1>
    %15 = vector.broadcast %3 : i32 to vector<16x16xi32>
    %16 = arith.addi %5, %15 : vector<16x16xi32>
    %17 = arith.select %14, %16, %5 : vector<16x16xi1>, vector<16x16xi32>
    %c2_i32_3 = arith.constant 2 : i32
    %c0_i32_4 = arith.constant 0 : i32
    %18 = arith.cmpi eq, %c2_i32_3, %c0_i32_4 : i32
    %c1_i32_5 = arith.constant 1 : i32
    %19 = arith.select %18, %c1_i32_5, %c2_i32_3 : i32
    %20 = vector.broadcast %19 : i32 to vector<16x16xi32>
    %21 = arith.remsi %1, %20 : vector<16x16xi32>
    %c0_i32_6 = arith.constant 0 : i32
    %22 = vector.broadcast %c0_i32_6 : i32 to vector<16x16xi32>
    %23 = arith.cmpi ne, %21, %22 : vector<16x16xi32>
    %c0_i32_7 = arith.constant 0 : i32
    %24 = vector.broadcast %c0_i32_7 : i32 to vector<16x16xi32>
    %25 = arith.cmpi slt, %21, %24 : vector<16x16xi32>
    %c0_i32_8 = arith.constant 0 : i32
    %26 = arith.cmpi slt, %19, %c0_i32_8 : i32
    %27 = vector.broadcast %26 : i1 to vector<16x16xi1>
    %28 = vector.broadcast %27 : vector<16x16xi1> to vector<16x16xi1>
    %29 = arith.xori %25, %28 : vector<16x16xi1>
    %30 = arith.andi %29, %23 : vector<16x16xi1>
    %31 = vector.broadcast %19 : i32 to vector<16x16xi32>
    %32 = arith.addi %21, %31 : vector<16x16xi32>
    %33 = arith.select %30, %32, %21 : vector<16x16xi1>, vector<16x16xi32>
    %34 = arith.cmpi eq, %17, %33 : vector<16x16xi32>
    %cst = arith.constant 0.000000e+00 : f32
    %cst_9 = arith.constant -1.000000e+30 : f32
    %35 = vector.broadcast %cst : f32 to vector<16x16xf32>
    %36 = vector.broadcast %cst_9 : f32 to vector<16x16xf32>
    %37 = arith.select %34, %35, %36 : vector<16x16xi1>, vector<16x16xf32>
    %c0 = arith.constant 0 : index
    %c0_10 = arith.constant 0 : index
    %38 = vector.load %arg0[%c0, %c0_10] : memref<16x32xf32, #tpu.memory_space<vmem>>, vector<16x32xf32>
    %c0_11 = arith.constant 0 : index
    %c0_12 = arith.constant 0 : index
    %39 = vector.load %arg1[%c0_11, %c0_12] : memref<344x128xf32, #tpu.memory_space<vmem>>, vector<32x96xf32>
    %c32 = arith.constant 32 : index
    %c0_13 = arith.constant 0 : index
    %40 = vector.load %arg1[%c32, %c0_13] : memref<344x128xf32, #tpu.memory_space<vmem>>, vector<32x32xf32>
    %c64 = arith.constant 64 : index
    %c0_14 = arith.constant 0 : index
    %41 = vector.load %arg1[%c64, %c0_14] : memref<344x128xf32, #tpu.memory_space<vmem>>, vector<32x64xf32>
    %c96 = arith.constant 96 : index
    %c0_15 = arith.constant 0 : index
    %42 = vector.load %arg1[%c96, %c0_15] : memref<344x128xf32, #tpu.memory_space<vmem>>, vector<64x32xf32>
    %c160 = arith.constant 160 : index
    %c0_16 = arith.constant 0 : index
    %43 = vector.load %arg1[%c160, %c0_16] : memref<344x128xf32, #tpu.memory_space<vmem>>, vector<8x128xf32>
    %44 = vector.extract_strided_slice %43 {offsets = [0, 0], sizes = [1, 96], strides = [1, 1]} : vector<8x128xf32> to vector<1x96xf32>
    %45 = vector.extract_strided_slice %43 {offsets = [1, 0], sizes = [1, 32], strides = [1, 1]} : vector<8x128xf32> to vector<1x32xf32>
    %46 = vector.extract_strided_slice %43 {offsets = [2, 0], sizes = [1, 32], strides = [1, 1]} : vector<8x128xf32> to vector<1x32xf32>
    %47 = vector.extract_strided_slice %43 {offsets = [3, 0], sizes = [1, 32], strides = [1, 1]} : vector<8x128xf32> to vector<1x32xf32>
    %48 = vector.extract_strided_slice %43 {offsets = [4, 0], sizes = [1, 64], strides = [1, 1]} : vector<8x128xf32> to vector<1x64xf32>
    %49 = vector.extract_strided_slice %43 {offsets = [5, 0], sizes = [1, 32], strides = [1, 1]} : vector<8x128xf32> to vector<1x32xf32>
    %50 = vector.extract_strided_slice %43 {offsets = [6, 0], sizes = [1, 32], strides = [1, 1]} : vector<8x128xf32> to vector<1x32xf32>
    %51 = vector.extract_strided_slice %43 {offsets = [7, 0], sizes = [1, 32], strides = [1, 1]} : vector<8x128xf32> to vector<1x32xf32>
    %cst_17 = arith.constant dense<0.000000e+00> : vector<16x96xf32>
    %52 = tpu.matmul %38, %39, %cst_17 {dimension_numbers = #tpu.dot_dimension_numbers<[1], [0], [0], [1], [0, 0, 1, 1], [], []>} : vector<16x32xf32>, vector<32x96xf32>, vector<16x96xf32> -> vector<16x96xf32>
    %53 = vector.broadcast %44 : vector<1x96xf32> to vector<16x96xf32>
    %54 = arith.addf %52, %53 : vector<16x96xf32>
    %55 = vector.extract_strided_slice %54 {offsets = [0, 0], sizes = [16, 8], strides = [1, 1]} : vector<16x96xf32> to vector<16x8xf32>
    %56 = vector.extract_strided_slice %54 {offsets = [0, 32], sizes = [16, 8], strides = [1, 1]} : vector<16x96xf32> to vector<16x8xf32>
    %57 = vector.extract_strided_slice %54 {offsets = [0, 64], sizes = [16, 8], strides = [1, 1]} : vector<16x96xf32> to vector<16x8xf32>
    %cst_18 = arith.constant dense<0.000000e+00> : vector<16x16xf32>
    %58 = tpu.matmul %55, %56, %cst_18 {dimension_numbers = #tpu.dot_dimension_numbers<[1], [1], [0], [0], [0, 0, 1, 0], [], []>} : vector<16x8xf32>, vector<16x8xf32>, vector<16x16xf32> -> vector<16x16xf32>
    %59 = arith.addf %58, %37 : vector<16x16xf32>
    %cst_19 = arith.constant dense<0xFF800000> : vector<16xf32>
    %60 = vector.multi_reduction <maximumf>, %59, %cst_19 [1] : vector<16x16xf32> to vector<16xf32>
    %61 = vector.shape_cast %60 : vector<16xf32> to vector<16x1xf32>
    %62 = vector.broadcast %61 : vector<16x1xf32> to vector<16x16xf32>
    %63 = arith.subf %59, %62 : vector<16x16xf32>
    %64 = math.exp %63 : vector<16x16xf32>
    %cst_20 = arith.constant dense<0.000000e+00> : vector<16xf32>
    %65 = vector.multi_reduction <add>, %64, %cst_20 [1] : vector<16x16xf32> to vector<16xf32>
    %66 = vector.shape_cast %65 : vector<16xf32> to vector<16x1xf32>
    %cst_21 = arith.constant dense<0.000000e+00> : vector<16x8xf32>
    %67 = tpu.matmul %64, %57, %cst_21 {dimension_numbers = #tpu.dot_dimension_numbers<[1], [0], [0], [1], [0, 0, 1, 1], [], []>} : vector<16x16xf32>, vector<16x8xf32>, vector<16x8xf32> -> vector<16x8xf32>
    %68 = tpu.reciprocal %66 {approx = true} : vector<16x1xf32> -> vector<16x1xf32>
    %69 = vector.broadcast %68 : vector<16x1xf32> to vector<16x8xf32>
    %70 = arith.mulf %67, %69 : vector<16x8xf32>
    %71 = vector.extract_strided_slice %54 {offsets = [0, 8], sizes = [16, 8], strides = [1, 1]} : vector<16x96xf32> to vector<16x8xf32>
    %72 = vector.extract_strided_slice %54 {offsets = [0, 40], sizes = [16, 8], strides = [1, 1]} : vector<16x96xf32> to vector<16x8xf32>
    %73 = vector.extract_strided_slice %54 {offsets = [0, 72], sizes = [16, 8], strides = [1, 1]} : vector<16x96xf32> to vector<16x8xf32>
    %cst_22 = arith.constant dense<0.000000e+00> : vector<16x16xf32>
    %74 = tpu.matmul %71, %72, %cst_22 {dimension_numbers = #tpu.dot_dimension_numbers<[1], [1], [0], [0], [0, 0, 1, 0], [], []>} : vector<16x8xf32>, vector<16x8xf32>, vector<16x16xf32> -> vector<16x16xf32>
    %75 = arith.addf %74, %37 : vector<16x16xf32>
    %cst_23 = arith.constant dense<0xFF800000> : vector<16xf32>
    %76 = vector.multi_reduction <maximumf>, %75, %cst_23 [1] : vector<16x16xf32> to vector<16xf32>
    %77 = vector.shape_cast %76 : vector<16xf32> to vector<16x1xf32>
    %78 = vector.broadcast %77 : vector<16x1xf32> to vector<16x16xf32>
    %79 = arith.subf %75, %78 : vector<16x16xf32>
    %80 = math.exp %79 : vector<16x16xf32>
    %cst_24 = arith.constant dense<0.000000e+00> : vector<16xf32>
    %81 = vector.multi_reduction <add>, %80, %cst_24 [1] : vector<16x16xf32> to vector<16xf32>
    %82 = vector.shape_cast %81 : vector<16xf32> to vector<16x1xf32>
    %cst_25 = arith.constant dense<0.000000e+00> : vector<16x8xf32>
    %83 = tpu.matmul %80, %73, %cst_25 {dimension_numbers = #tpu.dot_dimension_numbers<[1], [0], [0], [1], [0, 0, 1, 1], [], []>} : vector<16x16xf32>, vector<16x8xf32>, vector<16x8xf32> -> vector<16x8xf32>
    %84 = tpu.reciprocal %82 {approx = true} : vector<16x1xf32> -> vector<16x1xf32>
    %85 = vector.broadcast %84 : vector<16x1xf32> to vector<16x8xf32>
    %86 = arith.mulf %83, %85 : vector<16x8xf32>
    %87 = vector.extract_strided_slice %54 {offsets = [0, 16], sizes = [16, 8], strides = [1, 1]} : vector<16x96xf32> to vector<16x8xf32>
    %88 = vector.extract_strided_slice %54 {offsets = [0, 48], sizes = [16, 8], strides = [1, 1]} : vector<16x96xf32> to vector<16x8xf32>
    %89 = vector.extract_strided_slice %54 {offsets = [0, 80], sizes = [16, 8], strides = [1, 1]} : vector<16x96xf32> to vector<16x8xf32>
    %cst_26 = arith.constant dense<0.000000e+00> : vector<16x16xf32>
    %90 = tpu.matmul %87, %88, %cst_26 {dimension_numbers = #tpu.dot_dimension_numbers<[1], [1], [0], [0], [0, 0, 1, 0], [], []>} : vector<16x8xf32>, vector<16x8xf32>, vector<16x16xf32> -> vector<16x16xf32>
    %91 = arith.addf %90, %37 : vector<16x16xf32>
    %cst_27 = arith.constant dense<0xFF800000> : vector<16xf32>
    %92 = vector.multi_reduction <maximumf>, %91, %cst_27 [1] : vector<16x16xf32> to vector<16xf32>
    %93 = vector.shape_cast %92 : vector<16xf32> to vector<16x1xf32>
    %94 = vector.broadcast %93 : vector<16x1xf32> to vector<16x16xf32>
    %95 = arith.subf %91, %94 : vector<16x16xf32>
    %96 = math.exp %95 : vector<16x16xf32>
    %cst_28 = arith.constant dense<0.000000e+00> : vector<16xf32>
    %97 = vector.multi_reduction <add>, %96, %cst_28 [1] : vector<16x16xf32> to vector<16xf32>
    %98 = vector.shape_cast %97 : vector<16xf32> to vector<16x1xf32>
    %cst_29 = arith.constant dense<0.000000e+00> : vector<16x8xf32>
    %99 = tpu.matmul %96, %89, %cst_29 {dimension_numbers = #tpu.dot_dimension_numbers<[1], [0], [0], [1], [0, 0, 1, 1], [], []>} : vector<16x16xf32>, vector<16x8xf32>, vector<16x8xf32> -> vector<16x8xf32>
    %100 = tpu.reciprocal %98 {approx = true} : vector<16x1xf32> -> vector<16x1xf32>
    %101 = vector.broadcast %100 : vector<16x1xf32> to vector<16x8xf32>
    %102 = arith.mulf %99, %101 : vector<16x8xf32>
    %103 = vector.extract_strided_slice %54 {offsets = [0, 24], sizes = [16, 8], strides = [1, 1]} : vector<16x96xf32> to vector<16x8xf32>
    %104 = vector.extract_strided_slice %54 {offsets = [0, 56], sizes = [16, 8], strides = [1, 1]} : vector<16x96xf32> to vector<16x8xf32>
    %105 = vector.extract_strided_slice %54 {offsets = [0, 88], sizes = [16, 8], strides = [1, 1]} : vector<16x96xf32> to vector<16x8xf32>
    %cst_30 = arith.constant dense<0.000000e+00> : vector<16x16xf32>
    %106 = tpu.matmul %103, %104, %cst_30 {dimension_numbers = #tpu.dot_dimension_numbers<[1], [1], [0], [0], [0, 0, 1, 0], [], []>} : vector<16x8xf32>, vector<16x8xf32>, vector<16x16xf32> -> vector<16x16xf32>
    %107 = arith.addf %106, %37 : vector<16x16xf32>
    %cst_31 = arith.constant dense<0xFF800000> : vector<16xf32>
    %108 = vector.multi_reduction <maximumf>, %107, %cst_31 [1] : vector<16x16xf32> to vector<16xf32>
    %109 = vector.shape_cast %108 : vector<16xf32> to vector<16x1xf32>
    %110 = vector.broadcast %109 : vector<16x1xf32> to vector<16x16xf32>
    %111 = arith.subf %107, %110 : vector<16x16xf32>
    %112 = math.exp %111 : vector<16x16xf32>
    %cst_32 = arith.constant dense<0.000000e+00> : vector<16xf32>
    %113 = vector.multi_reduction <add>, %112, %cst_32 [1] : vector<16x16xf32> to vector<16xf32>
    %114 = vector.shape_cast %113 : vector<16xf32> to vector<16x1xf32>
    %cst_33 = arith.constant dense<0.000000e+00> : vector<16x8xf32>
    %115 = tpu.matmul %112, %105, %cst_33 {dimension_numbers = #tpu.dot_dimension_numbers<[1], [0], [0], [1], [0, 0, 1, 1], [], []>} : vector<16x16xf32>, vector<16x8xf32>, vector<16x8xf32> -> vector<16x8xf32>
    %116 = tpu.reciprocal %114 {approx = true} : vector<16x1xf32> -> vector<16x1xf32>
    %117 = vector.broadcast %116 : vector<16x1xf32> to vector<16x8xf32>
    %118 = arith.mulf %115, %117 : vector<16x8xf32>
    %119 = tpu.concatenate %70, %86, %102, %118 in 1 : vector<16x8xf32>, vector<16x8xf32>, vector<16x8xf32>, vector<16x8xf32> -> vector<16x32xf32>
    %cst_34 = arith.constant dense<0.000000e+00> : vector<16x32xf32>
    %120 = tpu.matmul %119, %40, %cst_34 {dimension_numbers = #tpu.dot_dimension_numbers<[1], [0], [0], [1], [0, 0, 1, 1], [], []>} : vector<16x32xf32>, vector<32x32xf32>, vector<16x32xf32> -> vector<16x32xf32>
    %121 = vector.broadcast %45 : vector<1x32xf32> to vector<16x32xf32>
    %122 = arith.addf %120, %121 : vector<16x32xf32>
    %123 = arith.addf %38, %122 : vector<16x32xf32>
    %cst_35 = arith.constant dense<0.000000e+00> : vector<16xf32>
    %124 = vector.multi_reduction <add>, %123, %cst_35 [1] : vector<16x32xf32> to vector<16xf32>
    %125 = vector.shape_cast %124 : vector<16xf32> to vector<16x1xf32>
    %cst_36 = arith.constant 3.200000e+01 : f32
    %126 = vector.broadcast %cst_36 : f32 to vector<16x1xf32>
    %127 = arith.divf %125, %126 : vector<16x1xf32>
    %128 = vector.broadcast %127 : vector<16x1xf32> to vector<16x32xf32>
    %129 = arith.subf %123, %128 : vector<16x32xf32>
    %130 = arith.mulf %129, %129 : vector<16x32xf32>
    %cst_37 = arith.constant dense<0.000000e+00> : vector<16xf32>
    %131 = vector.multi_reduction <add>, %130, %cst_37 [1] : vector<16x32xf32> to vector<16xf32>
    %132 = vector.shape_cast %131 : vector<16xf32> to vector<16x1xf32>
    %cst_38 = arith.constant 3.200000e+01 : f32
    %133 = vector.broadcast %cst_38 : f32 to vector<16x1xf32>
    %134 = arith.divf %132, %133 : vector<16x1xf32>
    %135 = vector.broadcast %127 : vector<16x1xf32> to vector<16x32xf32>
    %136 = arith.subf %123, %135 : vector<16x32xf32>
    %cst_39 = arith.constant 9.99999974E-6 : f32
    %137 = vector.broadcast %cst_39 : f32 to vector<16x1xf32>
    %138 = arith.addf %134, %137 : vector<16x1xf32>
    %139 = math.rsqrt %138 : vector<16x1xf32>
    %140 = vector.broadcast %139 : vector<16x1xf32> to vector<16x32xf32>
    %141 = arith.mulf %136, %140 : vector<16x32xf32>
    %142 = vector.broadcast %46 : vector<1x32xf32> to vector<16x32xf32>
    %143 = arith.mulf %141, %142 : vector<16x32xf32>
    %144 = vector.broadcast %47 : vector<1x32xf32> to vector<16x32xf32>
    %145 = arith.addf %143, %144 : vector<16x32xf32>
    %cst_40 = arith.constant dense<0.000000e+00> : vector<16x64xf32>
    %146 = tpu.matmul %145, %41, %cst_40 {dimension_numbers = #tpu.dot_dimension_numbers<[1], [0], [0], [1], [0, 0, 1, 1], [], []>} : vector<16x32xf32>, vector<32x64xf32>, vector<16x64xf32> -> vector<16x64xf32>
    %147 = vector.broadcast %48 : vector<1x64xf32> to vector<16x64xf32>
    %148 = arith.addf %146, %147 : vector<16x64xf32>
    %cst_41 = arith.constant 0.000000e+00 : f32
    %149 = vector.broadcast %cst_41 : f32 to vector<16x64xf32>
    %150 = arith.maximumf %148, %149 : vector<16x64xf32>
    %cst_42 = arith.constant dense<0.000000e+00> : vector<16x32xf32>
    %151 = tpu.matmul %150, %42, %cst_42 {dimension_numbers = #tpu.dot_dimension_numbers<[1], [0], [0], [1], [0, 0, 1, 1], [], []>} : vector<16x64xf32>, vector<64x32xf32>, vector<16x32xf32> -> vector<16x32xf32>
    %152 = vector.broadcast %49 : vector<1x32xf32> to vector<16x32xf32>
    %153 = arith.addf %151, %152 : vector<16x32xf32>
    %154 = arith.addf %145, %153 : vector<16x32xf32>
    %cst_43 = arith.constant dense<0.000000e+00> : vector<16xf32>
    %155 = vector.multi_reduction <add>, %154, %cst_43 [1] : vector<16x32xf32> to vector<16xf32>
    %156 = vector.shape_cast %155 : vector<16xf32> to vector<16x1xf32>
    %cst_44 = arith.constant 3.200000e+01 : f32
    %157 = vector.broadcast %cst_44 : f32 to vector<16x1xf32>
    %158 = arith.divf %156, %157 : vector<16x1xf32>
    %159 = vector.broadcast %158 : vector<16x1xf32> to vector<16x32xf32>
    %160 = arith.subf %154, %159 : vector<16x32xf32>
    %161 = arith.mulf %160, %160 : vector<16x32xf32>
    %cst_45 = arith.constant dense<0.000000e+00> : vector<16xf32>
    %162 = vector.multi_reduction <add>, %161, %cst_45 [1] : vector<16x32xf32> to vector<16xf32>
    %163 = vector.shape_cast %162 : vector<16xf32> to vector<16x1xf32>
    %cst_46 = arith.constant 3.200000e+01 : f32
    %164 = vector.broadcast %cst_46 : f32 to vector<16x1xf32>
    %165 = arith.divf %163, %164 : vector<16x1xf32>
    %166 = vector.broadcast %158 : vector<16x1xf32> to vector<16x32xf32>
    %167 = arith.subf %154, %166 : vector<16x32xf32>
    %cst_47 = arith.constant 9.99999974E-6 : f32
    %168 = vector.broadcast %cst_47 : f32 to vector<16x1xf32>
    %169 = arith.addf %165, %168 : vector<16x1xf32>
    %170 = math.rsqrt %169 : vector<16x1xf32>
    %171 = vector.broadcast %170 : vector<16x1xf32> to vector<16x32xf32>
    %172 = arith.mulf %167, %171 : vector<16x32xf32>
    %173 = vector.broadcast %50 : vector<1x32xf32> to vector<16x32xf32>
    %174 = arith.mulf %172, %173 : vector<16x32xf32>
    %175 = vector.broadcast %51 : vector<1x32xf32> to vector<16x32xf32>
    %176 = arith.addf %174, %175 : vector<16x32xf32>
    %c168 = arith.constant 168 : index
    %c0_48 = arith.constant 0 : index
    %177 = vector.load %arg1[%c168, %c0_48] : memref<344x128xf32, #tpu.memory_space<vmem>>, vector<32x96xf32>
    %c200 = arith.constant 200 : index
    %c0_49 = arith.constant 0 : index
    %178 = vector.load %arg1[%c200, %c0_49] : memref<344x128xf32, #tpu.memory_space<vmem>>, vector<32x32xf32>
    %c232 = arith.constant 232 : index
    %c0_50 = arith.constant 0 : index
    %179 = vector.load %arg1[%c232, %c0_50] : memref<344x128xf32, #tpu.memory_space<vmem>>, vector<32x64xf32>
    %c264 = arith.constant 264 : index
    %c0_51 = arith.constant 0 : index
    %180 = vector.load %arg1[%c264, %c0_51] : memref<344x128xf32, #tpu.memory_space<vmem>>, vector<64x32xf32>
    %c328 = arith.constant 328 : index
    %c0_52 = arith.constant 0 : index
    %181 = vector.load %arg1[%c328, %c0_52] : memref<344x128xf32, #tpu.memory_space<vmem>>, vector<8x128xf32>
    %182 = vector.extract_strided_slice %181 {offsets = [0, 0], sizes = [1, 96], strides = [1, 1]} : vector<8x128xf32> to vector<1x96xf32>
    %183 = vector.extract_strided_slice %181 {offsets = [1, 0], sizes = [1, 32], strides = [1, 1]} : vector<8x128xf32> to vector<1x32xf32>
    %184 = vector.extract_strided_slice %181 {offsets = [2, 0], sizes = [1, 32], strides = [1, 1]} : vector<8x128xf32> to vector<1x32xf32>
    %185 = vector.extract_strided_slice %181 {offsets = [3, 0], sizes = [1, 32], strides = [1, 1]} : vector<8x128xf32> to vector<1x32xf32>
    %186 = vector.extract_strided_slice %181 {offsets = [4, 0], sizes = [1, 64], strides = [1, 1]} : vector<8x128xf32> to vector<1x64xf32>
    %187 = vector.extract_strided_slice %181 {offsets = [5, 0], sizes = [1, 32], strides = [1, 1]} : vector<8x128xf32> to vector<1x32xf32>
    %188 = vector.extract_strided_slice %181 {offsets = [6, 0], sizes = [1, 32], strides = [1, 1]} : vector<8x128xf32> to vector<1x32xf32>
    %189 = vector.extract_strided_slice %181 {offsets = [7, 0], sizes = [1, 32], strides = [1, 1]} : vector<8x128xf32> to vector<1x32xf32>
    %cst_53 = arith.constant dense<0.000000e+00> : vector<16x96xf32>
    %190 = tpu.matmul %176, %177, %cst_53 {dimension_numbers = #tpu.dot_dimension_numbers<[1], [0], [0], [1], [0, 0, 1, 1], [], []>} : vector<16x32xf32>, vector<32x96xf32>, vector<16x96xf32> -> vector<16x96xf32>
    %191 = vector.broadcast %182 : vector<1x96xf32> to vector<16x96xf32>
    %192 = arith.addf %190, %191 : vector<16x96xf32>
    %193 = vector.extract_strided_slice %192 {offsets = [0, 0], sizes = [16, 8], strides = [1, 1]} : vector<16x96xf32> to vector<16x8xf32>
    %194 = vector.extract_strided_slice %192 {offsets = [0, 32], sizes = [16, 8], strides = [1, 1]} : vector<16x96xf32> to vector<16x8xf32>
    %195 = vector.extract_strided_slice %192 {offsets = [0, 64], sizes = [16, 8], strides = [1, 1]} : vector<16x96xf32> to vector<16x8xf32>
    %cst_54 = arith.constant dense<0.000000e+00> : vector<16x16xf32>
    %196 = tpu.matmul %193, %194, %cst_54 {dimension_numbers = #tpu.dot_dimension_numbers<[1], [1], [0], [0], [0, 0, 1, 0], [], []>} : vector<16x8xf32>, vector<16x8xf32>, vector<16x16xf32> -> vector<16x16xf32>
    %197 = arith.addf %196, %37 : vector<16x16xf32>
    %cst_55 = arith.constant dense<0xFF800000> : vector<16xf32>
    %198 = vector.multi_reduction <maximumf>, %197, %cst_55 [1] : vector<16x16xf32> to vector<16xf32>
    %199 = vector.shape_cast %198 : vector<16xf32> to vector<16x1xf32>
    %200 = vector.broadcast %199 : vector<16x1xf32> to vector<16x16xf32>
    %201 = arith.subf %197, %200 : vector<16x16xf32>
    %202 = math.exp %201 : vector<16x16xf32>
    %cst_56 = arith.constant dense<0.000000e+00> : vector<16xf32>
    %203 = vector.multi_reduction <add>, %202, %cst_56 [1] : vector<16x16xf32> to vector<16xf32>
    %204 = vector.shape_cast %203 : vector<16xf32> to vector<16x1xf32>
    %cst_57 = arith.constant dense<0.000000e+00> : vector<16x8xf32>
    %205 = tpu.matmul %202, %195, %cst_57 {dimension_numbers = #tpu.dot_dimension_numbers<[1], [0], [0], [1], [0, 0, 1, 1], [], []>} : vector<16x16xf32>, vector<16x8xf32>, vector<16x8xf32> -> vector<16x8xf32>
    %206 = tpu.reciprocal %204 {approx = true} : vector<16x1xf32> -> vector<16x1xf32>
    %207 = vector.broadcast %206 : vector<16x1xf32> to vector<16x8xf32>
    %208 = arith.mulf %205, %207 : vector<16x8xf32>
    %209 = vector.extract_strided_slice %192 {offsets = [0, 8], sizes = [16, 8], strides = [1, 1]} : vector<16x96xf32> to vector<16x8xf32>
    %210 = vector.extract_strided_slice %192 {offsets = [0, 40], sizes = [16, 8], strides = [1, 1]} : vector<16x96xf32> to vector<16x8xf32>
    %211 = vector.extract_strided_slice %192 {offsets = [0, 72], sizes = [16, 8], strides = [1, 1]} : vector<16x96xf32> to vector<16x8xf32>
    %cst_58 = arith.constant dense<0.000000e+00> : vector<16x16xf32>
    %212 = tpu.matmul %209, %210, %cst_58 {dimension_numbers = #tpu.dot_dimension_numbers<[1], [1], [0], [0], [0, 0, 1, 0], [], []>} : vector<16x8xf32>, vector<16x8xf32>, vector<16x16xf32> -> vector<16x16xf32>
    %213 = arith.addf %212, %37 : vector<16x16xf32>
    %cst_59 = arith.constant dense<0xFF800000> : vector<16xf32>
    %214 = vector.multi_reduction <maximumf>, %213, %cst_59 [1] : vector<16x16xf32> to vector<16xf32>
    %215 = vector.shape_cast %214 : vector<16xf32> to vector<16x1xf32>
    %216 = vector.broadcast %215 : vector<16x1xf32> to vector<16x16xf32>
    %217 = arith.subf %213, %216 : vector<16x16xf32>
    %218 = math.exp %217 : vector<16x16xf32>
    %cst_60 = arith.constant dense<0.000000e+00> : vector<16xf32>
    %219 = vector.multi_reduction <add>, %218, %cst_60 [1] : vector<16x16xf32> to vector<16xf32>
    %220 = vector.shape_cast %219 : vector<16xf32> to vector<16x1xf32>
    %cst_61 = arith.constant dense<0.000000e+00> : vector<16x8xf32>
    %221 = tpu.matmul %218, %211, %cst_61 {dimension_numbers = #tpu.dot_dimension_numbers<[1], [0], [0], [1], [0, 0, 1, 1], [], []>} : vector<16x16xf32>, vector<16x8xf32>, vector<16x8xf32> -> vector<16x8xf32>
    %222 = tpu.reciprocal %220 {approx = true} : vector<16x1xf32> -> vector<16x1xf32>
    %223 = vector.broadcast %222 : vector<16x1xf32> to vector<16x8xf32>
    %224 = arith.mulf %221, %223 : vector<16x8xf32>
    %225 = vector.extract_strided_slice %192 {offsets = [0, 16], sizes = [16, 8], strides = [1, 1]} : vector<16x96xf32> to vector<16x8xf32>
    %226 = vector.extract_strided_slice %192 {offsets = [0, 48], sizes = [16, 8], strides = [1, 1]} : vector<16x96xf32> to vector<16x8xf32>
    %227 = vector.extract_strided_slice %192 {offsets = [0, 80], sizes = [16, 8], strides = [1, 1]} : vector<16x96xf32> to vector<16x8xf32>
    %cst_62 = arith.constant dense<0.000000e+00> : vector<16x16xf32>
    %228 = tpu.matmul %225, %226, %cst_62 {dimension_numbers = #tpu.dot_dimension_numbers<[1], [1], [0], [0], [0, 0, 1, 0], [], []>} : vector<16x8xf32>, vector<16x8xf32>, vector<16x16xf32> -> vector<16x16xf32>
    %229 = arith.addf %228, %37 : vector<16x16xf32>
    %cst_63 = arith.constant dense<0xFF800000> : vector<16xf32>
    %230 = vector.multi_reduction <maximumf>, %229, %cst_63 [1] : vector<16x16xf32> to vector<16xf32>
    %231 = vector.shape_cast %230 : vector<16xf32> to vector<16x1xf32>
    %232 = vector.broadcast %231 : vector<16x1xf32> to vector<16x16xf32>
    %233 = arith.subf %229, %232 : vector<16x16xf32>
    %234 = math.exp %233 : vector<16x16xf32>
    %cst_64 = arith.constant dense<0.000000e+00> : vector<16xf32>
    %235 = vector.multi_reduction <add>, %234, %cst_64 [1] : vector<16x16xf32> to vector<16xf32>
    %236 = vector.shape_cast %235 : vector<16xf32> to vector<16x1xf32>
    %cst_65 = arith.constant dense<0.000000e+00> : vector<16x8xf32>
    %237 = tpu.matmul %234, %227, %cst_65 {dimension_numbers = #tpu.dot_dimension_numbers<[1], [0], [0], [1], [0, 0, 1, 1], [], []>} : vector<16x16xf32>, vector<16x8xf32>, vector<16x8xf32> -> vector<16x8xf32>
    %238 = tpu.reciprocal %236 {approx = true} : vector<16x1xf32> -> vector<16x1xf32>
    %239 = vector.broadcast %238 : vector<16x1xf32> to vector<16x8xf32>
    %240 = arith.mulf %237, %239 : vector<16x8xf32>
    %241 = vector.extract_strided_slice %192 {offsets = [0, 24], sizes = [16, 8], strides = [1, 1]} : vector<16x96xf32> to vector<16x8xf32>
    %242 = vector.extract_strided_slice %192 {offsets = [0, 56], sizes = [16, 8], strides = [1, 1]} : vector<16x96xf32> to vector<16x8xf32>
    %243 = vector.extract_strided_slice %192 {offsets = [0, 88], sizes = [16, 8], strides = [1, 1]} : vector<16x96xf32> to vector<16x8xf32>
    %cst_66 = arith.constant dense<0.000000e+00> : vector<16x16xf32>
    %244 = tpu.matmul %241, %242, %cst_66 {dimension_numbers = #tpu.dot_dimension_numbers<[1], [1], [0], [0], [0, 0, 1, 0], [], []>} : vector<16x8xf32>, vector<16x8xf32>, vector<16x16xf32> -> vector<16x16xf32>
    %245 = arith.addf %244, %37 : vector<16x16xf32>
    %cst_67 = arith.constant dense<0xFF800000> : vector<16xf32>
    %246 = vector.multi_reduction <maximumf>, %245, %cst_67 [1] : vector<16x16xf32> to vector<16xf32>
    %247 = vector.shape_cast %246 : vector<16xf32> to vector<16x1xf32>
    %248 = vector.broadcast %247 : vector<16x1xf32> to vector<16x16xf32>
    %249 = arith.subf %245, %248 : vector<16x16xf32>
    %250 = math.exp %249 : vector<16x16xf32>
    %cst_68 = arith.constant dense<0.000000e+00> : vector<16xf32>
    %251 = vector.multi_reduction <add>, %250, %cst_68 [1] : vector<16x16xf32> to vector<16xf32>
    %252 = vector.shape_cast %251 : vector<16xf32> to vector<16x1xf32>
    %cst_69 = arith.constant dense<0.000000e+00> : vector<16x8xf32>
    %253 = tpu.matmul %250, %243, %cst_69 {dimension_numbers = #tpu.dot_dimension_numbers<[1], [0], [0], [1], [0, 0, 1, 1], [], []>} : vector<16x16xf32>, vector<16x8xf32>, vector<16x8xf32> -> vector<16x8xf32>
    %254 = tpu.reciprocal %252 {approx = true} : vector<16x1xf32> -> vector<16x1xf32>
    %255 = vector.broadcast %254 : vector<16x1xf32> to vector<16x8xf32>
    %256 = arith.mulf %253, %255 : vector<16x8xf32>
    %257 = tpu.concatenate %208, %224, %240, %256 in 1 : vector<16x8xf32>, vector<16x8xf32>, vector<16x8xf32>, vector<16x8xf32> -> vector<16x32xf32>
    %cst_70 = arith.constant dense<0.000000e+00> : vector<16x32xf32>
    %258 = tpu.matmul %257, %178, %cst_70 {dimension_numbers = #tpu.dot_dimension_numbers<[1], [0], [0], [1], [0, 0, 1, 1], [], []>} : vector<16x32xf32>, vector<32x32xf32>, vector<16x32xf32> -> vector<16x32xf32>
    %259 = vector.broadcast %183 : vector<1x32xf32> to vector<16x32xf32>
    %260 = arith.addf %258, %259 : vector<16x32xf32>
    %261 = arith.addf %176, %260 : vector<16x32xf32>
    %cst_71 = arith.constant dense<0.000000e+00> : vector<16xf32>
    %262 = vector.multi_reduction <add>, %261, %cst_71 [1] : vector<16x32xf32> to vector<16xf32>
    %263 = vector.shape_cast %262 : vector<16xf32> to vector<16x1xf32>
    %cst_72 = arith.constant 3.200000e+01 : f32
    %264 = vector.broadcast %cst_72 : f32 to vector<16x1xf32>
    %265 = arith.divf %263, %264 : vector<16x1xf32>
    %266 = vector.broadcast %265 : vector<16x1xf32> to vector<16x32xf32>
    %267 = arith.subf %261, %266 : vector<16x32xf32>
    %268 = arith.mulf %267, %267 : vector<16x32xf32>
    %cst_73 = arith.constant dense<0.000000e+00> : vector<16xf32>
    %269 = vector.multi_reduction <add>, %268, %cst_73 [1] : vector<16x32xf32> to vector<16xf32>
    %270 = vector.shape_cast %269 : vector<16xf32> to vector<16x1xf32>
    %cst_74 = arith.constant 3.200000e+01 : f32
    %271 = vector.broadcast %cst_74 : f32 to vector<16x1xf32>
    %272 = arith.divf %270, %271 : vector<16x1xf32>
    %273 = vector.broadcast %265 : vector<16x1xf32> to vector<16x32xf32>
    %274 = arith.subf %261, %273 : vector<16x32xf32>
    %cst_75 = arith.constant 9.99999974E-6 : f32
    %275 = vector.broadcast %cst_75 : f32 to vector<16x1xf32>
    %276 = arith.addf %272, %275 : vector<16x1xf32>
    %277 = math.rsqrt %276 : vector<16x1xf32>
    %278 = vector.broadcast %277 : vector<16x1xf32> to vector<16x32xf32>
    %279 = arith.mulf %274, %278 : vector<16x32xf32>
    %280 = vector.broadcast %184 : vector<1x32xf32> to vector<16x32xf32>
    %281 = arith.mulf %279, %280 : vector<16x32xf32>
    %282 = vector.broadcast %185 : vector<1x32xf32> to vector<16x32xf32>
    %283 = arith.addf %281, %282 : vector<16x32xf32>
    %cst_76 = arith.constant dense<0.000000e+00> : vector<16x64xf32>
    %284 = tpu.matmul %283, %179, %cst_76 {dimension_numbers = #tpu.dot_dimension_numbers<[1], [0], [0], [1], [0, 0, 1, 1], [], []>} : vector<16x32xf32>, vector<32x64xf32>, vector<16x64xf32> -> vector<16x64xf32>
    %285 = vector.broadcast %186 : vector<1x64xf32> to vector<16x64xf32>
    %286 = arith.addf %284, %285 : vector<16x64xf32>
    %cst_77 = arith.constant 0.000000e+00 : f32
    %287 = vector.broadcast %cst_77 : f32 to vector<16x64xf32>
    %288 = arith.maximumf %286, %287 : vector<16x64xf32>
    %cst_78 = arith.constant dense<0.000000e+00> : vector<16x32xf32>
    %289 = tpu.matmul %288, %180, %cst_78 {dimension_numbers = #tpu.dot_dimension_numbers<[1], [0], [0], [1], [0, 0, 1, 1], [], []>} : vector<16x64xf32>, vector<64x32xf32>, vector<16x32xf32> -> vector<16x32xf32>
    %290 = vector.broadcast %187 : vector<1x32xf32> to vector<16x32xf32>
    %291 = arith.addf %289, %290 : vector<16x32xf32>
    %292 = arith.addf %283, %291 : vector<16x32xf32>
    %cst_79 = arith.constant dense<0.000000e+00> : vector<16xf32>
    %293 = vector.multi_reduction <add>, %292, %cst_79 [1] : vector<16x32xf32> to vector<16xf32>
    %294 = vector.shape_cast %293 : vector<16xf32> to vector<16x1xf32>
    %cst_80 = arith.constant 3.200000e+01 : f32
    %295 = vector.broadcast %cst_80 : f32 to vector<16x1xf32>
    %296 = arith.divf %294, %295 : vector<16x1xf32>
    %297 = vector.broadcast %296 : vector<16x1xf32> to vector<16x32xf32>
    %298 = arith.subf %292, %297 : vector<16x32xf32>
    %299 = arith.mulf %298, %298 : vector<16x32xf32>
    %cst_81 = arith.constant dense<0.000000e+00> : vector<16xf32>
    %300 = vector.multi_reduction <add>, %299, %cst_81 [1] : vector<16x32xf32> to vector<16xf32>
    %301 = vector.shape_cast %300 : vector<16xf32> to vector<16x1xf32>
    %cst_82 = arith.constant 3.200000e+01 : f32
    %302 = vector.broadcast %cst_82 : f32 to vector<16x1xf32>
    %303 = arith.divf %301, %302 : vector<16x1xf32>
    %304 = vector.broadcast %296 : vector<16x1xf32> to vector<16x32xf32>
    %305 = arith.subf %292, %304 : vector<16x32xf32>
    %cst_83 = arith.constant 9.99999974E-6 : f32
    %306 = vector.broadcast %cst_83 : f32 to vector<16x1xf32>
    %307 = arith.addf %303, %306 : vector<16x1xf32>
    %308 = math.rsqrt %307 : vector<16x1xf32>
    %309 = vector.broadcast %308 : vector<16x1xf32> to vector<16x32xf32>
    %310 = arith.mulf %305, %309 : vector<16x32xf32>
    %311 = vector.broadcast %188 : vector<1x32xf32> to vector<16x32xf32>
    %312 = arith.mulf %310, %311 : vector<16x32xf32>
    %313 = vector.broadcast %189 : vector<1x32xf32> to vector<16x32xf32>
    %314 = arith.addf %312, %313 : vector<16x32xf32>
    %c336 = arith.constant 336 : index
    %c0_84 = arith.constant 0 : index
    %315 = vector.load %arg1[%c336, %c0_84] : memref<344x128xf32, #tpu.memory_space<vmem>>, vector<1x32xf32>
    %c337 = arith.constant 337 : index
    %c0_85 = arith.constant 0 : index
    %316 = vector.load %arg1[%c337, %c0_85] : memref<344x128xf32, #tpu.memory_space<vmem>>, vector<1x32xf32>
    %cst_86 = arith.constant dense<0.000000e+00> : vector<16xf32>
    %317 = vector.multi_reduction <add>, %314, %cst_86 [1] : vector<16x32xf32> to vector<16xf32>
    %318 = vector.shape_cast %317 : vector<16xf32> to vector<16x1xf32>
    %cst_87 = arith.constant 3.200000e+01 : f32
    %319 = vector.broadcast %cst_87 : f32 to vector<16x1xf32>
    %320 = arith.divf %318, %319 : vector<16x1xf32>
    %321 = vector.broadcast %320 : vector<16x1xf32> to vector<16x32xf32>
    %322 = arith.subf %314, %321 : vector<16x32xf32>
    %323 = arith.mulf %322, %322 : vector<16x32xf32>
    %cst_88 = arith.constant dense<0.000000e+00> : vector<16xf32>
    %324 = vector.multi_reduction <add>, %323, %cst_88 [1] : vector<16x32xf32> to vector<16xf32>
    %325 = vector.shape_cast %324 : vector<16xf32> to vector<16x1xf32>
    %cst_89 = arith.constant 3.200000e+01 : f32
    %326 = vector.broadcast %cst_89 : f32 to vector<16x1xf32>
    %327 = arith.divf %325, %326 : vector<16x1xf32>
    %328 = vector.broadcast %320 : vector<16x1xf32> to vector<16x32xf32>
    %329 = arith.subf %314, %328 : vector<16x32xf32>
    %cst_90 = arith.constant 9.99999974E-6 : f32
    %330 = vector.broadcast %cst_90 : f32 to vector<16x1xf32>
    %331 = arith.addf %327, %330 : vector<16x1xf32>
    %332 = math.rsqrt %331 : vector<16x1xf32>
    %333 = vector.broadcast %332 : vector<16x1xf32> to vector<16x32xf32>
    %334 = arith.mulf %329, %333 : vector<16x32xf32>
    %335 = vector.broadcast %315 : vector<1x32xf32> to vector<16x32xf32>
    %336 = arith.mulf %334, %335 : vector<16x32xf32>
    %337 = vector.broadcast %316 : vector<1x32xf32> to vector<16x32xf32>
    %338 = arith.addf %336, %337 : vector<16x32xf32>
    %c0_91 = arith.constant 0 : index
    %c0_92 = arith.constant 0 : index
    %339 = vector.load %arg2[%c0_91, %c0_92] : memref<16x32xf32, #tpu.memory_space<vmem>>, vector<16x32xf32>
    tpu.vector_store %arg2[%c0_91, %c0_92], %338 {strides = array<i32>} : memref<16x32xf32, #tpu.memory_space<vmem>>, vector<16x32xf32>,
    return
  }
}

</mosaic_0001>

<llo_original>
// kernel: tpu_custom_call.1
$region0: #{tpu_custom_call.1}
  #allocation0 [shape = 'u32[]', space=smem, size = 0x4, offset = 0x4, fixed_abs, tag = 'smem constant byte address 0x4 - core index']
  #allocation1 [shape = 'u32[144,128]{1,0:T(1,128)}', space=vmem, size = 0x12000, scoped, tag = 'internal scratch']
  %s0 = inlined_call_operand.hbm [shape: f32[16,32], index: 0, kind: input, shape index: {}]
  %s1 = inlined_call_operand.hbm [shape: f32[344,128], index: 1, kind: input, shape index: {}]
  %s2 = inlined_call_operand.hbm [shape: f32[16,32], index: 2, kind: output, shape index: {}]
  %s3 = sld [smem:[#allocation0]]
  $region26: #{tpu_custom_call.1} parent=0
    _
  %s5 = ssub.s32 1, %s3
  %s6 = scalar_select 0, %s5, %s3
  $region1: #{tpu_custom_call.1} parent=0
    #allocation2 [shape = 'u8[8192]{0}', space=vmem, size = 0x2000, scoped, tag = 'input window, operand 0, single buffered']
    #allocation3 [shape = 's32[1]{0}', space=sflag, size = 0x4, scoped, tag = 'scoped memory for tpu_custom_call.1']
    #allocation4 [shape = 's32[1]{0}', space=sflag, size = 0x4, scoped, tag = 'scoped memory for tpu_custom_call.1']
    #allocation5 [shape = 'u8[176128]{0}', space=vmem, size = 0x2b000, scoped, tag = 'input window, operand 1, single buffered']
    #allocation6 [shape = 's32[1]{0}', space=sflag, size = 0x4, scoped, tag = 'scoped memory for tpu_custom_call.1']
    #allocation7 [shape = 'u8[8192]{0}', space=vmem, size = 0x2000, scoped, tag = 'output window, operand 0, single buffered']
    %7 = vsyncpa [#allocation3], 0
    %8 = vsyncpa [#allocation6], 0
    %9 = vsyncpa [#allocation4], 0
    // Predicated region
    $region2: #{tpu_custom_call.1} parent=1 // pred_check
      _
    $region3: #{tpu_custom_call.1} parent=1 // pred_check_branch
      %11 = sbr.rel (0) target = $region5
    $region4: #{tpu_custom_call.1} parent=1 // pred_region
      %s13 = ssub.s32 256, 256
      %14 = vsyncadd [#allocation3], %s13
      %s15 = sshll.u32 [#allocation2], 4
      %s16 = int_to_ptr.vmem [resolvable:$true] %s15
      %21 = dma.hbm_to_vmem [thread:$0]  %s0, 256, %s16, [#allocation3], 128, 128, 8
    $region5: #{tpu_custom_call.1} parent=1 // pred_fallthru
      _
    // Predicated region
    $region6: #{tpu_custom_call.1} parent=1 // pred_check
      _
    $region7: #{tpu_custom_call.1} parent=1 // pred_check_branch
      %23 = sbr.rel (0) target = $region9
    $region8: #{tpu_custom_call.1} parent=1 // pred_region
      %s25 = ssub.s32 5504, 5504
      %26 = vsyncadd [#allocation6], %s25
      %s27 = sshll.u32 [#allocation5], 4
      %s28 = int_to_ptr.vmem [resolvable:$true] %s27
      %33 = dma.hbm_to_vmem [thread:$0]  %s1, 5504, %s28, [#allocation6], 128, 128, 8
    $region9: #{tpu_custom_call.1} parent=1 // pred_fallthru
      _
    // Predicated region
    $region10: #{tpu_custom_call.1} parent=1 // pred_check
      _
    $region11: #{tpu_custom_call.1} parent=1 // pred_check_branch
      %35 = sbr.rel (0) target = $region13
    $region12: #{tpu_custom_call.1} parent=1 // pred_region
      %36 = dma.done [#allocation3], 256
    $region13: #{tpu_custom_call.1} parent=1 // pred_fallthru
      _
    // Predicated region
    $region14: #{tpu_custom_call.1} parent=1 // pred_check
      _
    $region15: #{tpu_custom_call.1} parent=1 // pred_check_branch
      %38 = sbr.rel (0) target = $region17
    $region16: #{tpu_custom_call.1} parent=1 // pred_region
      %39 = dma.done [#allocation6], 5504
    $region17: #{tpu_custom_call.1} parent=1 // pred_fallthru
      _
    %v40 = vlaneseq
    %v41 = vshrl.u32 %v40, 7
    %v42 = vadd.s32 %v41, 8
    %v43 = vlaneseq
    %v44 = vand.u32 %v43, 127
    %vm45 = vcmp.lt.s32.totalorder %v41, 0
    %v46 = vsub.s32 0, %v41
    %v47 = vsel %vm45, %v46, %v41
    %v48 = vshrl.u32 %v47, 1
    %v49 = vand.u32 %v47, 1
    %v50 = vsub.s32 0, %v49
    %v51 = vsel %vm45, %v50, %v49
    %vm52 = vcmp.lt.s32.totalorder %v42, 0
    %v53 = vsub.s32 0, %v42
    %v54 = vsel %vm52, %v53, %v42
    %v55 = vshrl.u32 %v54, 1
    %v56 = vand.u32 %v54, 1
    %v57 = vsub.s32 0, %v56
    %v58 = vsel %vm52, %v57, %v56
    %vm59 = vcmp.ne.s32.totalorder %v51, 0
    %vm60 = vcmp.ne.s32.totalorder %v58, 0
    %vm61 = vcmp.lt.s32.totalorder %v51, 0
    %vm62 = vcmp.lt.s32.totalorder %v58, 0
    %vm63 = vmand %vm61, %vm59
    %vm64 = vmand %vm62, %vm60
    %v65 = vadd.s32 %v51, 2
    %v66 = vadd.s32 %v58, 2
    %v67 = vsel %vm63, %v65, %v51
    %v68 = vsel %vm64, %v66, %v58
    %vm69 = vcmp.lt.s32.totalorder %v44, 0
    %v70 = vsub.s32 0, %v44
    %v71 = vsel %vm69, %v70, %v44
    %v72 = vshrl.u32 %v71, 1
    %v73 = vand.u32 %v71, 1
    %v74 = vsub.s32 0, %v73
    %v75 = vsel %vm69, %v74, %v73
    %vm76 = vcmp.ne.s32.totalorder %v75, 0
    %vm77 = vcmp.lt.s32.totalorder %v75, 0
    %vm78 = vmand %vm77, %vm76
    %v79 = vadd.s32 %v75, 2
    %v80 = vsel %vm78, %v79, %v75
    %vm81 = vcmp.eq.s32.totalorder %v67, %v80
    %vm82 = vcmp.eq.s32.totalorder %v68, %v80
    %v83 = vsel %vm81, 0.0, -1e+30
    %v84 = vsel %vm82, 0.0, -1e+30
    %v85 = vld [vmem:[#allocation2] sm:$0xff]
    %v86 = vld [vmem:[#allocation2 + $0x8] sm:$0xff]
    %v87 = vld [vmem:[#allocation5] sm:$0xff]
    %v88 = vld [vmem:[#allocation5 + $0x8] sm:$0xff]
    %v89 = vld [vmem:[#allocation5 + $0x10] sm:$0xff]
    %v90 = vld [vmem:[#allocation5 + $0x18] sm:$0xff]
    %v91 = vld [vmem:[#allocation5 + $0x20] sm:$0xff]
    %v92 = vld [vmem:[#allocation5 + $0x28] sm:$0xff]
    %v93 = vld [vmem:[#allocation5 + $0x30] sm:$0xff]
    %v94 = vld [vmem:[#allocation5 + $0x38] sm:$0xff]
    %v95 = vld [vmem:[#allocation5 + $0x40] sm:$0xff]
    %v96 = vld [vmem:[#allocation5 + $0x48] sm:$0xff]
    %v97 = vld [vmem:[#allocation5 + $0x50] sm:$0xff]
    %v98 = vld [vmem:[#allocation5 + $0x58] sm:$0xff]
    %v99 = vld [vmem:[#allocation5 + $0x60] sm:$0xff]
    %v100 = vld [vmem:[#allocation5 + $0x68] sm:$0xff]
    %v101 = vld [vmem:[#allocation5 + $0x70] sm:$0xff]
    %v102 = vld [vmem:[#allocation5 + $0x78] sm:$0xff]
    %v103 = vld [vmem:[#allocation5 + $0x80] sm:$0xff]
    %v104 = vld [vmem:[#allocation5 + $0x88] sm:$0xff]
    %v105 = vld [vmem:[#allocation5 + $0x90] sm:$0xff]
    %v106 = vld [vmem:[#allocation5 + $0x98] sm:$0xff]
    %v107 = vld [vmem:[#allocation5 + $0xa0] sm:$0xff]
    %v108 = vlaneseq
    %v109 = vshrl.u32 %v108, 7
    %v110 = vsub.s32 0, %v109
    %v111 = vrot.slane %v107, %v110
    %vm112 = vcmask 261120
    %v114 = vsel %vm112, %v85, 0
    %v117 = vsel %vm112, %v86, 0
    %119 = vmatprep.subr.mxu0 0.0
    %120 = vmatpush1.msra.mxu0 %v87
    %121 = vmatprep.subr.mxu0 0.0
    %122 = vmatpush1.msra.mxu0 %v88
    %123 = vmatprep.subr.mxu0 0.0
    %124 = vmatpush1.msra.mxu0 %v89
    %125 = vmatprep.subr.mxu0 0.0
    %126 = vmatpush1.msra.mxu0 %v90
    %127 = vmatprep.subr.mxu0 0.0
    %128 = vmatpush1.msra.mxu0 0.0
    %129 = vmatprep.subr.mxu0 0.0
    %130 = vmatpush1.msra.mxu0 0.0
    %131 = vmatprep.subr.mxu0 0.0
    %132 = vmatpush1.msra.mxu0 0.0
    %133 = vmatprep.subr.mxu0 0.0
    %134 = vmatpush1.msra.mxu0 0.0
    %135 = vmatprep.subr.mxu0 0.0
    %136 = vmatpush1.msra.mxu0 0.0
    %137 = vmatprep.subr.mxu0 0.0
    %138 = vmatpush1.msra.mxu0 0.0
    %139 = vmatprep.subr.mxu0 0.0
    %140 = vmatpush1.msra.mxu0 0.0
    %141 = vmatprep.subr.mxu0 0.0
    %142 = vmatpush1.msra.mxu0 0.0
    %143 = vmatprep.subr.mxu0 0.0
    %144 = vmatpush1.msra.mxu0 0.0
    %145 = vmatprep.subr.mxu0 0.0
    %146 = vmatpush1.msra.mxu0 0.0
    %147 = vmatprep.subr.mxu0 0.0
    %148 = vmatpush1.msra.mxu0 0.0
    %149 = vmatprep.subr.mxu0 0.0
    %150 = vmatpush1.msra.mxu0 0.0
    %151 = vmatprep.subr.mxu0 0.0
    %152 = vmatpush1.msra.mxu0 0.0
    %153 = vmatprep.subr.mxu0 0.0
    %154 = vmatpush1.msra.mxu0 0.0
    %155 = vmatprep.subr.mxu0 0.0
    %156 = vmatpush1.msra.mxu0 0.0
    %157 = vmatprep.subr.mxu0 0.0
    %158 = vmatpush1.msra.mxu0 0.0
    %159 = vmatprep.subr.mxu0 0.0
    %160 = vmatpush1.msra.mxu0 0.0
    %161 = vmatprep.subr.mxu0 0.0
    %162 = vmatpush1.msra.mxu0 0.0
    %163 = vmatprep.subr.mxu0 0.0
    %164 = vmatpush1.msra.mxu0 0.0
    %165 = vmatprep.subr.mxu0 0.0
    %166 = vmatpush1.msra.mxu0 0.0
    %167 = vmatprep.subr.mxu0 0.0
    %168 = vmatpush1.msra.mxu0 0.0
    %169 = vmatprep.subr.mxu0 0.0
    %170 = vmatpush1.msra.mxu0 0.0
    %171 = vmatprep.subr.mxu0 0.0
    %172 = vmatpush1.msra.mxu0 0.0
    %173 = vmatprep.subr.mxu0 0.0
    %174 = vmatpush1.msra.mxu0 0.0
    %175 = vmatprep.subr.mxu0 0.0
    %176 = vmatpush1.msra.mxu0 0.0
    %177 = vmatprep.subr.mxu0 0.0
    %178 = vmatpush1.msra.mxu0 0.0
    %179 = vmatprep.subr.mxu0 0.0
    %180 = vmatpush1.msra.mxu0 0.0
    %181 = vmatprep.subr.mxu0 0.0
    %182 = vmatpush1.msra.mxu0 0.0
    %183 = vmatprep.mubr.f32.mxu0 0.0
    %184 = vmatmul.mubr.f32.gmra.mrb[0].mxu0 %v114
    %v185 = vpop.f32.mrb[0].mxu0
    %v186 = vadd.f32 %v111, %v185
    %v187 = vpop.f32.mrb[0].mxu0
    %188 = vmatprep.mubr.f32.mxu0 0.0
    %189 = vmatmul.mubr.f32.gmra.mrb[0].mxu0 %v117
    %v190 = vpop.f32.mrb[0].mxu0
    %v191 = vadd.f32 %v111, %v190
    %v192 = vpop.f32.mrb[0].mxu0
    %193 = vdwg.mxu0
    %196 = vrot.lane.b32.xlu0 %v186, 96
    %v197 = vpop.permute.xlu0 %196
    %198 = vrot.lane.b32.xlu0 %v191, 96
    %v199 = vpop.permute.xlu0 %198
    %vm200 = vcmask 64512
    %v201 = vsel %vm200, %v186, 0
    %v203 = vsel %vm200, %v191, 0
    %v205 = vsel %vm200, %v197, 0
    %v207 = vsel %vm200, %v199, 0
    %209 = vmatprep.subr.mxu0 0.0
    %210 = vmatpush1.xpose.msra.mxu0 %v205
    %211 = vmatprep.subr.mxu0 0.0
    %212 = vmatpush1.xpose.msra.mxu0 %v207
    %213 = vmatprep.subr.mxu0 0.0
    %214 = vmatpush1.xpose.msra.mxu0 0.0
    %215 = vmatprep.subr.mxu0 0.0
    %216 = vmatpush1.xpose.msra.mxu0 0.0
    %217 = vmatprep.subr.mxu0 0.0
    %218 = vmatpush1.xpose.msra.mxu0 0.0
    %219 = vmatprep.subr.mxu0 0.0
    %220 = vmatpush1.xpose.msra.mxu0 0.0
    %221 = vmatprep.subr.mxu0 0.0
    %222 = vmatpush1.xpose.msra.mxu0 0.0
    %223 = vmatprep.subr.mxu0 0.0
    %224 = vmatpush1.xpose.msra.mxu0 0.0
    %225 = vmatprep.subr.mxu0 0.0
    %226 = vmatpush1.xpose.msra.mxu0 0.0
    %227 = vmatprep.subr.mxu0 0.0
    %228 = vmatpush1.xpose.msra.mxu0 0.0
    %229 = vmatprep.subr.mxu0 0.0
    %230 = vmatpush1.xpose.msra.mxu0 0.0
    %231 = vmatprep.subr.mxu0 0.0
    %232 = vmatpush1.xpose.msra.mxu0 0.0
    %233 = vmatprep.subr.mxu0 0.0
    %234 = vmatpush1.xpose.msra.mxu0 0.0
    %235 = vmatprep.subr.mxu0 0.0
    %236 = vmatpush1.xpose.msra.mxu0 0.0
    %237 = vmatprep.subr.mxu0 0.0
    %238 = vmatpush1.xpose.msra.mxu0 0.0
    %239 = vmatprep.subr.mxu0 0.0
    %240 = vmatpush1.xpose.msra.mxu0 0.0
    %241 = vmatprep.subr.mxu0 0.0
    %242 = vmatpush1.xpose.msra.mxu0 0.0
    %243 = vmatprep.subr.mxu0 0.0
    %244 = vmatpush1.xpose.msra.mxu0 0.0
    %245 = vmatprep.subr.mxu0 0.0
    %246 = vmatpush1.xpose.msra.mxu0 0.0
    %247 = vmatprep.subr.mxu0 0.0
    %248 = vmatpush1.xpose.msra.mxu0 0.0
    %249 = vmatprep.subr.mxu0 0.0
    %250 = vmatpush1.xpose.msra.mxu0 0.0
    %251 = vmatprep.subr.mxu0 0.0
    %252 = vmatpush1.xpose.msra.mxu0 0.0
    %253 = vmatprep.subr.mxu0 0.0
    %254 = vmatpush1.xpose.msra.mxu0 0.0
    %255 = vmatprep.subr.mxu0 0.0
    %256 = vmatpush1.xpose.msra.mxu0 0.0
    %257 = vmatprep.subr.mxu0 0.0
    %258 = vmatpush1.xpose.msra.mxu0 0.0
    %259 = vmatprep.subr.mxu0 0.0
    %260 = vmatpush1.xpose.msra.mxu0 0.0
    %261 = vmatprep.subr.mxu0 0.0
    %262 = vmatpush1.xpose.msra.mxu0 0.0
    %263 = vmatprep.subr.mxu0 0.0
    %264 = vmatpush1.xpose.msra.mxu0 0.0
    %265 = vmatprep.subr.mxu0 0.0
    %266 = vmatpush1.xpose.msra.mxu0 0.0
    %267 = vmatprep.subr.mxu0 0.0
    %268 = vmatpush1.xpose.msra.mxu0 0.0
    %269 = vmatprep.subr.mxu0 0.0
    %270 = vmatpush1.xpose.msra.mxu0 0.0
    %271 = vmatprep.subr.mxu0 0.0
    %272 = vmatpush1.xpose.msra.mxu0 0.0
    %273 = vmatprep.mubr.f32.mxu0 0.0
    %274 = vmatmul.mubr.f32.gmra.mrb[0].mxu0 %v201
    %v275 = vpop.f32.mrb[0].mxu0
    %v276 = vadd.f32 %v83, %v275
    %v277 = vpop.f32.mrb[0].mxu0
    %278 = vmatprep.mubr.f32.mxu0 0.0
    %279 = vmatmul.mubr.f32.gmra.mrb[0].mxu0 %v203
    %v280 = vpop.f32.mrb[0].mxu0
    %v281 = vadd.f32 %v84, %v280
    %v282 = vpop.f32.mrb[0].mxu0
    %283 = vdwg.mxu0
    %vm284 = vcmask 130048
    %v285 = vsel %vm284, %v276, -inf
    %286 = vmax.xlane.f32.xlu0 %v285
    %v287 = vpop.xlane.xlu0 %286
    %v288 = vsel %vm284, %v281, -inf
    %289 = vmax.xlane.f32.xlu0 %v288
    %v290 = vpop.xlane.xlu0 %289
    %v291 = vsub.f32 %v276, %v287
    %v292 = vsub.f32 %v281, %v290
    %v293 = vmul.f32 %v291, 1.442695
    %v294 = vpow.pop %v293
    %v295 = vmul.f32 %v292, 1.442695
    %v296 = vpow.pop %v295
    %v297 = vsel %vm284, %v294, 0.0
    %298 = vadd.xlane.f32.xlu0 %v297
    %v299 = vpop.xlane.xlu0 %298
    %v300 = vsel %vm284, %v296, 0.0
    %301 = vadd.xlane.f32.xlu0 %v300
    %v302 = vpop.xlane.xlu0 %301
    %303 = vrot.lane.b32.xlu0 %v186, 64
    %v304 = vpop.permute.xlu0 %303
    %305 = vrot.lane.b32.xlu0 %v191, 64
    %v306 = vpop.permute.xlu0 %305
    %v310 = vsel %vm284, %v294, 0
    %v313 = vsel %vm284, %v296, 0
    %315 = vmatprep.subr.mxu0 0.0
    %316 = vmatpush1.msra.mxu0 %v304
    %317 = vmatprep.subr.mxu0 0.0
    %318 = vmatpush1.msra.mxu0 %v306
    %319 = vmatprep.subr.mxu0 0.0
    %320 = vmatpush1.msra.mxu0 0.0
    %321 = vmatprep.subr.mxu0 0.0
    %322 = vmatpush1.msra.mxu0 0.0
    %323 = vmatprep.subr.mxu0 0.0
    %324 = vmatpush1.msra.mxu0 0.0
    %325 = vmatprep.subr.mxu0 0.0
    %326 = vmatpush1.msra.mxu0 0.0
    %327 = vmatprep.subr.mxu0 0.0
    %328 = vmatpush1.msra.mxu0 0.0
    %329 = vmatprep.subr.mxu0 0.0
    %330 = vmatpush1.msra.mxu0 0.0
    %331 = vmatprep.subr.mxu0 0.0
    %332 = vmatpush1.msra.mxu0 0.0
    %333 = vmatprep.subr.mxu0 0.0
    %334 = vmatpush1.msra.mxu0 0.0
    %335 = vmatprep.subr.mxu0 0.0
    %336 = vmatpush1.msra.mxu0 0.0
    %337 = vmatprep.subr.mxu0 0.0
    %338 = vmatpush1.msra.mxu0 0.0
    %339 = vmatprep.subr.mxu0 0.0
    %340 = vmatpush1.msra.mxu0 0.0
    %341 = vmatprep.subr.mxu0 0.0
    %342 = vmatpush1.msra.mxu0 0.0
    %343 = vmatprep.subr.mxu0 0.0
    %344 = vmatpush1.msra.mxu0 0.0
    %345 = vmatprep.subr.mxu0 0.0
    %346 = vmatpush1.msra.mxu0 0.0
    %347 = vmatprep.subr.mxu0 0.0
    %348 = vmatpush1.msra.mxu0 0.0
    %349 = vmatprep.subr.mxu0 0.0
    %350 = vmatpush1.msra.mxu0 0.0
    %351 = vmatprep.subr.mxu0 0.0
    %352 = vmatpush1.msra.mxu0 0.0
    %353 = vmatprep.subr.mxu0 0.0
    %354 = vmatpush1.msra.mxu0 0.0
    %355 = vmatprep.subr.mxu0 0.0
    %356 = vmatpush1.msra.mxu0 0.0
    %357 = vmatprep.subr.mxu0 0.0
    %358 = vmatpush1.msra.mxu0 0.0
    %359 = vmatprep.subr.mxu0 0.0
    %360 = vmatpush1.msra.mxu0 0.0
    %361 = vmatprep.subr.mxu0 0.0
    %362 = vmatpush1.msra.mxu0 0.0
    %363 = vmatprep.subr.mxu0 0.0
    %364 = vmatpush1.msra.mxu0 0.0
    %365 = vmatprep.subr.mxu0 0.0
    %366 = vmatpush1.msra.mxu0 0.0
    %367 = vmatprep.subr.mxu0 0.0
    %368 = vmatpush1.msra.mxu0 0.0
    %369 = vmatprep.subr.mxu0 0.0
    %370 = vmatpush1.msra.mxu0 0.0
    %371 = vmatprep.subr.mxu0 0.0
    %372 = vmatpush1.msra.mxu0 0.0
    %373 = vmatprep.subr.mxu0 0.0
    %374 = vmatpush1.msra.mxu0 0.0
    %375 = vmatprep.subr.mxu0 0.0
    %376 = vmatpush1.msra.mxu0 0.0
    %377 = vmatprep.subr.mxu0 0.0
    %378 = vmatpush1.msra.mxu0 0.0
    %379 = vmatprep.mubr.f32.mxu0 0.0
    %380 = vmatmul.mubr.f32.gmra.mrb[0].mxu0 %v310
    %v381 = vpop.f32.mrb[0].mxu0
    %v382 = vadd.f32 0.0, %v381
    %v383 = vpop.f32.mrb[0].mxu0
    %384 = vmatprep.mubr.f32.mxu0 0.0
    %385 = vmatmul.mubr.f32.gmra.mrb[0].mxu0 %v313
    %v386 = vpop.f32.mrb[0].mxu0
    %v387 = vadd.f32 0.0, %v386
    %v388 = vpop.f32.mrb[0].mxu0
    %389 = vdwg.mxu0
    %v390 = vrcp.pop %v299
    %v391 = vrcp.pop %v302
    %v392 = vmul.f32 %v382, %v390
    %v393 = vmul.f32 %v387, %v391
    %394 = vrot.lane.b32.xlu0 %v186, 120
    %v395 = vpop.permute.xlu0 %394
    %396 = vrot.lane.b32.xlu0 %v191, 120
    %v397 = vpop.permute.xlu0 %396
    %398 = vrot.lane.b32.xlu0 %v186, 88
    %v399 = vpop.permute.xlu0 %398
    %400 = vrot.lane.b32.xlu0 %v191, 88
    %v401 = vpop.permute.xlu0 %400
    %v402 = vsel %vm200, %v395, 0
    %v404 = vsel %vm200, %v397, 0
    %v406 = vsel %vm200, %v399, 0
    %v408 = vsel %vm200, %v401, 0
    %410 = vmatprep.subr.mxu0 0.0
    %411 = vmatpush1.xpose.msra.mxu0 %v406
    %412 = vmatprep.subr.mxu0 0.0
    %413 = vmatpush1.xpose.msra.mxu0 %v408
    %414 = vmatprep.subr.mxu0 0.0
    %415 = vmatpush1.xpose.msra.mxu0 0.0
    %416 = vmatprep.subr.mxu0 0.0
    %417 = vmatpush1.xpose.msra.mxu0 0.0
    %418 = vmatprep.subr.mxu0 0.0
    %419 = vmatpush1.xpose.msra.mxu0 0.0
    %420 = vmatprep.subr.mxu0 0.0
    %421 = vmatpush1.xpose.msra.mxu0 0.0
    %422 = vmatprep.subr.mxu0 0.0
    %423 = vmatpush1.xpose.msra.mxu0 0.0
    %424 = vmatprep.subr.mxu0 0.0
    %425 = vmatpush1.xpose.msra.mxu0 0.0
    %426 = vmatprep.subr.mxu0 0.0
    %427 = vmatpush1.xpose.msra.mxu0 0.0
    %428 = vmatprep.subr.mxu0 0.0
    %429 = vmatpush1.xpose.msra.mxu0 0.0
    %430 = vmatprep.subr.mxu0 0.0
    %431 = vmatpush1.xpose.msra.mxu0 0.0
    %432 = vmatprep.subr.mxu0 0.0
    %433 = vmatpush1.xpose.msra.mxu0 0.0
    %434 = vmatprep.subr.mxu0 0.0
    %435 = vmatpush1.xpose.msra.mxu0 0.0
    %436 = vmatprep.subr.mxu0 0.0
    %437 = vmatpush1.xpose.msra.mxu0 0.0
    %438 = vmatprep.subr.mxu0 0.0
    %439 = vmatpush1.xpose.msra.mxu0 0.0
    %440 = vmatprep.subr.mxu0 0.0
    %441 = vmatpush1.xpose.msra.mxu0 0.0
    %442 = vmatprep.subr.mxu0 0.0
    %443 = vmatpush1.xpose.msra.mxu0 0.0
    %444 = vmatprep.subr.mxu0 0.0
    %445 = vmatpush1.xpose.msra.mxu0 0.0
    %446 = vmatprep.subr.mxu0 0.0
    %447 = vmatpush1.xpose.msra.mxu0 0.0
    %448 = vmatprep.subr.mxu0 0.0
    %449 = vmatpush1.xpose.msra.mxu0 0.0
    %450 = vmatprep.subr.mxu0 0.0
    %451 = vmatpush1.xpose.msra.mxu0 0.0
    %452 = vmatprep.subr.mxu0 0.0
    %453 = vmatpush1.xpose.msra.mxu0 0.0
    %454 = vmatprep.subr.mxu0 0.0
    %455 = vmatpush1.xpose.msra.mxu0 0.0
    %456 = vmatprep.subr.mxu0 0.0
    %457 = vmatpush1.xpose.msra.mxu0 0.0
    %458 = vmatprep.subr.mxu0 0.0
    %459 = vmatpush1.xpose.msra.mxu0 0.0
    %460 = vmatprep.subr.mxu0 0.0
    %461 = vmatpush1.xpose.msra.mxu0 0.0
    %462 = vmatprep.subr.mxu0 0.0
    %463 = vmatpush1.xpose.msra.mxu0 0.0
    %464 = vmatprep.subr.mxu0 0.0
    %465 = vmatpush1.xpose.msra.mxu0 0.0
    %466 = vmatprep.subr.mxu0 0.0
    %467 = vmatpush1.xpose.msra.mxu0 0.0
    %468 = vmatprep.subr.mxu0 0.0
    %469 = vmatpush1.xpose.msra.mxu0 0.0
    %470 = vmatprep.subr.mxu0 0.0
    %471 = vmatpush1.xpose.msra.mxu0 0.0
    %472 = vmatprep.subr.mxu0 0.0
    %473 = vmatpush1.xpose.msra.mxu0 0.0
    %474 = vmatprep.mubr.f32.mxu0 0.0
    %475 = vmatmul.mubr.f32.gmra.mrb[0].mxu0 %v402
    %v476 = vpop.f32.mrb[0].mxu0
    %v477 = vadd.f32 %v83, %v476
    %v478 = vpop.f32.mrb[0].mxu0
    %479 = vmatprep.mubr.f32.mxu0 0.0
    %480 = vmatmul.mubr.f32.gmra.mrb[0].mxu0 %v404
    %v481 = vpop.f32.mrb[0].mxu0
    %v482 = vadd.f32 %v84, %v481
    %v483 = vpop.f32.mrb[0].mxu0
    %484 = vdwg.mxu0
    %v485 = vsel %vm284, %v477, -inf
    %486 = vmax.xlane.f32.xlu0 %v485
    %v487 = vpop.xlane.xlu0 %486
    %v488 = vsel %vm284, %v482, -inf
    %489 = vmax.xlane.f32.xlu0 %v488
    %v490 = vpop.xlane.xlu0 %489
    %v491 = vsub.f32 %v477, %v487
    %v492 = vsub.f32 %v482, %v490
    %v493 = vmul.f32 %v491, 1.442695
    %v494 = vpow.pop %v493
    %v495 = vmul.f32 %v492, 1.442695
    %v496 = vpow.pop %v495
    %v497 = vsel %vm284, %v494, 0.0
    %498 = vadd.xlane.f32.xlu0 %v497
    %v499 = vpop.xlane.xlu0 %498
    %v500 = vsel %vm284, %v496, 0.0
    %501 = vadd.xlane.f32.xlu0 %v500
    %v502 = vpop.xlane.xlu0 %501
    %503 = vrot.lane.b32.xlu0 %v186, 56
    %v504 = vpop.permute.xlu0 %503
    %505 = vrot.lane.b32.xlu0 %v191, 56
    %v506 = vpop.permute.xlu0 %505
    %v510 = vsel %vm284, %v494, 0
    %v513 = vsel %vm284, %v496, 0
    %515 = vmatprep.subr.mxu0 0.0
    %516 = vmatpush1.msra.mxu0 %v504
    %517 = vmatprep.subr.mxu0 0.0
    %518 = vmatpush1.msra.mxu0 %v506
    %519 = vmatprep.subr.mxu0 0.0
    %520 = vmatpush1.msra.mxu0 0.0
    %521 = vmatprep.subr.mxu0 0.0
    %522 = vmatpush1.msra.mxu0 0.0
    %523 = vmatprep.subr.mxu0 0.0
    %524 = vmatpush1.msra.mxu0 0.0
    %525 = vmatprep.subr.mxu0 0.0
    %526 = vmatpush1.msra.mxu0 0.0
    %527 = vmatprep.subr.mxu0 0.0
    %528 = vmatpush1.msra.mxu0 0.0
    %529 = vmatprep.subr.mxu0 0.0
    %530 = vmatpush1.msra.mxu0 0.0
    %531 = vmatprep.subr.mxu0 0.0
    %532 = vmatpush1.msra.mxu0 0.0
    %533 = vmatprep.subr.mxu0 0.0
    %534 = vmatpush1.msra.mxu0 0.0
    %535 = vmatprep.subr.mxu0 0.0
    %536 = vmatpush1.msra.mxu0 0.0
    %537 = vmatprep.subr.mxu0 0.0
    %538 = vmatpush1.msra.mxu0 0.0
    %539 = vmatprep.subr.mxu0 0.0
    %540 = vmatpush1.msra.mxu0 0.0
    %541 = vmatprep.subr.mxu0 0.0
    %542 = vmatpush1.msra.mxu0 0.0
    %543 = vmatprep.subr.mxu0 0.0
    %544 = vmatpush1.msra.mxu0 0.0
    %545 = vmatprep.subr.mxu0 0.0
    %546 = vmatpush1.msra.mxu0 0.0
    %547 = vmatprep.subr.mxu0 0.0
    %548 = vmatpush1.msra.mxu0 0.0
    %549 = vmatprep.subr.mxu0 0.0
    %550 = vmatpush1.msra.mxu0 0.0
    %551 = vmatprep.subr.mxu0 0.0
    %552 = vmatpush1.msra.mxu0 0.0
    %553 = vmatprep.subr.mxu0 0.0
    %554 = vmatpush1.msra.mxu0 0.0
    %555 = vmatprep.subr.mxu0 0.0
    %556 = vmatpush1.msra.mxu0 0.0
    %557 = vmatprep.subr.mxu0 0.0
    %558 = vmatpush1.msra.mxu0 0.0
    %559 = vmatprep.subr.mxu0 0.0
    %560 = vmatpush1.msra.mxu0 0.0
    %561 = vmatprep.subr.mxu0 0.0
    %562 = vmatpush1.msra.mxu0 0.0
    %563 = vmatprep.subr.mxu0 0.0
    %564 = vmatpush1.msra.mxu0 0.0
    %565 = vmatprep.subr.mxu0 0.0
    %566 = vmatpush1.msra.mxu0 0.0
    %567 = vmatprep.subr.mxu0 0.0
    %568 = vmatpush1.msra.mxu0 0.0
    %569 = vmatprep.subr.mxu0 0.0
    %570 = vmatpush1.msra.mxu0 0.0
    %571 = vmatprep.subr.mxu0 0.0
    %572 = vmatpush1.msra.mxu0 0.0
    %573 = vmatprep.subr.mxu0 0.0
    %574 = vmatpush1.msra.mxu0 0.0
    %575 = vmatprep.subr.mxu0 0.0
    %576 = vmatpush1.msra.mxu0 0.0
    %577 = vmatprep.subr.mxu0 0.0
    %578 = vmatpush1.msra.mxu0 0.0
    %579 = vmatprep.mubr.f32.mxu0 0.0
    %580 = vmatmul.mubr.f32.gmra.mrb[0].mxu0 %v510
    %v581 = vpop.f32.mrb[0].mxu0
    %v582 = vadd.f32 0.0, %v581
    %v583 = vpop.f32.mrb[0].mxu0
    %584 = vmatprep.mubr.f32.mxu0 0.0
    %585 = vmatmul.mubr.f32.gmra.mrb[0].mxu0 %v513
    %v586 = vpop.f32.mrb[0].mxu0
    %v587 = vadd.f32 0.0, %v586
    %v588 = vpop.f32.mrb[0].mxu0
    %589 = vdwg.mxu0
    %v590 = vrcp.pop %v499
    %v591 = vrcp.pop %v502
    %v592 = vmul.f32 %v582, %v590
    %v593 = vmul.f32 %v587, %v591
    %594 = vrot.lane.b32.xlu0 %v186, 112
    %v595 = vpop.permute.xlu0 %594
    %596 = vrot.lane.b32.xlu0 %v191, 112
    %v597 = vpop.permute.xlu0 %596
    %598 = vrot.lane.b32.xlu0 %v186, 80
    %v599 = vpop.permute.xlu0 %598
    %600 = vrot.lane.b32.xlu0 %v191, 80
    %v601 = vpop.permute.xlu0 %600
    %v602 = vsel %vm200, %v595, 0
    %v604 = vsel %vm200, %v597, 0
    %v606 = vsel %vm200, %v599, 0
    %v608 = vsel %vm200, %v601, 0
    %610 = vmatprep.subr.mxu0 0.0
    %611 = vmatpush1.xpose.msra.mxu0 %v606
    %612 = vmatprep.subr.mxu0 0.0
    %613 = vmatpush1.xpose.msra.mxu0 %v608
    %614 = vmatprep.subr.mxu0 0.0
    %615 = vmatpush1.xpose.msra.mxu0 0.0
    %616 = vmatprep.subr.mxu0 0.0
    %617 = vmatpush1.xpose.msra.mxu0 0.0
    %618 = vmatprep.subr.mxu0 0.0
    %619 = vmatpush1.xpose.msra.mxu0 0.0
    %620 = vmatprep.subr.mxu0 0.0
    %621 = vmatpush1.xpose.msra.mxu0 0.0
    %622 = vmatprep.subr.mxu0 0.0
    %623 = vmatpush1.xpose.msra.mxu0 0.0
    %624 = vmatprep.subr.mxu0 0.0
    %625 = vmatpush1.xpose.msra.mxu0 0.0
    %626 = vmatprep.subr.mxu0 0.0
    %627 = vmatpush1.xpose.msra.mxu0 0.0
    %628 = vmatprep.subr.mxu0 0.0
    %629 = vmatpush1.xpose.msra.mxu0 0.0
    %630 = vmatprep.subr.mxu0 0.0
    %631 = vmatpush1.xpose.msra.mxu0 0.0
    %632 = vmatprep.subr.mxu0 0.0
    %633 = vmatpush1.xpose.msra.mxu0 0.0
    %634 = vmatprep.subr.mxu0 0.0
    %635 = vmatpush1.xpose.msra.mxu0 0.0
    %636 = vmatprep.subr.mxu0 0.0
    %637 = vmatpush1.xpose.msra.mxu0 0.0
    %638 = vmatprep.subr.mxu0 0.0
    %639 = vmatpush1.xpose.msra.mxu0 0.0
    %640 = vmatprep.subr.mxu0 0.0
    %641 = vmatpush1.xpose.msra.mxu0 0.0
    %642 = vmatprep.subr.mxu0 0.0
    %643 = vmatpush1.xpose.msra.mxu0 0.0
    %644 = vmatprep.subr.mxu0 0.0
    %645 = vmatpush1.xpose.msra.mxu0 0.0
    %646 = vmatprep.subr.mxu0 0.0
    %647 = vmatpush1.xpose.msra.mxu0 0.0
    %648 = vmatprep.subr.mxu0 0.0
    %649 = vmatpush1.xpose.msra.mxu0 0.0
    %650 = vmatprep.subr.mxu0 0.0
    %651 = vmatpush1.xpose.msra.mxu0 0.0
    %652 = vmatprep.subr.mxu0 0.0
    %653 = vmatpush1.xpose.msra.mxu0 0.0
    %654 = vmatprep.subr.mxu0 0.0
    %655 = vmatpush1.xpose.msra.mxu0 0.0
    %656 = vmatprep.subr.mxu0 0.0
    %657 = vmatpush1.xpose.msra.mxu0 0.0
    %658 = vmatprep.subr.mxu0 0.0
    %659 = vmatpush1.xpose.msra.mxu0 0.0
    %660 = vmatprep.subr.mxu0 0.0
    %661 = vmatpush1.xpose.msra.mxu0 0.0
    %662 = vmatprep.subr.mxu0 0.0
    %663 = vmatpush1.xpose.msra.mxu0 0.0
    %664 = vmatprep.subr.mxu0 0.0
    %665 = vmatpush1.xpose.msra.mxu0 0.0
    %666 = vmatprep.subr.mxu0 0.0
    %667 = vmatpush1.xpose.msra.mxu0 0.0
    %668 = vmatprep.subr.mxu0 0.0
    %669 = vmatpush1.xpose.msra.mxu0 0.0
    %670 = vmatprep.subr.mxu0 0.0
    %671 = vmatpush1.xpose.msra.mxu0 0.0
    %672 = vmatprep.subr.mxu0 0.0
    %673 = vmatpush1.xpose.msra.mxu0 0.0
    %674 = vmatprep.mubr.f32.mxu0 0.0
    %675 = vmatmul.mubr.f32.gmra.mrb[0].mxu0 %v602
    %v676 = vpop.f32.mrb[0].mxu0
    %v677 = vadd.f32 %v83, %v676
    %v678 = vpop.f32.mrb[0].mxu0
    %679 = vmatprep.mubr.f32.mxu0 0.0
    %680 = vmatmul.mubr.f32.gmra.mrb[0].mxu0 %v604
    %v681 = vpop.f32.mrb[0].mxu0
    %v682 = vadd.f32 %v84, %v681
    %v683 = vpop.f32.mrb[0].mxu0
    %684 = vdwg.mxu0
    %v685 = vsel %vm284, %v677, -inf
    %686 = vmax.xlane.f32.xlu0 %v685
    %v687 = vpop.xlane.xlu0 %686
    %v688 = vsel %vm284, %v682, -inf
    %689 = vmax.xlane.f32.xlu0 %v688
    %v690 = vpop.xlane.xlu0 %689
    %v691 = vsub.f32 %v677, %v687
    %v692 = vsub.f32 %v682, %v690
    %v693 = vmul.f32 %v691, 1.442695
    %v694 = vpow.pop %v693
    %v695 = vmul.f32 %v692, 1.442695
    %v696 = vpow.pop %v695
    %v697 = vsel %vm284, %v694, 0.0
    %698 = vadd.xlane.f32.xlu0 %v697
    %v699 = vpop.xlane.xlu0 %698
    %v700 = vsel %vm284, %v696, 0.0
    %701 = vadd.xlane.f32.xlu0 %v700
    %v702 = vpop.xlane.xlu0 %701
    %703 = vrot.lane.b32.xlu0 %v186, 48
    %v704 = vpop.permute.xlu0 %703
    %705 = vrot.lane.b32.xlu0 %v191, 48
    %v706 = vpop.permute.xlu0 %705
    %v710 = vsel %vm284, %v694, 0
    %v713 = vsel %vm284, %v696, 0
    %715 = vmatprep.subr.mxu0 0.0
    %716 = vmatpush1.msra.mxu0 %v704
    %717 = vmatprep.subr.mxu0 0.0
    %718 = vmatpush1.msra.mxu0 %v706
    %719 = vmatprep.subr.mxu0 0.0
    %720 = vmatpush1.msra.mxu0 0.0
    %721 = vmatprep.subr.mxu0 0.0
    %722 = vmatpush1.msra.mxu0 0.0
    %723 = vmatprep.subr.mxu0 0.0
    %724 = vmatpush1.msra.mxu0 0.0
    %725 = vmatprep.subr.mxu0 0.0
    %726 = vmatpush1.msra.mxu0 0.0
    %727 = vmatprep.subr.mxu0 0.0
    %728 = vmatpush1.msra.mxu0 0.0
    %729 = vmatprep.subr.mxu0 0.0
    %730 = vmatpush1.msra.mxu0 0.0
    %731 = vmatprep.subr.mxu0 0.0
    %732 = vmatpush1.msra.mxu0 0.0
    %733 = vmatprep.subr.mxu0 0.0
    %734 = vmatpush1.msra.mxu0 0.0
    %735 = vmatprep.subr.mxu0 0.0
    %736 = vmatpush1.msra.mxu0 0.0
    %737 = vmatprep.subr.mxu0 0.0
    %738 = vmatpush1.msra.mxu0 0.0
    %739 = vmatprep.subr.mxu0 0.0
    %740 = vmatpush1.msra.mxu0 0.0
    %741 = vmatprep.subr.mxu0 0.0
    %742 = vmatpush1.msra.mxu0 0.0
    %743 = vmatprep.subr.mxu0 0.0
    %744 = vmatpush1.msra.mxu0 0.0
    %745 = vmatprep.subr.mxu0 0.0
    %746 = vmatpush1.msra.mxu0 0.0
    %747 = vmatprep.subr.mxu0 0.0
    %748 = vmatpush1.msra.mxu0 0.0
    %749 = vmatprep.subr.mxu0 0.0
    %750 = vmatpush1.msra.mxu0 0.0
    %751 = vmatprep.subr.mxu0 0.0
    %752 = vmatpush1.msra.mxu0 0.0
    %753 = vmatprep.subr.mxu0 0.0
    %754 = vmatpush1.msra.mxu0 0.0
    %755 = vmatprep.subr.mxu0 0.0
    %756 = vmatpush1.msra.mxu0 0.0
    %757 = vmatprep.subr.mxu0 0.0
    %758 = vmatpush1.msra.mxu0 0.0
    %759 = vmatprep.subr.mxu0 0.0
    %760 = vmatpush1.msra.mxu0 0.0
    %761 = vmatprep.subr.mxu0 0.0
    %762 = vmatpush1.msra.mxu0 0.0
    %763 = vmatprep.subr.mxu0 0.0
    %764 = vmatpush1.msra.mxu0 0.0
    %765 = vmatprep.subr.mxu0 0.0
    %766 = vmatpush1.msra.mxu0 0.0
    %767 = vmatprep.subr.mxu0 0.0
    %768 = vmatpush1.msra.mxu0 0.0
    %769 = vmatprep.subr.mxu0 0.0
    %770 = vmatpush1.msra.mxu0 0.0
    %771 = vmatprep.subr.mxu0 0.0
    %772 = vmatpush1.msra.mxu0 0.0
    %773 = vmatprep.subr.mxu0 0.0
    %774 = vmatpush1.msra.mxu0 0.0
    %775 = vmatprep.subr.mxu0 0.0
    %776 = vmatpush1.msra.mxu0 0.0
    %777 = vmatprep.subr.mxu0 0.0
    %778 = vmatpush1.msra.mxu0 0.0
    %779 = vmatprep.mubr.f32.mxu0 0.0
    %780 = vmatmul.mubr.f32.gmra.mrb[0].mxu0 %v710
    %v781 = vpop.f32.mrb[0].mxu0
    %v782 = vadd.f32 0.0, %v781
    %v783 = vpop.f32.mrb[0].mxu0
    %784 = vmatprep.mubr.f32.mxu0 0.0
    %785 = vmatmul.mubr.f32.gmra.mrb[0].mxu0 %v713
    %v786 = vpop.f32.mrb[0].mxu0
    %v787 = vadd.f32 0.0, %v786
    %v788 = vpop.f32.mrb[0].mxu0
    %789 = vdwg.mxu0
    %v790 = vrcp.pop %v699
    %v791 = vrcp.pop %v702
    %v792 = vmul.f32 %v782, %v790
    %v793 = vmul.f32 %v787, %v791
    %794 = vrot.lane.b32.xlu0 %v186, 104
    %v795 = vpop.permute.xlu0 %794
    %796 = vrot.lane.b32.xlu0 %v191, 104
    %v797 = vpop.permute.xlu0 %796
    %798 = vrot.lane.b32.xlu0 %v186, 72
    %v799 = vpop.permute.xlu0 %798
    %800 = vrot.lane.b32.xlu0 %v191, 72
    %v801 = vpop.permute.xlu0 %800
    %v802 = vsel %vm200, %v795, 0
    %v804 = vsel %vm200, %v797, 0
    %v806 = vsel %vm200, %v799, 0
    %v808 = vsel %vm200, %v801, 0
    %810 = vmatprep.subr.mxu0 0.0
    %811 = vmatpush1.xpose.msra.mxu0 %v806
    %812 = vmatprep.subr.mxu0 0.0
    %813 = vmatpush1.xpose.msra.mxu0 %v808
    %814 = vmatprep.subr.mxu0 0.0
    %815 = vmatpush1.xpose.msra.mxu0 0.0
    %816 = vmatprep.subr.mxu0 0.0
    %817 = vmatpush1.xpose.msra.mxu0 0.0
    %818 = vmatprep.subr.mxu0 0.0
    %819 = vmatpush1.xpose.msra.mxu0 0.0
    %820 = vmatprep.subr.mxu0 0.0
    %821 = vmatpush1.xpose.msra.mxu0 0.0
    %822 = vmatprep.subr.mxu0 0.0
    %823 = vmatpush1.xpose.msra.mxu0 0.0
    %824 = vmatprep.subr.mxu0 0.0
    %825 = vmatpush1.xpose.msra.mxu0 0.0
    %826 = vmatprep.subr.mxu0 0.0
    %827 = vmatpush1.xpose.msra.mxu0 0.0
    %828 = vmatprep.subr.mxu0 0.0
    %829 = vmatpush1.xpose.msra.mxu0 0.0
    %830 = vmatprep.subr.mxu0 0.0
    %831 = vmatpush1.xpose.msra.mxu0 0.0
    %832 = vmatprep.subr.mxu0 0.0
    %833 = vmatpush1.xpose.msra.mxu0 0.0
    %834 = vmatprep.subr.mxu0 0.0
    %835 = vmatpush1.xpose.msra.mxu0 0.0
    %836 = vmatprep.subr.mxu0 0.0
    %837 = vmatpush1.xpose.msra.mxu0 0.0
    %838 = vmatprep.subr.mxu0 0.0
    %839 = vmatpush1.xpose.msra.mxu0 0.0
    %840 = vmatprep.subr.mxu0 0.0
    %841 = vmatpush1.xpose.msra.mxu0 0.0
    %842 = vmatprep.subr.mxu0 0.0
    %843 = vmatpush1.xpose.msra.mxu0 0.0
    %844 = vmatprep.subr.mxu0 0.0
    %845 = vmatpush1.xpose.msra.mxu0 0.0
    %846 = vmatprep.subr.mxu0 0.0
    %847 = vmatpush1.xpose.msra.mxu0 0.0
    %848 = vmatprep.subr.mxu0 0.0
    %849 = vmatpush1.xpose.msra.mxu0 0.0
    %850 = vmatprep.subr.mxu0 0.0
    %851 = vmatpush1.xpose.msra.mxu0 0.0
    %852 = vmatprep.subr.mxu0 0.0
    %853 = vmatpush1.xpose.msra.mxu0 0.0
    %854 = vmatprep.subr.mxu0 0.0
    %855 = vmatpush1.xpose.msra.mxu0 0.0
    %856 = vmatprep.subr.mxu0 0.0
    %857 = vmatpush1.xpose.msra.mxu0 0.0
    %858 = vmatprep.subr.mxu0 0.0
    %859 = vmatpush1.xpose.msra.mxu0 0.0
    %860 = vmatprep.subr.mxu0 0.0
    %861 = vmatpush1.xpose.msra.mxu0 0.0
    %862 = vmatprep.subr.mxu0 0.0
    %863 = vmatpush1.xpose.msra.mxu0 0.0
    %864 = vmatprep.subr.mxu0 0.0
    %865 = vmatpush1.xpose.msra.mxu0 0.0
    %866 = vmatprep.subr.mxu0 0.0
    %867 = vmatpush1.xpose.msra.mxu0 0.0
    %868 = vmatprep.subr.mxu0 0.0
    %869 = vmatpush1.xpose.msra.mxu0 0.0
    %870 = vmatprep.subr.mxu0 0.0
    %871 = vmatpush1.xpose.msra.mxu0 0.0
    %872 = vmatprep.subr.mxu0 0.0
    %873 = vmatpush1.xpose.msra.mxu0 0.0
    %874 = vmatprep.mubr.f32.mxu0 0.0
    %875 = vmatmul.mubr.f32.gmra.mrb[0].mxu0 %v802
    %v876 = vpop.f32.mrb[0].mxu0
    %v877 = vadd.f32 %v83, %v876
    %v878 = vpop.f32.mrb[0].mxu0
    %879 = vmatprep.mubr.f32.mxu0 0.0
    %880 = vmatmul.mubr.f32.gmra.mrb[0].mxu0 %v804
    %v881 = vpop.f32.mrb[0].mxu0
    %v882 = vadd.f32 %v84, %v881
    %v883 = vpop.f32.mrb[0].mxu0
    %884 = vdwg.mxu0
    %v885 = vsel %vm284, %v877, -inf
    %886 = vmax.xlane.f32.xlu0 %v885
    %v887 = vpop.xlane.xlu0 %886
    %v888 = vsel %vm284, %v882, -inf
    %889 = vmax.xlane.f32.xlu0 %v888
    %v890 = vpop.xlane.xlu0 %889
    %v891 = vsub.f32 %v877, %v887
    %v892 = vsub.f32 %v882, %v890
    %v893 = vmul.f32 %v891, 1.442695
    %v894 = vpow.pop %v893
    %v895 = vmul.f32 %v892, 1.442695
    %v896 = vpow.pop %v895
    %v897 = vsel %vm284, %v894, 0.0
    %898 = vadd.xlane.f32.xlu0 %v897
    %v899 = vpop.xlane.xlu0 %898
    %v900 = vsel %vm284, %v896, 0.0
    %901 = vadd.xlane.f32.xlu0 %v900
    %v902 = vpop.xlane.xlu0 %901
    %903 = vrot.lane.b32.xlu0 %v186, 40
    %v904 = vpop.permute.xlu0 %903
    %905 = vrot.lane.b32.xlu0 %v191, 40
    %v906 = vpop.permute.xlu0 %905
    %v910 = vsel %vm284, %v894, 0
    %v913 = vsel %vm284, %v896, 0
    %915 = vmatprep.subr.mxu0 0.0
    %916 = vmatpush1.msra.mxu0 %v904
    %917 = vmatprep.subr.mxu0 0.0
    %918 = vmatpush1.msra.mxu0 %v906
    %919 = vmatprep.subr.mxu0 0.0
    %920 = vmatpush1.msra.mxu0 0.0
    %921 = vmatprep.subr.mxu0 0.0
    %922 = vmatpush1.msra.mxu0 0.0
    %923 = vmatprep.subr.mxu0 0.0
    %924 = vmatpush1.msra.mxu0 0.0
    %925 = vmatprep.subr.mxu0 0.0
    %926 = vmatpush1.msra.mxu0 0.0
    %927 = vmatprep.subr.mxu0 0.0
    %928 = vmatpush1.msra.mxu0 0.0
    %929 = vmatprep.subr.mxu0 0.0
    %930 = vmatpush1.msra.mxu0 0.0
    %931 = vmatprep.subr.mxu0 0.0
    %932 = vmatpush1.msra.mxu0 0.0
    %933 = vmatprep.subr.mxu0 0.0
    %934 = vmatpush1.msra.mxu0 0.0
    %935 = vmatprep.subr.mxu0 0.0
    %936 = vmatpush1.msra.mxu0 0.0
    %937 = vmatprep.subr.mxu0 0.0
    %938 = vmatpush1.msra.mxu0 0.0
    %939 = vmatprep.subr.mxu0 0.0
    %940 = vmatpush1.msra.mxu0 0.0
    %941 = vmatprep.subr.mxu0 0.0
    %942 = vmatpush1.msra.mxu0 0.0
    %943 = vmatprep.subr.mxu0 0.0
    %944 = vmatpush1.msra.mxu0 0.0
    %945 = vmatprep.subr.mxu0 0.0
    %946 = vmatpush1.msra.mxu0 0.0
    %947 = vmatprep.subr.mxu0 0.0
    %948 = vmatpush1.msra.mxu0 0.0
    %949 = vmatprep.subr.mxu0 0.0
    %950 = vmatpush1.msra.mxu0 0.0
    %951 = vmatprep.subr.mxu0 0.0
    %952 = vmatpush1.msra.mxu0 0.0
    %953 = vmatprep.subr.mxu0 0.0
    %954 = vmatpush1.msra.mxu0 0.0
    %955 = vmatprep.subr.mxu0 0.0
    %956 = vmatpush1.msra.mxu0 0.0
    %957 = vmatprep.subr.mxu0 0.0
    %958 = vmatpush1.msra.mxu0 0.0
    %959 = vmatprep.subr.mxu0 0.0
    %960 = vmatpush1.msra.mxu0 0.0
    %961 = vmatprep.subr.mxu0 0.0
    %962 = vmatpush1.msra.mxu0 0.0
    %963 = vmatprep.subr.mxu0 0.0
    %964 = vmatpush1.msra.mxu0 0.0
    %965 = vmatprep.subr.mxu0 0.0
    %966 = vmatpush1.msra.mxu0 0.0
    %967 = vmatprep.subr.mxu0 0.0
    %968 = vmatpush1.msra.mxu0 0.0
    %969 = vmatprep.subr.mxu0 0.0
    %970 = vmatpush1.msra.mxu0 0.0
    %971 = vmatprep.subr.mxu0 0.0
    %972 = vmatpush1.msra.mxu0 0.0
    %973 = vmatprep.subr.mxu0 0.0
    %974 = vmatpush1.msra.mxu0 0.0
    %975 = vmatprep.subr.mxu0 0.0
    %976 = vmatpush1.msra.mxu0 0.0
    %977 = vmatprep.subr.mxu0 0.0
    %978 = vmatpush1.msra.mxu0 0.0
    %979 = vmatprep.mubr.f32.mxu0 0.0
    %980 = vmatmul.mubr.f32.gmra.mrb[0].mxu0 %v910
    %v981 = vpop.f32.mrb[0].mxu0
    %v982 = vadd.f32 0.0, %v981
    %v983 = vpop.f32.mrb[0].mxu0
    %984 = vmatprep.mubr.f32.mxu0 0.0
    %985 = vmatmul.mubr.f32.gmra.mrb[0].mxu0 %v913
    %v986 = vpop.f32.mrb[0].mxu0
    %v987 = vadd.f32 0.0, %v986
    %v988 = vpop.f32.mrb[0].mxu0
    %989 = vdwg.mxu0
    %v990 = vrcp.pop %v899
    %v991 = vrcp.pop %v902
    %v992 = vmul.f32 %v982, %v990
    %v993 = vmul.f32 %v987, %v991
    %996 = vrot.lane.b32.xlu0 %v592, 8
    %v997 = vpop.permute.xlu0 %996
    %998 = vrot.lane.b32.xlu0 %v593, 8
    %v999 = vpop.permute.xlu0 %998
    %1004 = vrot.lane.b32.xlu0 %v792, 16
    %v1005 = vpop.permute.xlu0 %1004
    %1006 = vrot.lane.b32.xlu0 %v793, 16
    %v1007 = vpop.permute.xlu0 %1006
    %1012 = vrot.lane.b32.xlu0 %v992, 24
    %v1013 = vpop.permute.xlu0 %1012
    %1014 = vrot.lane.b32.xlu0 %v993, 24
    %v1015 = vpop.permute.xlu0 %1014
    %v1018 = vsel %vm200, %v392, %v997
    %v1019 = vsel %vm200, %v393, %v999
    %v1020 = vsel %vm284, %v1018, %v1005
    %v1021 = vsel %vm284, %v1019, %v1007
    %vm1022 = vcmask 195584
    %v1023 = vsel %vm1022, %v1020, %v1013
    %v1024 = vsel %vm1022, %v1021, %v1015
    %v1025 = vlaneseq
    %v1026 = vshrl.u32 %v1025, 7
    %v1027 = vsub.s32 1, %v1026
    %v1028 = vrot.slane %v107, %v1027
    %v1030 = vsel %vm112, %v1023, 0
    %v1033 = vsel %vm112, %v1024, 0
    %1035 = vmatprep.subr.mxu0 0.0
    %1036 = vmatpush1.msra.mxu0 %v91
    %1037 = vmatprep.subr.mxu0 0.0
    %1038 = vmatpush1.msra.mxu0 %v92
    %1039 = vmatprep.subr.mxu0 0.0
    %1040 = vmatpush1.msra.mxu0 %v93
    %1041 = vmatprep.subr.mxu0 0.0
    %1042 = vmatpush1.msra.mxu0 %v94
    %1043 = vmatprep.subr.mxu0 0.0
    %1044 = vmatpush1.msra.mxu0 0.0
    %1045 = vmatprep.subr.mxu0 0.0
    %1046 = vmatpush1.msra.mxu0 0.0
    %1047 = vmatprep.subr.mxu0 0.0
    %1048 = vmatpush1.msra.mxu0 0.0
    %1049 = vmatprep.subr.mxu0 0.0
    %1050 = vmatpush1.msra.mxu0 0.0
    %1051 = vmatprep.subr.mxu0 0.0
    %1052 = vmatpush1.msra.mxu0 0.0
    %1053 = vmatprep.subr.mxu0 0.0
    %1054 = vmatpush1.msra.mxu0 0.0
    %1055 = vmatprep.subr.mxu0 0.0
    %1056 = vmatpush1.msra.mxu0 0.0
    %1057 = vmatprep.subr.mxu0 0.0
    %1058 = vmatpush1.msra.mxu0 0.0
    %1059 = vmatprep.subr.mxu0 0.0
    %1060 = vmatpush1.msra.mxu0 0.0
    %1061 = vmatprep.subr.mxu0 0.0
    %1062 = vmatpush1.msra.mxu0 0.0
    %1063 = vmatprep.subr.mxu0 0.0
    %1064 = vmatpush1.msra.mxu0 0.0
    %1065 = vmatprep.subr.mxu0 0.0
    %1066 = vmatpush1.msra.mxu0 0.0
    %1067 = vmatprep.subr.mxu0 0.0
    %1068 = vmatpush1.msra.mxu0 0.0
    %1069 = vmatprep.subr.mxu0 0.0
    %1070 = vmatpush1.msra.mxu0 0.0
    %1071 = vmatprep.subr.mxu0 0.0
    %1072 = vmatpush1.msra.mxu0 0.0
    %1073 = vmatprep.subr.mxu0 0.0
    %1074 = vmatpush1.msra.mxu0 0.0
    %1075 = vmatprep.subr.mxu0 0.0
    %1076 = vmatpush1.msra.mxu0 0.0
    %1077 = vmatprep.subr.mxu0 0.0
    %1078 = vmatpush1.msra.mxu0 0.0
    %1079 = vmatprep.subr.mxu0 0.0
    %1080 = vmatpush1.msra.mxu0 0.0
    %1081 = vmatprep.subr.mxu0 0.0
    %1082 = vmatpush1.msra.mxu0 0.0
    %1083 = vmatprep.subr.mxu0 0.0
    %1084 = vmatpush1.msra.mxu0 0.0
    %1085 = vmatprep.subr.mxu0 0.0
    %1086 = vmatpush1.msra.mxu0 0.0
    %1087 = vmatprep.subr.mxu0 0.0
    %1088 = vmatpush1.msra.mxu0 0.0
    %1089 = vmatprep.subr.mxu0 0.0
    %1090 = vmatpush1.msra.mxu0 0.0
    %1091 = vmatprep.subr.mxu0 0.0
    %1092 = vmatpush1.msra.mxu0 0.0
    %1093 = vmatprep.subr.mxu0 0.0
    %1094 = vmatpush1.msra.mxu0 0.0
    %1095 = vmatprep.subr.mxu0 0.0
    %1096 = vmatpush1.msra.mxu0 0.0
    %1097 = vmatprep.subr.mxu0 0.0
    %1098 = vmatpush1.msra.mxu0 0.0
    %1099 = vmatprep.mubr.f32.mxu0 0.0
    %1100 = vmatmul.mubr.f32.gmra.mrb[0].mxu0 %v1030
    %v1101 = vpop.f32.mrb[0].mxu0
    %v1102 = vadd.f32 %v1028, %v1101
    %v1103 = vpop.f32.mrb[0].mxu0
    %1104 = vmatprep.mubr.f32.mxu0 0.0
    %1105 = vmatmul.mubr.f32.gmra.mrb[0].mxu0 %v1033
    %v1106 = vpop.f32.mrb[0].mxu0
    %v1107 = vadd.f32 %v1028, %v1106
    %v1108 = vpop.f32.mrb[0].mxu0
    %1109 = vdwg.mxu0
    %v1110 = vadd.f32 %v85, %v1102
    %v1111 = vadd.f32 %v86, %v1107
    %v1112 = vsel %vm112, %v1110, 0.0
    %1113 = vadd.xlane.f32.xlu0 %v1112
    %v1114 = vpop.xlane.xlu0 %1113
    %v1115 = vsel %vm112, %v1111, 0.0
    %1116 = vadd.xlane.f32.xlu0 %v1115
    %v1117 = vpop.xlane.xlu0 %1116
    %v1118 = vrcp.pop 32.0
    %v1119 = vmul.f32 %v1114, %v1118
    %v1120 = vmul.f32 %v1117, %v1118
    %v1121 = vsub.f32 %v1110, %v1119
    %v1122 = vsub.f32 %v1111, %v1120
    %v1123 = vmul.f32 %v1121, %v1121
    %v1124 = vmul.f32 %v1122, %v1122
    %v1125 = vsel %vm112, %v1123, 0.0
    %1126 = vadd.xlane.f32.xlu0 %v1125
    %v1127 = vpop.xlane.xlu0 %1126
    %v1128 = vsel %vm112, %v1124, 0.0
    %1129 = vadd.xlane.f32.xlu0 %v1128
    %v1130 = vpop.xlane.xlu0 %1129
    %v1131 = vmul.f32 %v1127, %v1118
    %v1132 = vmul.f32 %v1130, %v1118
    %v1133 = vadd.f32 %v1131, 1e-05
    %v1134 = vadd.f32 %v1132, 1e-05
    %v1135 = vrsqrt.pop %v1133
    %v1136 = vrsqrt.pop %v1134
    %v1137 = vmul.f32 %v1121, %v1135
    %v1138 = vmul.f32 %v1122, %v1136
    %v1139 = vlaneseq
    %v1140 = vshrl.u32 %v1139, 7
    %v1141 = vsub.s32 2, %v1140
    %v1142 = vrot.slane %v107, %v1141
    %v1143 = vmul.f32 %v1137, %v1142
    %v1144 = vmul.f32 %v1138, %v1142
    %v1145 = vlaneseq
    %v1146 = vshrl.u32 %v1145, 7
    %v1147 = vsub.s32 3, %v1146
    %v1148 = vrot.slane %v107, %v1147
    %v1149 = vadd.f32 %v1143, %v1148
    %v1150 = vadd.f32 %v1144, %v1148
    %v1151 = vlaneseq
    %v1152 = vshrl.u32 %v1151, 7
    %v1153 = vsub.s32 4, %v1152
    %v1154 = vrot.slane %v107, %v1153
    %v1156 = vsel %vm112, %v1149, 0
    %v1159 = vsel %vm112, %v1150, 0
    %1161 = vmatprep.subr.mxu0 0.0
    %1162 = vmatpush1.msra.mxu0 %v95
    %1163 = vmatprep.subr.mxu0 0.0
    %1164 = vmatpush1.msra.mxu0 %v96
    %1165 = vmatprep.subr.mxu0 0.0
    %1166 = vmatpush1.msra.mxu0 %v97
    %1167 = vmatprep.subr.mxu0 0.0
    %1168 = vmatpush1.msra.mxu0 %v98
    %1169 = vmatprep.subr.mxu0 0.0
    %1170 = vmatpush1.msra.mxu0 0.0
    %1171 = vmatprep.subr.mxu0 0.0
    %1172 = vmatpush1.msra.mxu0 0.0
    %1173 = vmatprep.subr.mxu0 0.0
    %1174 = vmatpush1.msra.mxu0 0.0
    %1175 = vmatprep.subr.mxu0 0.0
    %1176 = vmatpush1.msra.mxu0 0.0
    %1177 = vmatprep.subr.mxu0 0.0
    %1178 = vmatpush1.msra.mxu0 0.0
    %1179 = vmatprep.subr.mxu0 0.0
    %1180 = vmatpush1.msra.mxu0 0.0
    %1181 = vmatprep.subr.mxu0 0.0
    %1182 = vmatpush1.msra.mxu0 0.0
    %1183 = vmatprep.subr.mxu0 0.0
    %1184 = vmatpush1.msra.mxu0 0.0
    %1185 = vmatprep.subr.mxu0 0.0
    %1186 = vmatpush1.msra.mxu0 0.0
    %1187 = vmatprep.subr.mxu0 0.0
    %1188 = vmatpush1.msra.mxu0 0.0
    %1189 = vmatprep.subr.mxu0 0.0
    %1190 = vmatpush1.msra.mxu0 0.0
    %1191 = vmatprep.subr.mxu0 0.0
    %1192 = vmatpush1.msra.mxu0 0.0
    %1193 = vmatprep.subr.mxu0 0.0
    %1194 = vmatpush1.msra.mxu0 0.0
    %1195 = vmatprep.subr.mxu0 0.0
    %1196 = vmatpush1.msra.mxu0 0.0
    %1197 = vmatprep.subr.mxu0 0.0
    %1198 = vmatpush1.msra.mxu0 0.0
    %1199 = vmatprep.subr.mxu0 0.0
    %1200 = vmatpush1.msra.mxu0 0.0
    %1201 = vmatprep.subr.mxu0 0.0
    %1202 = vmatpush1.msra.mxu0 0.0
    %1203 = vmatprep.subr.mxu0 0.0
    %1204 = vmatpush1.msra.mxu0 0.0
    %1205 = vmatprep.subr.mxu0 0.0
    %1206 = vmatpush1.msra.mxu0 0.0
    %1207 = vmatprep.subr.mxu0 0.0
    %1208 = vmatpush1.msra.mxu0 0.0
    %1209 = vmatprep.subr.mxu0 0.0
    %1210 = vmatpush1.msra.mxu0 0.0
    %1211 = vmatprep.subr.mxu0 0.0
    %1212 = vmatpush1.msra.mxu0 0.0
    %1213 = vmatprep.subr.mxu0 0.0
    %1214 = vmatpush1.msra.mxu0 0.0
    %1215 = vmatprep.subr.mxu0 0.0
    %1216 = vmatpush1.msra.mxu0 0.0
    %1217 = vmatprep.subr.mxu0 0.0
    %1218 = vmatpush1.msra.mxu0 0.0
    %1219 = vmatprep.subr.mxu0 0.0
    %1220 = vmatpush1.msra.mxu0 0.0
    %1221 = vmatprep.subr.mxu0 0.0
    %1222 = vmatpush1.msra.mxu0 0.0
    %1223 = vmatprep.subr.mxu0 0.0
    %1224 = vmatpush1.msra.mxu0 0.0
    %1225 = vmatprep.mubr.f32.mxu0 0.0
    %1226 = vmatmul.mubr.f32.gmra.mrb[0].mxu0 %v1156
    %v1227 = vpop.f32.mrb[0].mxu0
    %v1228 = vadd.f32 %v1154, %v1227
    %v1229 = vpop.f32.mrb[0].mxu0
    %1230 = vmatprep.mubr.f32.mxu0 0.0
    %1231 = vmatmul.mubr.f32.gmra.mrb[0].mxu0 %v1159
    %v1232 = vpop.f32.mrb[0].mxu0
    %v1233 = vadd.f32 %v1154, %v1232
    %v1234 = vpop.f32.mrb[0].mxu0
    %1235 = vdwg.mxu0
    %v1236 = vmax.f32 %v1228, 0.0
    %v1237 = vmax.f32 %v1233, 0.0
    %v1238 = vlaneseq
    %v1239 = vshrl.u32 %v1238, 7
    %v1240 = vsub.s32 5, %v1239
    %v1241 = vrot.slane %v107, %v1240
    %vm1242 = vcmask 523264
    %v1244 = vsel %vm1242, %v1236, 0
    %v1247 = vsel %vm1242, %v1237, 0
    %1249 = vmatprep.subr.mxu0 0.0
    %1250 = vmatpush1.msra.mxu0 %v99
    %1251 = vmatprep.subr.mxu0 0.0
    %1252 = vmatpush1.msra.mxu0 %v100
    %1253 = vmatprep.subr.mxu0 0.0
    %1254 = vmatpush1.msra.mxu0 %v101
    %1255 = vmatprep.subr.mxu0 0.0
    %1256 = vmatpush1.msra.mxu0 %v102
    %1257 = vmatprep.subr.mxu0 0.0
    %1258 = vmatpush1.msra.mxu0 %v103
    %1259 = vmatprep.subr.mxu0 0.0
    %1260 = vmatpush1.msra.mxu0 %v104
    %1261 = vmatprep.subr.mxu0 0.0
    %1262 = vmatpush1.msra.mxu0 %v105
    %1263 = vmatprep.subr.mxu0 0.0
    %1264 = vmatpush1.msra.mxu0 %v106
    %1265 = vmatprep.subr.mxu0 0.0
    %1266 = vmatpush1.msra.mxu0 0.0
    %1267 = vmatprep.subr.mxu0 0.0
    %1268 = vmatpush1.msra.mxu0 0.0
    %1269 = vmatprep.subr.mxu0 0.0
    %1270 = vmatpush1.msra.mxu0 0.0
    %1271 = vmatprep.subr.mxu0 0.0
    %1272 = vmatpush1.msra.mxu0 0.0
    %1273 = vmatprep.subr.mxu0 0.0
    %1274 = vmatpush1.msra.mxu0 0.0
    %1275 = vmatprep.subr.mxu0 0.0
    %1276 = vmatpush1.msra.mxu0 0.0
    %1277 = vmatprep.subr.mxu0 0.0
    %1278 = vmatpush1.msra.mxu0 0.0
    %1279 = vmatprep.subr.mxu0 0.0
    %1280 = vmatpush1.msra.mxu0 0.0
    %1281 = vmatprep.subr.mxu0 0.0
    %1282 = vmatpush1.msra.mxu0 0.0
    %1283 = vmatprep.subr.mxu0 0.0
    %1284 = vmatpush1.msra.mxu0 0.0
    %1285 = vmatprep.subr.mxu0 0.0
    %1286 = vmatpush1.msra.mxu0 0.0
    %1287 = vmatprep.subr.mxu0 0.0
    %1288 = vmatpush1.msra.mxu0 0.0
    %1289 = vmatprep.subr.mxu0 0.0
    %1290 = vmatpush1.msra.mxu0 0.0
    %1291 = vmatprep.subr.mxu0 0.0
    %1292 = vmatpush1.msra.mxu0 0.0
    %1293 = vmatprep.subr.mxu0 0.0
    %1294 = vmatpush1.msra.mxu0 0.0
    %1295 = vmatprep.subr.mxu0 0.0
    %1296 = vmatpush1.msra.mxu0 0.0
    %1297 = vmatprep.subr.mxu0 0.0
    %1298 = vmatpush1.msra.mxu0 0.0
    %1299 = vmatprep.subr.mxu0 0.0
    %1300 = vmatpush1.msra.mxu0 0.0
    %1301 = vmatprep.subr.mxu0 0.0
    %1302 = vmatpush1.msra.mxu0 0.0
    %1303 = vmatprep.subr.mxu0 0.0
    %1304 = vmatpush1.msra.mxu0 0.0
    %1305 = vmatprep.subr.mxu0 0.0
    %1306 = vmatpush1.msra.mxu0 0.0
    %1307 = vmatprep.subr.mxu0 0.0
    %1308 = vmatpush1.msra.mxu0 0.0
    %1309 = vmatprep.subr.mxu0 0.0
    %1310 = vmatpush1.msra.mxu0 0.0
    %1311 = vmatprep.subr.mxu0 0.0
    %1312 = vmatpush1.msra.mxu0 0.0
    %1313 = vmatprep.mubr.f32.mxu0 0.0
    %1314 = vmatmul.mubr.f32.gmra.mrb[0].mxu0 %v1244
    %v1315 = vpop.f32.mrb[0].mxu0
    %v1316 = vadd.f32 %v1241, %v1315
    %v1317 = vpop.f32.mrb[0].mxu0
    %1318 = vmatprep.mubr.f32.mxu0 0.0
    %1319 = vmatmul.mubr.f32.gmra.mrb[0].mxu0 %v1247
    %v1320 = vpop.f32.mrb[0].mxu0
    %v1321 = vadd.f32 %v1241, %v1320
    %v1322 = vpop.f32.mrb[0].mxu0
    %1323 = vdwg.mxu0
    %v1324 = vadd.f32 %v1149, %v1316
    %v1325 = vadd.f32 %v1150, %v1321
    %v1326 = vsel %vm112, %v1324, 0.0
    %1327 = vadd.xlane.f32.xlu0 %v1326
    %v1328 = vpop.xlane.xlu0 %1327
    %v1329 = vsel %vm112, %v1325, 0.0
    %1330 = vadd.xlane.f32.xlu0 %v1329
    %v1331 = vpop.xlane.xlu0 %1330
    %v1332 = vmul.f32 %v1328, %v1118
    %v1333 = vmul.f32 %v1331, %v1118
    %v1334 = vsub.f32 %v1324, %v1332
    %v1335 = vsub.f32 %v1325, %v1333
    %v1336 = vmul.f32 %v1334, %v1334
    %v1337 = vmul.f32 %v1335, %v1335
    %v1338 = vsel %vm112, %v1336, 0.0
    %1339 = vadd.xlane.f32.xlu0 %v1338
    %v1340 = vpop.xlane.xlu0 %1339
    %v1341 = vsel %vm112, %v1337, 0.0
    %1342 = vadd.xlane.f32.xlu0 %v1341
    %v1343 = vpop.xlane.xlu0 %1342
    %v1344 = vmul.f32 %v1340, %v1118
    %v1345 = vmul.f32 %v1343, %v1118
    %v1346 = vadd.f32 %v1344, 1e-05
    %v1347 = vadd.f32 %v1345, 1e-05
    %v1348 = vrsqrt.pop %v1346
    %v1349 = vrsqrt.pop %v1347
    %v1350 = vmul.f32 %v1334, %v1348
    %v1351 = vmul.f32 %v1335, %v1349
    %v1352 = vlaneseq
    %v1353 = vshrl.u32 %v1352, 7
    %v1354 = vsub.s32 6, %v1353
    %v1355 = vrot.slane %v107, %v1354
    %v1356 = vmul.f32 %v1350, %v1355
    %v1357 = vmul.f32 %v1351, %v1355
    %v1358 = vlaneseq
    %v1359 = vshrl.u32 %v1358, 7
    %v1360 = vsub.s32 7, %v1359
    %v1361 = vrot.slane %v107, %v1360
    %v1362 = vadd.f32 %v1356, %v1361
    %v1363 = vadd.f32 %v1357, %v1361
    %v1364 = vld [vmem:[#allocation5 + $0xa8] sm:$0xff]
    %v1365 = vld [vmem:[#allocation5 + $0xb0] sm:$0xff]
    %v1366 = vld [vmem:[#allocation5 + $0xb8] sm:$0xff]
    %v1367 = vld [vmem:[#allocation5 + $0xc0] sm:$0xff]
    %v1368 = vld [vmem:[#allocation5 + $0xc8] sm:$0xff]
    %v1369 = vld [vmem:[#allocation5 + $0xd0] sm:$0xff]
    %v1370 = vld [vmem:[#allocation5 + $0xd8] sm:$0xff]
    %v1371 = vld [vmem:[#allocation5 + $0xe0] sm:$0xff]
    %v1372 = vld [vmem:[#allocation5 + $0xe8] sm:$0xff]
    %v1373 = vld [vmem:[#allocation5 + $0xf0] sm:$0xff]
    %v1374 = vld [vmem:[#allocation5 + $0xf8] sm:$0xff]
    %v1375 = vld [vmem:[#allocation5 + $0x100] sm:$0xff]
    %v1376 = vld [vmem:[#allocation5 + $0x108] sm:$0xff]
    %v1377 = vld [vmem:[#allocation5 + $0x110] sm:$0xff]
    %v1378 = vld [vmem:[#allocation5 + $0x118] sm:$0xff]
    %v1379 = vld [vmem:[#allocation5 + $0x120] sm:$0xff]
    %v1380 = vld [vmem:[#allocation5 + $0x128] sm:$0xff]
    %v1381 = vld [vmem:[#allocation5 + $0x130] sm:$0xff]
    %v1382 = vld [vmem:[#allocation5 + $0x138] sm:$0xff]
    %v1383 = vld [vmem:[#allocation5 + $0x140] sm:$0xff]
    %v1384 = vld [vmem:[#allocation5 + $0x148] sm:$0xff]
    %v1385 = vlaneseq
    %v1386 = vshrl.u32 %v1385, 7
    %v1387 = vsub.s32 0, %v1386
    %v1388 = vrot.slane %v1384, %v1387
    %v1390 = vsel %vm112, %v1362, 0
    %v1393 = vsel %vm112, %v1363, 0
    %1395 = vmatprep.subr.mxu0 0.0
    %1396 = vmatpush1.msra.mxu0 %v1364
    %1397 = vmatprep.subr.mxu0 0.0
    %1398 = vmatpush1.msra.mxu0 %v1365
    %1399 = vmatprep.subr.mxu0 0.0
    %1400 = vmatpush1.msra.mxu0 %v1366
    %1401 = vmatprep.subr.mxu0 0.0
    %1402 = vmatpush1.msra.mxu0 %v1367
    %1403 = vmatprep.subr.mxu0 0.0
    %1404 = vmatpush1.msra.mxu0 0.0
    %1405 = vmatprep.subr.mxu0 0.0
    %1406 = vmatpush1.msra.mxu0 0.0
    %1407 = vmatprep.subr.mxu0 0.0
    %1408 = vmatpush1.msra.mxu0 0.0
    %1409 = vmatprep.subr.mxu0 0.0
    %1410 = vmatpush1.msra.mxu0 0.0
    %1411 = vmatprep.subr.mxu0 0.0
    %1412 = vmatpush1.msra.mxu0 0.0
    %1413 = vmatprep.subr.mxu0 0.0
    %1414 = vmatpush1.msra.mxu0 0.0
    %1415 = vmatprep.subr.mxu0 0.0
    %1416 = vmatpush1.msra.mxu0 0.0
    %1417 = vmatprep.subr.mxu0 0.0
    %1418 = vmatpush1.msra.mxu0 0.0
    %1419 = vmatprep.subr.mxu0 0.0
    %1420 = vmatpush1.msra.mxu0 0.0
    %1421 = vmatprep.subr.mxu0 0.0
    %1422 = vmatpush1.msra.mxu0 0.0
    %1423 = vmatprep.subr.mxu0 0.0
    %1424 = vmatpush1.msra.mxu0 0.0
    %1425 = vmatprep.subr.mxu0 0.0
    %1426 = vmatpush1.msra.mxu0 0.0
    %1427 = vmatprep.subr.mxu0 0.0
    %1428 = vmatpush1.msra.mxu0 0.0
    %1429 = vmatprep.subr.mxu0 0.0
    %1430 = vmatpush1.msra.mxu0 0.0
    %1431 = vmatprep.subr.mxu0 0.0
    %1432 = vmatpush1.msra.mxu0 0.0
    %1433 = vmatprep.subr.mxu0 0.0
    %1434 = vmatpush1.msra.mxu0 0.0
    %1435 = vmatprep.subr.mxu0 0.0
    %1436 = vmatpush1.msra.mxu0 0.0
    %1437 = vmatprep.subr.mxu0 0.0
    %1438 = vmatpush1.msra.mxu0 0.0
    %1439 = vmatprep.subr.mxu0 0.0
    %1440 = vmatpush1.msra.mxu0 0.0
    %1441 = vmatprep.subr.mxu0 0.0
    %1442 = vmatpush1.msra.mxu0 0.0
    %1443 = vmatprep.subr.mxu0 0.0
    %1444 = vmatpush1.msra.mxu0 0.0
    %1445 = vmatprep.subr.mxu0 0.0
    %1446 = vmatpush1.msra.mxu0 0.0
    %1447 = vmatprep.subr.mxu0 0.0
    %1448 = vmatpush1.msra.mxu0 0.0
    %1449 = vmatprep.subr.mxu0 0.0
    %1450 = vmatpush1.msra.mxu0 0.0
    %1451 = vmatprep.subr.mxu0 0.0
    %1452 = vmatpush1.msra.mxu0 0.0
    %1453 = vmatprep.subr.mxu0 0.0
    %1454 = vmatpush1.msra.mxu0 0.0
    %1455 = vmatprep.subr.mxu0 0.0
    %1456 = vmatpush1.msra.mxu0 0.0
    %1457 = vmatprep.subr.mxu0 0.0
    %1458 = vmatpush1.msra.mxu0 0.0
    %1459 = vmatprep.mubr.f32.mxu0 0.0
    %1460 = vmatmul.mubr.f32.gmra.mrb[0].mxu0 %v1390
    %v1461 = vpop.f32.mrb[0].mxu0
    %v1462 = vadd.f32 %v1388, %v1461
    %v1463 = vpop.f32.mrb[0].mxu0
    %1464 = vmatprep.mubr.f32.mxu0 0.0
    %1465 = vmatmul.mubr.f32.gmra.mrb[0].mxu0 %v1393
    %v1466 = vpop.f32.mrb[0].mxu0
    %v1467 = vadd.f32 %v1388, %v1466
    %v1468 = vpop.f32.mrb[0].mxu0
    %1469 = vdwg.mxu0
    %1472 = vrot.lane.b32.xlu0 %v1462, 96
    %v1473 = vpop.permute.xlu0 %1472
    %1474 = vrot.lane.b32.xlu0 %v1467, 96
    %v1475 = vpop.permute.xlu0 %1474
    %v1476 = vsel %vm200, %v1462, 0
    %v1478 = vsel %vm200, %v1467, 0
    %v1480 = vsel %vm200, %v1473, 0
    %v1482 = vsel %vm200, %v1475, 0
    %1484 = vmatprep.subr.mxu0 0.0
    %1485 = vmatpush1.xpose.msra.mxu0 %v1480
    %1486 = vmatprep.subr.mxu0 0.0
    %1487 = vmatpush1.xpose.msra.mxu0 %v1482
    %1488 = vmatprep.subr.mxu0 0.0
    %1489 = vmatpush1.xpose.msra.mxu0 0.0
    %1490 = vmatprep.subr.mxu0 0.0
    %1491 = vmatpush1.xpose.msra.mxu0 0.0
    %1492 = vmatprep.subr.mxu0 0.0
    %1493 = vmatpush1.xpose.msra.mxu0 0.0
    %1494 = vmatprep.subr.mxu0 0.0
    %1495 = vmatpush1.xpose.msra.mxu0 0.0
    %1496 = vmatprep.subr.mxu0 0.0
    %1497 = vmatpush1.xpose.msra.mxu0 0.0
    %1498 = vmatprep.subr.mxu0 0.0
    %1499 = vmatpush1.xpose.msra.mxu0 0.0
    %1500 = vmatprep.subr.mxu0 0.0
    %1501 = vmatpush1.xpose.msra.mxu0 0.0
    %1502 = vmatprep.subr.mxu0 0.0
    %1503 = vmatpush1.xpose.msra.mxu0 0.0
    %1504 = vmatprep.subr.mxu0 0.0
    %1505 = vmatpush1.xpose.msra.mxu0 0.0
    %1506 = vmatprep.subr.mxu0 0.0
    %1507 = vmatpush1.xpose.msra.mxu0 0.0
    %1508 = vmatprep.subr.mxu0 0.0
    %1509 = vmatpush1.xpose.msra.mxu0 0.0
    %1510 = vmatprep.subr.mxu0 0.0
    %1511 = vmatpush1.xpose.msra.mxu0 0.0
    %1512 = vmatprep.subr.mxu0 0.0
    %1513 = vmatpush1.xpose.msra.mxu0 0.0
    %1514 = vmatprep.subr.mxu0 0.0
    %1515 = vmatpush1.xpose.msra.mxu0 0.0
    %1516 = vmatprep.subr.mxu0 0.0
    %1517 = vmatpush1.xpose.msra.mxu0 0.0
    %1518 = vmatprep.subr.mxu0 0.0
    %1519 = vmatpush1.xpose.msra.mxu0 0.0
    %1520 = vmatprep.subr.mxu0 0.0
    %1521 = vmatpush1.xpose.msra.mxu0 0.0
    %1522 = vmatprep.subr.mxu0 0.0
    %1523 = vmatpush1.xpose.msra.mxu0 0.0
    %1524 = vmatprep.subr.mxu0 0.0
    %1525 = vmatpush1.xpose.msra.mxu0 0.0
    %1526 = vmatprep.subr.mxu0 0.0
    %1527 = vmatpush1.xpose.msra.mxu0 0.0
    %1528 = vmatprep.subr.mxu0 0.0
    %1529 = vmatpush1.xpose.msra.mxu0 0.0
    %1530 = vmatprep.subr.mxu0 0.0
    %1531 = vmatpush1.xpose.msra.mxu0 0.0
    %1532 = vmatprep.subr.mxu0 0.0
    %1533 = vmatpush1.xpose.msra.mxu0 0.0
    %1534 = vmatprep.subr.mxu0 0.0
    %1535 = vmatpush1.xpose.msra.mxu0 0.0
    %1536 = vmatprep.subr.mxu0 0.0
    %1537 = vmatpush1.xpose.msra.mxu0 0.0
    %1538 = vmatprep.subr.mxu0 0.0
    %1539 = vmatpush1.xpose.msra.mxu0 0.0
    %1540 = vmatprep.subr.mxu0 0.0
    %1541 = vmatpush1.xpose.msra.mxu0 0.0
    %1542 = vmatprep.subr.mxu0 0.0
    %1543 = vmatpush1.xpose.msra.mxu0 0.0
    %1544 = vmatprep.subr.mxu0 0.0
    %1545 = vmatpush1.xpose.msra.mxu0 0.0
    %1546 = vmatprep.subr.mxu0 0.0
    %1547 = vmatpush1.xpose.msra.mxu0 0.0
    %1548 = vmatprep.mubr.f32.mxu0 0.0
    %1549 = vmatmul.mubr.f32.gmra.mrb[0].mxu0 %v1476
    %v1550 = vpop.f32.mrb[0].mxu0
    %v1551 = vadd.f32 %v83, %v1550
    %v1552 = vpop.f32.mrb[0].mxu0
    %1553 = vmatprep.mubr.f32.mxu0 0.0
    %1554 = vmatmul.mubr.f32.gmra.mrb[0].mxu0 %v1478
    %v1555 = vpop.f32.mrb[0].mxu0
    %v1556 = vadd.f32 %v84, %v1555
    %v1557 = vpop.f32.mrb[0].mxu0
    %1558 = vdwg.mxu0
    %v1559 = vsel %vm284, %v1551, -inf
    %1560 = vmax.xlane.f32.xlu0 %v1559
    %v1561 = vpop.xlane.xlu0 %1560
    %v1562 = vsel %vm284, %v1556, -inf
    %1563 = vmax.xlane.f32.xlu0 %v1562
    %v1564 = vpop.xlane.xlu0 %1563
    %v1565 = vsub.f32 %v1551, %v1561
    %v1566 = vsub.f32 %v1556, %v1564
    %v1567 = vmul.f32 %v1565, 1.442695
    %v1568 = vpow.pop %v1567
    %v1569 = vmul.f32 %v1566, 1.442695
    %v1570 = vpow.pop %v1569
    %v1571 = vsel %vm284, %v1568, 0.0
    %1572 = vadd.xlane.f32.xlu0 %v1571
    %v1573 = vpop.xlane.xlu0 %1572
    %v1574 = vsel %vm284, %v1570, 0.0
    %1575 = vadd.xlane.f32.xlu0 %v1574
    %v1576 = vpop.xlane.xlu0 %1575
    %1577 = vrot.lane.b32.xlu0 %v1462, 64
    %v1578 = vpop.permute.xlu0 %1577
    %1579 = vrot.lane.b32.xlu0 %v1467, 64
    %v1580 = vpop.permute.xlu0 %1579
    %v1584 = vsel %vm284, %v1568, 0
    %v1587 = vsel %vm284, %v1570, 0
    %1589 = vmatprep.subr.mxu0 0.0
    %1590 = vmatpush1.msra.mxu0 %v1578
    %1591 = vmatprep.subr.mxu0 0.0
    %1592 = vmatpush1.msra.mxu0 %v1580
    %1593 = vmatprep.subr.mxu0 0.0
    %1594 = vmatpush1.msra.mxu0 0.0
    %1595 = vmatprep.subr.mxu0 0.0
    %1596 = vmatpush1.msra.mxu0 0.0
    %1597 = vmatprep.subr.mxu0 0.0
    %1598 = vmatpush1.msra.mxu0 0.0
    %1599 = vmatprep.subr.mxu0 0.0
    %1600 = vmatpush1.msra.mxu0 0.0
    %1601 = vmatprep.subr.mxu0 0.0
    %1602 = vmatpush1.msra.mxu0 0.0
    %1603 = vmatprep.subr.mxu0 0.0
    %1604 = vmatpush1.msra.mxu0 0.0
    %1605 = vmatprep.subr.mxu0 0.0
    %1606 = vmatpush1.msra.mxu0 0.0
    %1607 = vmatprep.subr.mxu0 0.0
    %1608 = vmatpush1.msra.mxu0 0.0
    %1609 = vmatprep.subr.mxu0 0.0
    %1610 = vmatpush1.msra.mxu0 0.0
    %1611 = vmatprep.subr.mxu0 0.0
    %1612 = vmatpush1.msra.mxu0 0.0
    %1613 = vmatprep.subr.mxu0 0.0
    %1614 = vmatpush1.msra.mxu0 0.0
    %1615 = vmatprep.subr.mxu0 0.0
    %1616 = vmatpush1.msra.mxu0 0.0
    %1617 = vmatprep.subr.mxu0 0.0
    %1618 = vmatpush1.msra.mxu0 0.0
    %1619 = vmatprep.subr.mxu0 0.0
    %1620 = vmatpush1.msra.mxu0 0.0
    %1621 = vmatprep.subr.mxu0 0.0
    %1622 = vmatpush1.msra.mxu0 0.0
    %1623 = vmatprep.subr.mxu0 0.0
    %1624 = vmatpush1.msra.mxu0 0.0
    %1625 = vmatprep.subr.mxu0 0.0
    %1626 = vmatpush1.msra.mxu0 0.0
    %1627 = vmatprep.subr.mxu0 0.0
    %1628 = vmatpush1.msra.mxu0 0.0
    %1629 = vmatprep.subr.mxu0 0.0
    %1630 = vmatpush1.msra.mxu0 0.0
    %1631 = vmatprep.subr.mxu0 0.0
    %1632 = vmatpush1.msra.mxu0 0.0
    %1633 = vmatprep.subr.mxu0 0.0
    %1634 = vmatpush1.msra.mxu0 0.0
    %1635 = vmatprep.subr.mxu0 0.0
    %1636 = vmatpush1.msra.mxu0 0.0
    %1637 = vmatprep.subr.mxu0 0.0
    %1638 = vmatpush1.msra.mxu0 0.0
    %1639 = vmatprep.subr.mxu0 0.0
    %1640 = vmatpush1.msra.mxu0 0.0
    %1641 = vmatprep.subr.mxu0 0.0
    %1642 = vmatpush1.msra.mxu0 0.0
    %1643 = vmatprep.subr.mxu0 0.0
    %1644 = vmatpush1.msra.mxu0 0.0
    %1645 = vmatprep.subr.mxu0 0.0
    %1646 = vmatpush1.msra.mxu0 0.0
    %1647 = vmatprep.subr.mxu0 0.0
    %1648 = vmatpush1.msra.mxu0 0.0
    %1649 = vmatprep.subr.mxu0 0.0
    %1650 = vmatpush1.msra.mxu0 0.0
    %1651 = vmatprep.subr.mxu0 0.0
    %1652 = vmatpush1.msra.mxu0 0.0
    %1653 = vmatprep.mubr.f32.mxu0 0.0
    %1654 = vmatmul.mubr.f32.gmra.mrb[0].mxu0 %v1584
    %v1655 = vpop.f32.mrb[0].mxu0
    %v1656 = vadd.f32 0.0, %v1655
    %v1657 = vpop.f32.mrb[0].mxu0
    %1658 = vmatprep.mubr.f32.mxu0 0.0
    %1659 = vmatmul.mubr.f32.gmra.mrb[0].mxu0 %v1587
    %v1660 = vpop.f32.mrb[0].mxu0
    %v1661 = vadd.f32 0.0, %v1660
    %v1662 = vpop.f32.mrb[0].mxu0
    %1663 = vdwg.mxu0
    %v1664 = vrcp.pop %v1573
    %v1665 = vrcp.pop %v1576
    %v1666 = vmul.f32 %v1656, %v1664
    %v1667 = vmul.f32 %v1661, %v1665
    %1668 = vrot.lane.b32.xlu0 %v1462, 120
    %v1669 = vpop.permute.xlu0 %1668
    %1670 = vrot.lane.b32.xlu0 %v1467, 120
    %v1671 = vpop.permute.xlu0 %1670
    %1672 = vrot.lane.b32.xlu0 %v1462, 88
    %v1673 = vpop.permute.xlu0 %1672
    %1674 = vrot.lane.b32.xlu0 %v1467, 88
    %v1675 = vpop.permute.xlu0 %1674
    %v1676 = vsel %vm200, %v1669, 0
    %v1678 = vsel %vm200, %v1671, 0
    %v1680 = vsel %vm200, %v1673, 0
    %v1682 = vsel %vm200, %v1675, 0
    %1684 = vmatprep.subr.mxu0 0.0
    %1685 = vmatpush1.xpose.msra.mxu0 %v1680
    %1686 = vmatprep.subr.mxu0 0.0
    %1687 = vmatpush1.xpose.msra.mxu0 %v1682
    %1688 = vmatprep.subr.mxu0 0.0
    %1689 = vmatpush1.xpose.msra.mxu0 0.0
    %1690 = vmatprep.subr.mxu0 0.0
    %1691 = vmatpush1.xpose.msra.mxu0 0.0
    %1692 = vmatprep.subr.mxu0 0.0
    %1693 = vmatpush1.xpose.msra.mxu0 0.0
    %1694 = vmatprep.subr.mxu0 0.0
    %1695 = vmatpush1.xpose.msra.mxu0 0.0
    %1696 = vmatprep.subr.mxu0 0.0
    %1697 = vmatpush1.xpose.msra.mxu0 0.0
    %1698 = vmatprep.subr.mxu0 0.0
    %1699 = vmatpush1.xpose.msra.mxu0 0.0
    %1700 = vmatprep.subr.mxu0 0.0
    %1701 = vmatpush1.xpose.msra.mxu0 0.0
    %1702 = vmatprep.subr.mxu0 0.0
    %1703 = vmatpush1.xpose.msra.mxu0 0.0
    %1704 = vmatprep.subr.mxu0 0.0
    %1705 = vmatpush1.xpose.msra.mxu0 0.0
    %1706 = vmatprep.subr.mxu0 0.0
    %1707 = vmatpush1.xpose.msra.mxu0 0.0
    %1708 = vmatprep.subr.mxu0 0.0
    %1709 = vmatpush1.xpose.msra.mxu0 0.0
    %1710 = vmatprep.subr.mxu0 0.0
    %1711 = vmatpush1.xpose.msra.mxu0 0.0
    %1712 = vmatprep.subr.mxu0 0.0
    %1713 = vmatpush1.xpose.msra.mxu0 0.0
    %1714 = vmatprep.subr.mxu0 0.0
    %1715 = vmatpush1.xpose.msra.mxu0 0.0
    %1716 = vmatprep.subr.mxu0 0.0
    %1717 = vmatpush1.xpose.msra.mxu0 0.0
    %1718 = vmatprep.subr.mxu0 0.0
    %1719 = vmatpush1.xpose.msra.mxu0 0.0
    %1720 = vmatprep.subr.mxu0 0.0
    %1721 = vmatpush1.xpose.msra.mxu0 0.0
    %1722 = vmatprep.subr.mxu0 0.0
    %1723 = vmatpush1.xpose.msra.mxu0 0.0
    %1724 = vmatprep.subr.mxu0 0.0
    %1725 = vmatpush1.xpose.msra.mxu0 0.0
    %1726 = vmatprep.subr.mxu0 0.0
    %1727 = vmatpush1.xpose.msra.mxu0 0.0
    %1728 = vmatprep.subr.mxu0 0.0
    %1729 = vmatpush1.xpose.msra.mxu0 0.0
    %1730 = vmatprep.subr.mxu0 0.0
    %1731 = vmatpush1.xpose.msra.mxu0 0.0
    %1732 = vmatprep.subr.mxu0 0.0
    %1733 = vmatpush1.xpose.msra.mxu0 0.0
    %1734 = vmatprep.subr.mxu0 0.0
    %1735 = vmatpush1.xpose.msra.mxu0 0.0
    %1736 = vmatprep.subr.mxu0 0.0
    %1737 = vmatpush1.xpose.msra.mxu0 0.0
    %1738 = vmatprep.subr.mxu0 0.0
    %1739 = vmatpush1.xpose.msra.mxu0 0.0
    %1740 = vmatprep.subr.mxu0 0.0
    %1741 = vmatpush1.xpose.msra.mxu0 0.0
    %1742 = vmatprep.subr.mxu0 0.0
    %1743 = vmatpush1.xpose.msra.mxu0 0.0
    %1744 = vmatprep.subr.mxu0 0.0
    %1745 = vmatpush1.xpose.msra.mxu0 0.0
    %1746 = vmatprep.subr.mxu0 0.0
    %1747 = vmatpush1.xpose.msra.mxu0 0.0
    %1748 = vmatprep.mubr.f32.mxu0 0.0
    %1749 = vmatmul.mubr.f32.gmra.mrb[0].mxu0 %v1676
    %v1750 = vpop.f32.mrb[0].mxu0
    %v1751 = vadd.f32 %v83, %v1750
    %v1752 = vpop.f32.mrb[0].mxu0
    %1753 = vmatprep.mubr.f32.mxu0 0.0
    %1754 = vmatmul.mubr.f32.gmra.mrb[0].mxu0 %v1678
    %v1755 = vpop.f32.mrb[0].mxu0
    %v1756 = vadd.f32 %v84, %v1755
    %v1757 = vpop.f32.mrb[0].mxu0
    %1758 = vdwg.mxu0
    %v1759 = vsel %vm284, %v1751, -inf
    %1760 = vmax.xlane.f32.xlu0 %v1759
    %v1761 = vpop.xlane.xlu0 %1760
    %v1762 = vsel %vm284, %v1756, -inf
    %1763 = vmax.xlane.f32.xlu0 %v1762
    %v1764 = vpop.xlane.xlu0 %1763
    %v1765 = vsub.f32 %v1751, %v1761
    %v1766 = vsub.f32 %v1756, %v1764
    %v1767 = vmul.f32 %v1765, 1.442695
    %v1768 = vpow.pop %v1767
    %v1769 = vmul.f32 %v1766, 1.442695
    %v1770 = vpow.pop %v1769
    %v1771 = vsel %vm284, %v1768, 0.0
    %1772 = vadd.xlane.f32.xlu0 %v1771
    %v1773 = vpop.xlane.xlu0 %1772
    %v1774 = vsel %vm284, %v1770, 0.0
    %1775 = vadd.xlane.f32.xlu0 %v1774
    %v1776 = vpop.xlane.xlu0 %1775
    %1777 = vrot.lane.b32.xlu0 %v1462, 56
    %v1778 = vpop.permute.xlu0 %1777
    %1779 = vrot.lane.b32.xlu0 %v1467, 56
    %v1780 = vpop.permute.xlu0 %1779
    %v1784 = vsel %vm284, %v1768, 0
    %v1787 = vsel %vm284, %v1770, 0
    %1789 = vmatprep.subr.mxu0 0.0
    %1790 = vmatpush1.msra.mxu0 %v1778
    %1791 = vmatprep.subr.mxu0 0.0
    %1792 = vmatpush1.msra.mxu0 %v1780
    %1793 = vmatprep.subr.mxu0 0.0
    %1794 = vmatpush1.msra.mxu0 0.0
    %1795 = vmatprep.subr.mxu0 0.0
    %1796 = vmatpush1.msra.mxu0 0.0
    %1797 = vmatprep.subr.mxu0 0.0
    %1798 = vmatpush1.msra.mxu0 0.0
    %1799 = vmatprep.subr.mxu0 0.0
    %1800 = vmatpush1.msra.mxu0 0.0
    %1801 = vmatprep.subr.mxu0 0.0
    %1802 = vmatpush1.msra.mxu0 0.0
    %1803 = vmatprep.subr.mxu0 0.0
    %1804 = vmatpush1.msra.mxu0 0.0
    %1805 = vmatprep.subr.mxu0 0.0
    %1806 = vmatpush1.msra.mxu0 0.0
    %1807 = vmatprep.subr.mxu0 0.0
    %1808 = vmatpush1.msra.mxu0 0.0
    %1809 = vmatprep.subr.mxu0 0.0
    %1810 = vmatpush1.msra.mxu0 0.0
    %1811 = vmatprep.subr.mxu0 0.0
    %1812 = vmatpush1.msra.mxu0 0.0
    %1813 = vmatprep.subr.mxu0 0.0
    %1814 = vmatpush1.msra.mxu0 0.0
    %1815 = vmatprep.subr.mxu0 0.0
    %1816 = vmatpush1.msra.mxu0 0.0
    %1817 = vmatprep.subr.mxu0 0.0
    %1818 = vmatpush1.msra.mxu0 0.0
    %1819 = vmatprep.subr.mxu0 0.0
    %1820 = vmatpush1.msra.mxu0 0.0
    %1821 = vmatprep.subr.mxu0 0.0
    %1822 = vmatpush1.msra.mxu0 0.0
    %1823 = vmatprep.subr.mxu0 0.0
    %1824 = vmatpush1.msra.mxu0 0.0
    %1825 = vmatprep.subr.mxu0 0.0
    %1826 = vmatpush1.msra.mxu0 0.0
    %1827 = vmatprep.subr.mxu0 0.0
    %1828 = vmatpush1.msra.mxu0 0.0
    %1829 = vmatprep.subr.mxu0 0.0
    %1830 = vmatpush1.msra.mxu0 0.0
    %1831 = vmatprep.subr.mxu0 0.0
    %1832 = vmatpush1.msra.mxu0 0.0
    %1833 = vmatprep.subr.mxu0 0.0
    %1834 = vmatpush1.msra.mxu0 0.0
    %1835 = vmatprep.subr.mxu0 0.0
    %1836 = vmatpush1.msra.mxu0 0.0
    %1837 = vmatprep.subr.mxu0 0.0
    %1838 = vmatpush1.msra.mxu0 0.0
    %1839 = vmatprep.subr.mxu0 0.0
    %1840 = vmatpush1.msra.mxu0 0.0
    %1841 = vmatprep.subr.mxu0 0.0
    %1842 = vmatpush1.msra.mxu0 0.0
    %1843 = vmatprep.subr.mxu0 0.0
    %1844 = vmatpush1.msra.mxu0 0.0
    %1845 = vmatprep.subr.mxu0 0.0
    %1846 = vmatpush1.msra.mxu0 0.0
    %1847 = vmatprep.subr.mxu0 0.0
    %1848 = vmatpush1.msra.mxu0 0.0
    %1849 = vmatprep.subr.mxu0 0.0
    %1850 = vmatpush1.msra.mxu0 0.0
    %1851 = vmatprep.subr.mxu0 0.0
    %1852 = vmatpush1.msra.mxu0 0.0
    %1853 = vmatprep.mubr.f32.mxu0 0.0
    %1854 = vmatmul.mubr.f32.gmra.mrb[0].mxu0 %v1784
    %v1855 = vpop.f32.mrb[0].mxu0
    %v1856 = vadd.f32 0.0, %v1855
    %v1857 = vpop.f32.mrb[0].mxu0
    %1858 = vmatprep.mubr.f32.mxu0 0.0
    %1859 = vmatmul.mubr.f32.gmra.mrb[0].mxu0 %v1787
    %v1860 = vpop.f32.mrb[0].mxu0
    %v1861 = vadd.f32 0.0, %v1860
    %v1862 = vpop.f32.mrb[0].mxu0
    %1863 = vdwg.mxu0
    %v1864 = vrcp.pop %v1773
    %v1865 = vrcp.pop %v1776
    %v1866 = vmul.f32 %v1856, %v1864
    %v1867 = vmul.f32 %v1861, %v1865
    %1868 = vrot.lane.b32.xlu0 %v1462, 112
    %v1869 = vpop.permute.xlu0 %1868
    %1870 = vrot.lane.b32.xlu0 %v1467, 112
    %v1871 = vpop.permute.xlu0 %1870
    %1872 = vrot.lane.b32.xlu0 %v1462, 80
    %v1873 = vpop.permute.xlu0 %1872
    %1874 = vrot.lane.b32.xlu0 %v1467, 80
    %v1875 = vpop.permute.xlu0 %1874
    %v1876 = vsel %vm200, %v1869, 0
    %v1878 = vsel %vm200, %v1871, 0
    %v1880 = vsel %vm200, %v1873, 0
    %v1882 = vsel %vm200, %v1875, 0
    %1884 = vmatprep.subr.mxu0 0.0
    %1885 = vmatpush1.xpose.msra.mxu0 %v1880
    %1886 = vmatprep.subr.mxu0 0.0
    %1887 = vmatpush1.xpose.msra.mxu0 %v1882
    %1888 = vmatprep.subr.mxu0 0.0
    %1889 = vmatpush1.xpose.msra.mxu0 0.0
    %1890 = vmatprep.subr.mxu0 0.0
    %1891 = vmatpush1.xpose.msra.mxu0 0.0
    %1892 = vmatprep.subr.mxu0 0.0
    %1893 = vmatpush1.xpose.msra.mxu0 0.0
    %1894 = vmatprep.subr.mxu0 0.0
    %1895 = vmatpush1.xpose.msra.mxu0 0.0
    %1896 = vmatprep.subr.mxu0 0.0
    %1897 = vmatpush1.xpose.msra.mxu0 0.0
    %1898 = vmatprep.subr.mxu0 0.0
    %1899 = vmatpush1.xpose.msra.mxu0 0.0
    %1900 = vmatprep.subr.mxu0 0.0
    %1901 = vmatpush1.xpose.msra.mxu0 0.0
    %1902 = vmatprep.subr.mxu0 0.0
    %1903 = vmatpush1.xpose.msra.mxu0 0.0
    %1904 = vmatprep.subr.mxu0 0.0
    %1905 = vmatpush1.xpose.msra.mxu0 0.0
    %1906 = vmatprep.subr.mxu0 0.0
    %1907 = vmatpush1.xpose.msra.mxu0 0.0
    %1908 = vmatprep.subr.mxu0 0.0
    %1909 = vmatpush1.xpose.msra.mxu0 0.0
    %1910 = vmatprep.subr.mxu0 0.0
    %1911 = vmatpush1.xpose.msra.mxu0 0.0
    %1912 = vmatprep.subr.mxu0 0.0
    %1913 = vmatpush1.xpose.msra.mxu0 0.0
    %1914 = vmatprep.subr.mxu0 0.0
    %1915 = vmatpush1.xpose.msra.mxu0 0.0
    %1916 = vmatprep.subr.mxu0 0.0
    %1917 = vmatpush1.xpose.msra.mxu0 0.0
    %1918 = vmatprep.subr.mxu0 0.0
    %1919 = vmatpush1.xpose.msra.mxu0 0.0
    %1920 = vmatprep.subr.mxu0 0.0
    %1921 = vmatpush1.xpose.msra.mxu0 0.0
    %1922 = vmatprep.subr.mxu0 0.0
    %1923 = vmatpush1.xpose.msra.mxu0 0.0
    %1924 = vmatprep.subr.mxu0 0.0
    %1925 = vmatpush1.xpose.msra.mxu0 0.0
    %1926 = vmatprep.subr.mxu0 0.0
    %1927 = vmatpush1.xpose.msra.mxu0 0.0
    %1928 = vmatprep.subr.mxu0 0.0
    %1929 = vmatpush1.xpose.msra.mxu0 0.0
    %1930 = vmatprep.subr.mxu0 0.0
    %1931 = vmatpush1.xpose.msra.mxu0 0.0
    %1932 = vmatprep.subr.mxu0 0.0
    %1933 = vmatpush1.xpose.msra.mxu0 0.0
    %1934 = vmatprep.subr.mxu0 0.0
    %1935 = vmatpush1.xpose.msra.mxu0 0.0
    %1936 = vmatprep.subr.mxu0 0.0
    %1937 = vmatpush1.xpose.msra.mxu0 0.0
    %1938 = vmatprep.subr.mxu0 0.0
    %1939 = vmatpush1.xpose.msra.mxu0 0.0
    %1940 = vmatprep.subr.mxu0 0.0
    %1941 = vmatpush1.xpose.msra.mxu0 0.0
    %1942 = vmatprep.subr.mxu0 0.0
    %1943 = vmatpush1.xpose.msra.mxu0 0.0
    %1944 = vmatprep.subr.mxu0 0.0
    %1945 = vmatpush1.xpose.msra.mxu0 0.0
    %1946 = vmatprep.subr.mxu0 0.0
    %1947 = vmatpush1.xpose.msra.mxu0 0.0
    %1948 = vmatprep.mubr.f32.mxu0 0.0
    %1949 = vmatmul.mubr.f32.gmra.mrb[0].mxu0 %v1876
    %v1950 = vpop.f32.mrb[0].mxu0
    %v1951 = vadd.f32 %v83, %v1950
    %v1952 = vpop.f32.mrb[0].mxu0
    %1953 = vmatprep.mubr.f32.mxu0 0.0
    %1954 = vmatmul.mubr.f32.gmra.mrb[0].mxu0 %v1878
    %v1955 = vpop.f32.mrb[0].mxu0
    %v1956 = vadd.f32 %v84, %v1955
    %v1957 = vpop.f32.mrb[0].mxu0
    %1958 = vdwg.mxu0
    %v1959 = vsel %vm284, %v1951, -inf
    %1960 = vmax.xlane.f32.xlu0 %v1959
    %v1961 = vpop.xlane.xlu0 %1960
    %v1962 = vsel %vm284, %v1956, -inf
    %1963 = vmax.xlane.f32.xlu0 %v1962
    %v1964 = vpop.xlane.xlu0 %1963
    %v1965 = vsub.f32 %v1951, %v1961
    %v1966 = vsub.f32 %v1956, %v1964
    %v1967 = vmul.f32 %v1965, 1.442695
    %v1968 = vpow.pop %v1967
    %v1969 = vmul.f32 %v1966, 1.442695
    %v1970 = vpow.pop %v1969
    %v1971 = vsel %vm284, %v1968, 0.0
    %1972 = vadd.xlane.f32.xlu0 %v1971
    %v1973 = vpop.xlane.xlu0 %1972
    %v1974 = vsel %vm284, %v1970, 0.0
    %1975 = vadd.xlane.f32.xlu0 %v1974
    %v1976 = vpop.xlane.xlu0 %1975
    %1977 = vrot.lane.b32.xlu0 %v1462, 48
    %v1978 = vpop.permute.xlu0 %1977
    %1979 = vrot.lane.b32.xlu0 %v1467, 48
    %v1980 = vpop.permute.xlu0 %1979
    %v1984 = vsel %vm284, %v1968, 0
    %v1987 = vsel %vm284, %v1970, 0
    %1989 = vmatprep.subr.mxu0 0.0
    %1990 = vmatpush1.msra.mxu0 %v1978
    %1991 = vmatprep.subr.mxu0 0.0
    %1992 = vmatpush1.msra.mxu0 %v1980
    %1993 = vmatprep.subr.mxu0 0.0
    %1994 = vmatpush1.msra.mxu0 0.0
    %1995 = vmatprep.subr.mxu0 0.0
    %1996 = vmatpush1.msra.mxu0 0.0
    %1997 = vmatprep.subr.mxu0 0.0
    %1998 = vmatpush1.msra.mxu0 0.0
    %1999 = vmatprep.subr.mxu0 0.0
    %2000 = vmatpush1.msra.mxu0 0.0
    %2001 = vmatprep.subr.mxu0 0.0
    %2002 = vmatpush1.msra.mxu0 0.0
    %2003 = vmatprep.subr.mxu0 0.0
    %2004 = vmatpush1.msra.mxu0 0.0
    %2005 = vmatprep.subr.mxu0 0.0
    %2006 = vmatpush1.msra.mxu0 0.0
    %2007 = vmatprep.subr.mxu0 0.0
    %2008 = vmatpush1.msra.mxu0 0.0
    %2009 = vmatprep.subr.mxu0 0.0
    %2010 = vmatpush1.msra.mxu0 0.0
    %2011 = vmatprep.subr.mxu0 0.0
    %2012 = vmatpush1.msra.mxu0 0.0
    %2013 = vmatprep.subr.mxu0 0.0
    %2014 = vmatpush1.msra.mxu0 0.0
    %2015 = vmatprep.subr.mxu0 0.0
    %2016 = vmatpush1.msra.mxu0 0.0
    %2017 = vmatprep.subr.mxu0 0.0
    %2018 = vmatpush1.msra.mxu0 0.0
    %2019 = vmatprep.subr.mxu0 0.0
    %2020 = vmatpush1.msra.mxu0 0.0
    %2021 = vmatprep.subr.mxu0 0.0
    %2022 = vmatpush1.msra.mxu0 0.0
    %2023 = vmatprep.subr.mxu0 0.0
    %2024 = vmatpush1.msra.mxu0 0.0
    %2025 = vmatprep.subr.mxu0 0.0
    %2026 = vmatpush1.msra.mxu0 0.0
    %2027 = vmatprep.subr.mxu0 0.0
    %2028 = vmatpush1.msra.mxu0 0.0
    %2029 = vmatprep.subr.mxu0 0.0
    %2030 = vmatpush1.msra.mxu0 0.0
    %2031 = vmatprep.subr.mxu0 0.0
    %2032 = vmatpush1.msra.mxu0 0.0
    %2033 = vmatprep.subr.mxu0 0.0
    %2034 = vmatpush1.msra.mxu0 0.0
    %2035 = vmatprep.subr.mxu0 0.0
    %2036 = vmatpush1.msra.mxu0 0.0
    %2037 = vmatprep.subr.mxu0 0.0
    %2038 = vmatpush1.msra.mxu0 0.0
    %2039 = vmatprep.subr.mxu0 0.0
    %2040 = vmatpush1.msra.mxu0 0.0
    %2041 = vmatprep.subr.mxu0 0.0
    %2042 = vmatpush1.msra.mxu0 0.0
    %2043 = vmatprep.subr.mxu0 0.0
    %2044 = vmatpush1.msra.mxu0 0.0
    %2045 = vmatprep.subr.mxu0 0.0
    %2046 = vmatpush1.msra.mxu0 0.0
    %2047 = vmatprep.subr.mxu0 0.0
    %2048 = vmatpush1.msra.mxu0 0.0
    %2049 = vmatprep.subr.mxu0 0.0
    %2050 = vmatpush1.msra.mxu0 0.0
    %2051 = vmatprep.subr.mxu0 0.0
    %2052 = vmatpush1.msra.mxu0 0.0
    %2053 = vmatprep.mubr.f32.mxu0 0.0
    %2054 = vmatmul.mubr.f32.gmra.mrb[0].mxu0 %v1984
    %v2055 = vpop.f32.mrb[0].mxu0
    %v2056 = vadd.f32 0.0, %v2055
    %v2057 = vpop.f32.mrb[0].mxu0
    %2058 = vmatprep.mubr.f32.mxu0 0.0
    %2059 = vmatmul.mubr.f32.gmra.mrb[0].mxu0 %v1987
    %v2060 = vpop.f32.mrb[0].mxu0
    %v2061 = vadd.f32 0.0, %v2060
    %v2062 = vpop.f32.mrb[0].mxu0
    %2063 = vdwg.mxu0
    %v2064 = vrcp.pop %v1973
    %v2065 = vrcp.pop %v1976
    %v2066 = vmul.f32 %v2056, %v2064
    %v2067 = vmul.f32 %v2061, %v2065
    %2068 = vrot.lane.b32.xlu0 %v1462, 104
    %v2069 = vpop.permute.xlu0 %2068
    %2070 = vrot.lane.b32.xlu0 %v1467, 104
    %v2071 = vpop.permute.xlu0 %2070
    %2072 = vrot.lane.b32.xlu0 %v1462, 72
    %v2073 = vpop.permute.xlu0 %2072
    %2074 = vrot.lane.b32.xlu0 %v1467, 72
    %v2075 = vpop.permute.xlu0 %2074
    %v2076 = vsel %vm200, %v2069, 0
    %v2078 = vsel %vm200, %v2071, 0
    %v2080 = vsel %vm200, %v2073, 0
    %v2082 = vsel %vm200, %v2075, 0
    %2084 = vmatprep.subr.mxu0 0.0
    %2085 = vmatpush1.xpose.msra.mxu0 %v2080
    %2086 = vmatprep.subr.mxu0 0.0
    %2087 = vmatpush1.xpose.msra.mxu0 %v2082
    %2088 = vmatprep.subr.mxu0 0.0
    %2089 = vmatpush1.xpose.msra.mxu0 0.0
    %2090 = vmatprep.subr.mxu0 0.0
    %2091 = vmatpush1.xpose.msra.mxu0 0.0
    %2092 = vmatprep.subr.mxu0 0.0
    %2093 = vmatpush1.xpose.msra.mxu0 0.0
    %2094 = vmatprep.subr.mxu0 0.0
    %2095 = vmatpush1.xpose.msra.mxu0 0.0
    %2096 = vmatprep.subr.mxu0 0.0
    %2097 = vmatpush1.xpose.msra.mxu0 0.0
    %2098 = vmatprep.subr.mxu0 0.0
    %2099 = vmatpush1.xpose.msra.mxu0 0.0
    %2100 = vmatprep.subr.mxu0 0.0
    %2101 = vmatpush1.xpose.msra.mxu0 0.0
    %2102 = vmatprep.subr.mxu0 0.0
    %2103 = vmatpush1.xpose.msra.mxu0 0.0
    %2104 = vmatprep.subr.mxu0 0.0
    %2105 = vmatpush1.xpose.msra.mxu0 0.0
    %2106 = vmatprep.subr.mxu0 0.0
    %2107 = vmatpush1.xpose.msra.mxu0 0.0
    %2108 = vmatprep.subr.mxu0 0.0
    %2109 = vmatpush1.xpose.msra.mxu0 0.0
    %2110 = vmatprep.subr.mxu0 0.0
    %2111 = vmatpush1.xpose.msra.mxu0 0.0
    %2112 = vmatprep.subr.mxu0 0.0
    %2113 = vmatpush1.xpose.msra.mxu0 0.0
    %2114 = vmatprep.subr.mxu0 0.0
    %2115 = vmatpush1.xpose.msra.mxu0 0.0
    %2116 = vmatprep.subr.mxu0 0.0
    %2117 = vmatpush1.xpose.msra.mxu0 0.0
    %2118 = vmatprep.subr.mxu0 0.0
    %2119 = vmatpush1.xpose.msra.mxu0 0.0
    %2120 = vmatprep.subr.mxu0 0.0
    %2121 = vmatpush1.xpose.msra.mxu0 0.0
    %2122 = vmatprep.subr.mxu0 0.0
    %2123 = vmatpush1.xpose.msra.mxu0 0.0
    %2124 = vmatprep.subr.mxu0 0.0
    %2125 = vmatpush1.xpose.msra.mxu0 0.0
    %2126 = vmatprep.subr.mxu0 0.0
    %2127 = vmatpush1.xpose.msra.mxu0 0.0
    %2128 = vmatprep.subr.mxu0 0.0
    %2129 = vmatpush1.xpose.msra.mxu0 0.0
    %2130 = vmatprep.subr.mxu0 0.0
    %2131 = vmatpush1.xpose.msra.mxu0 0.0
    %2132 = vmatprep.subr.mxu0 0.0
    %2133 = vmatpush1.xpose.msra.mxu0 0.0
    %2134 = vmatprep.subr.mxu0 0.0
    %2135 = vmatpush1.xpose.msra.mxu0 0.0
    %2136 = vmatprep.subr.mxu0 0.0
    %2137 = vmatpush1.xpose.msra.mxu0 0.0
    %2138 = vmatprep.subr.mxu0 0.0
    %2139 = vmatpush1.xpose.msra.mxu0 0.0
    %2140 = vmatprep.subr.mxu0 0.0
    %2141 = vmatpush1.xpose.msra.mxu0 0.0
    %2142 = vmatprep.subr.mxu0 0.0
    %2143 = vmatpush1.xpose.msra.mxu0 0.0
    %2144 = vmatprep.subr.mxu0 0.0
    %2145 = vmatpush1.xpose.msra.mxu0 0.0
    %2146 = vmatprep.subr.mxu0 0.0
    %2147 = vmatpush1.xpose.msra.mxu0 0.0
    %2148 = vmatprep.mubr.f32.mxu0 0.0
    %2149 = vmatmul.mubr.f32.gmra.mrb[0].mxu0 %v2076
    %v2150 = vpop.f32.mrb[0].mxu0
    %v2151 = vadd.f32 %v83, %v2150
    %v2152 = vpop.f32.mrb[0].mxu0
    %2153 = vmatprep.mubr.f32.mxu0 0.0
    %2154 = vmatmul.mubr.f32.gmra.mrb[0].mxu0 %v2078
    %v2155 = vpop.f32.mrb[0].mxu0
    %v2156 = vadd.f32 %v84, %v2155
    %v2157 = vpop.f32.mrb[0].mxu0
    %2158 = vdwg.mxu0
    %v2159 = vsel %vm284, %v2151, -inf
    %2160 = vmax.xlane.f32.xlu0 %v2159
    %v2161 = vpop.xlane.xlu0 %2160
    %v2162 = vsel %vm284, %v2156, -inf
    %2163 = vmax.xlane.f32.xlu0 %v2162
    %v2164 = vpop.xlane.xlu0 %2163
    %v2165 = vsub.f32 %v2151, %v2161
    %v2166 = vsub.f32 %v2156, %v2164
    %v2167 = vmul.f32 %v2165, 1.442695
    %v2168 = vpow.pop %v2167
    %v2169 = vmul.f32 %v2166, 1.442695
    %v2170 = vpow.pop %v2169
    %v2171 = vsel %vm284, %v2168, 0.0
    %2172 = vadd.xlane.f32.xlu0 %v2171
    %v2173 = vpop.xlane.xlu0 %2172
    %v2174 = vsel %vm284, %v2170, 0.0
    %2175 = vadd.xlane.f32.xlu0 %v2174
    %v2176 = vpop.xlane.xlu0 %2175
    %2177 = vrot.lane.b32.xlu0 %v1462, 40
    %v2178 = vpop.permute.xlu0 %2177
    %2179 = vrot.lane.b32.xlu0 %v1467, 40
    %v2180 = vpop.permute.xlu0 %2179
    %v2184 = vsel %vm284, %v2168, 0
    %v2187 = vsel %vm284, %v2170, 0
    %2189 = vmatprep.subr.mxu0 0.0
    %2190 = vmatpush1.msra.mxu0 %v2178
    %2191 = vmatprep.subr.mxu0 0.0
    %2192 = vmatpush1.msra.mxu0 %v2180
    %2193 = vmatprep.subr.mxu0 0.0
    %2194 = vmatpush1.msra.mxu0 0.0
    %2195 = vmatprep.subr.mxu0 0.0
    %2196 = vmatpush1.msra.mxu0 0.0
    %2197 = vmatprep.subr.mxu0 0.0
    %2198 = vmatpush1.msra.mxu0 0.0
    %2199 = vmatprep.subr.mxu0 0.0
    %2200 = vmatpush1.msra.mxu0 0.0
    %2201 = vmatprep.subr.mxu0 0.0
    %2202 = vmatpush1.msra.mxu0 0.0
    %2203 = vmatprep.subr.mxu0 0.0
    %2204 = vmatpush1.msra.mxu0 0.0
    %2205 = vmatprep.subr.mxu0 0.0
    %2206 = vmatpush1.msra.mxu0 0.0
    %2207 = vmatprep.subr.mxu0 0.0
    %2208 = vmatpush1.msra.mxu0 0.0
    %2209 = vmatprep.subr.mxu0 0.0
    %2210 = vmatpush1.msra.mxu0 0.0
    %2211 = vmatprep.subr.mxu0 0.0
    %2212 = vmatpush1.msra.mxu0 0.0
    %2213 = vmatprep.subr.mxu0 0.0
    %2214 = vmatpush1.msra.mxu0 0.0
    %2215 = vmatprep.subr.mxu0 0.0
    %2216 = vmatpush1.msra.mxu0 0.0
    %2217 = vmatprep.subr.mxu0 0.0
    %2218 = vmatpush1.msra.mxu0 0.0
    %2219 = vmatprep.subr.mxu0 0.0
    %2220 = vmatpush1.msra.mxu0 0.0
    %2221 = vmatprep.subr.mxu0 0.0
    %2222 = vmatpush1.msra.mxu0 0.0
    %2223 = vmatprep.subr.mxu0 0.0
    %2224 = vmatpush1.msra.mxu0 0.0
    %2225 = vmatprep.subr.mxu0 0.0
    %2226 = vmatpush1.msra.mxu0 0.0
    %2227 = vmatprep.subr.mxu0 0.0
    %2228 = vmatpush1.msra.mxu0 0.0
    %2229 = vmatprep.subr.mxu0 0.0
    %2230 = vmatpush1.msra.mxu0 0.0
    %2231 = vmatprep.subr.mxu0 0.0
    %2232 = vmatpush1.msra.mxu0 0.0
    %2233 = vmatprep.subr.mxu0 0.0
    %2234 = vmatpush1.msra.mxu0 0.0
    %2235 = vmatprep.subr.mxu0 0.0
    %2236 = vmatpush1.msra.mxu0 0.0
    %2237 = vmatprep.subr.mxu0 0.0
    %2238 = vmatpush1.msra.mxu0 0.0
    %2239 = vmatprep.subr.mxu0 0.0
    %2240 = vmatpush1.msra.mxu0 0.0
    %2241 = vmatprep.subr.mxu0 0.0
    %2242 = vmatpush1.msra.mxu0 0.0
    %2243 = vmatprep.subr.mxu0 0.0
    %2244 = vmatpush1.msra.mxu0 0.0
    %2245 = vmatprep.subr.mxu0 0.0
    %2246 = vmatpush1.msra.mxu0 0.0
    %2247 = vmatprep.subr.mxu0 0.0
    %2248 = vmatpush1.msra.mxu0 0.0
    %2249 = vmatprep.subr.mxu0 0.0
    %2250 = vmatpush1.msra.mxu0 0.0
    %2251 = vmatprep.subr.mxu0 0.0
    %2252 = vmatpush1.msra.mxu0 0.0
    %2253 = vmatprep.mubr.f32.mxu0 0.0
    %2254 = vmatmul.mubr.f32.gmra.mrb[0].mxu0 %v2184
    %v2255 = vpop.f32.mrb[0].mxu0
    %v2256 = vadd.f32 0.0, %v2255
    %v2257 = vpop.f32.mrb[0].mxu0
    %2258 = vmatprep.mubr.f32.mxu0 0.0
    %2259 = vmatmul.mubr.f32.gmra.mrb[0].mxu0 %v2187
    %v2260 = vpop.f32.mrb[0].mxu0
    %v2261 = vadd.f32 0.0, %v2260
    %v2262 = vpop.f32.mrb[0].mxu0
    %2263 = vdwg.mxu0
    %v2264 = vrcp.pop %v2173
    %v2265 = vrcp.pop %v2176
    %v2266 = vmul.f32 %v2256, %v2264
    %v2267 = vmul.f32 %v2261, %v2265
    %2270 = vrot.lane.b32.xlu0 %v1866, 8
    %v2271 = vpop.permute.xlu0 %2270
    %2272 = vrot.lane.b32.xlu0 %v1867, 8
    %v2273 = vpop.permute.xlu0 %2272
    %2278 = vrot.lane.b32.xlu0 %v2066, 16
    %v2279 = vpop.permute.xlu0 %2278
    %2280 = vrot.lane.b32.xlu0 %v2067, 16
    %v2281 = vpop.permute.xlu0 %2280
    %2286 = vrot.lane.b32.xlu0 %v2266, 24
    %v2287 = vpop.permute.xlu0 %2286
    %2288 = vrot.lane.b32.xlu0 %v2267, 24
    %v2289 = vpop.permute.xlu0 %2288
    %v2292 = vsel %vm200, %v1666, %v2271
    %v2293 = vsel %vm200, %v1667, %v2273
    %v2294 = vsel %vm284, %v2292, %v2279
    %v2295 = vsel %vm284, %v2293, %v2281
    %v2296 = vsel %vm1022, %v2294, %v2287
    %v2297 = vsel %vm1022, %v2295, %v2289
    %v2298 = vlaneseq
    %v2299 = vshrl.u32 %v2298, 7
    %v2300 = vsub.s32 1, %v2299
    %v2301 = vrot.slane %v1384, %v2300
    %v2303 = vsel %vm112, %v2296, 0
    %v2306 = vsel %vm112, %v2297, 0
    %2308 = vmatprep.subr.mxu0 0.0
    %2309 = vmatpush1.msra.mxu0 %v1368
    %2310 = vmatprep.subr.mxu0 0.0
    %2311 = vmatpush1.msra.mxu0 %v1369
    %2312 = vmatprep.subr.mxu0 0.0
    %2313 = vmatpush1.msra.mxu0 %v1370
    %2314 = vmatprep.subr.mxu0 0.0
    %2315 = vmatpush1.msra.mxu0 %v1371
    %2316 = vmatprep.subr.mxu0 0.0
    %2317 = vmatpush1.msra.mxu0 0.0
    %2318 = vmatprep.subr.mxu0 0.0
    %2319 = vmatpush1.msra.mxu0 0.0
    %2320 = vmatprep.subr.mxu0 0.0
    %2321 = vmatpush1.msra.mxu0 0.0
    %2322 = vmatprep.subr.mxu0 0.0
    %2323 = vmatpush1.msra.mxu0 0.0
    %2324 = vmatprep.subr.mxu0 0.0
    %2325 = vmatpush1.msra.mxu0 0.0
    %2326 = vmatprep.subr.mxu0 0.0
    %2327 = vmatpush1.msra.mxu0 0.0
    %2328 = vmatprep.subr.mxu0 0.0
    %2329 = vmatpush1.msra.mxu0 0.0
    %2330 = vmatprep.subr.mxu0 0.0
    %2331 = vmatpush1.msra.mxu0 0.0
    %2332 = vmatprep.subr.mxu0 0.0
    %2333 = vmatpush1.msra.mxu0 0.0
    %2334 = vmatprep.subr.mxu0 0.0
    %2335 = vmatpush1.msra.mxu0 0.0
    %2336 = vmatprep.subr.mxu0 0.0
    %2337 = vmatpush1.msra.mxu0 0.0
    %2338 = vmatprep.subr.mxu0 0.0
    %2339 = vmatpush1.msra.mxu0 0.0
    %2340 = vmatprep.subr.mxu0 0.0
    %2341 = vmatpush1.msra.mxu0 0.0
    %2342 = vmatprep.subr.mxu0 0.0
    %2343 = vmatpush1.msra.mxu0 0.0
    %2344 = vmatprep.subr.mxu0 0.0
    %2345 = vmatpush1.msra.mxu0 0.0
    %2346 = vmatprep.subr.mxu0 0.0
    %2347 = vmatpush1.msra.mxu0 0.0
    %2348 = vmatprep.subr.mxu0 0.0
    %2349 = vmatpush1.msra.mxu0 0.0
    %2350 = vmatprep.subr.mxu0 0.0
    %2351 = vmatpush1.msra.mxu0 0.0
    %2352 = vmatprep.subr.mxu0 0.0
    %2353 = vmatpush1.msra.mxu0 0.0
    %2354 = vmatprep.subr.mxu0 0.0
    %2355 = vmatpush1.msra.mxu0 0.0
    %2356 = vmatprep.subr.mxu0 0.0
    %2357 = vmatpush1.msra.mxu0 0.0
    %2358 = vmatprep.subr.mxu0 0.0
    %2359 = vmatpush1.msra.mxu0 0.0
    %2360 = vmatprep.subr.mxu0 0.0
    %2361 = vmatpush1.msra.mxu0 0.0
    %2362 = vmatprep.subr.mxu0 0.0
    %2363 = vmatpush1.msra.mxu0 0.0
    %2364 = vmatprep.subr.mxu0 0.0
    %2365 = vmatpush1.msra.mxu0 0.0
    %2366 = vmatprep.subr.mxu0 0.0
    %2367 = vmatpush1.msra.mxu0 0.0
    %2368 = vmatprep.subr.mxu0 0.0
    %2369 = vmatpush1.msra.mxu0 0.0
    %2370 = vmatprep.subr.mxu0 0.0
    %2371 = vmatpush1.msra.mxu0 0.0
    %2372 = vmatprep.mubr.f32.mxu0 0.0
    %2373 = vmatmul.mubr.f32.gmra.mrb[0].mxu0 %v2303
    %v2374 = vpop.f32.mrb[0].mxu0
    %v2375 = vadd.f32 %v2301, %v2374
    %v2376 = vpop.f32.mrb[0].mxu0
    %2377 = vmatprep.mubr.f32.mxu0 0.0
    %2378 = vmatmul.mubr.f32.gmra.mrb[0].mxu0 %v2306
    %v2379 = vpop.f32.mrb[0].mxu0
    %v2380 = vadd.f32 %v2301, %v2379
    %v2381 = vpop.f32.mrb[0].mxu0
    %2382 = vdwg.mxu0
    %v2383 = vadd.f32 %v1362, %v2375
    %v2384 = vadd.f32 %v1363, %v2380
    %v2385 = vsel %vm112, %v2383, 0.0
    %2386 = vadd.xlane.f32.xlu0 %v2385
    %v2387 = vpop.xlane.xlu0 %2386
    %v2388 = vsel %vm112, %v2384, 0.0
    %2389 = vadd.xlane.f32.xlu0 %v2388
    %v2390 = vpop.xlane.xlu0 %2389
    %v2391 = vmul.f32 %v2387, %v1118
    %v2392 = vmul.f32 %v2390, %v1118
    %v2393 = vsub.f32 %v2383, %v2391
    %v2394 = vsub.f32 %v2384, %v2392
    %v2395 = vmul.f32 %v2393, %v2393
    %v2396 = vmul.f32 %v2394, %v2394
    %v2397 = vsel %vm112, %v2395, 0.0
    %2398 = vadd.xlane.f32.xlu0 %v2397
    %v2399 = vpop.xlane.xlu0 %2398
    %v2400 = vsel %vm112, %v2396, 0.0
    %2401 = vadd.xlane.f32.xlu0 %v2400
    %v2402 = vpop.xlane.xlu0 %2401
    %v2403 = vmul.f32 %v2399, %v1118
    %v2404 = vmul.f32 %v2402, %v1118
    %v2405 = vadd.f32 %v2403, 1e-05
    %v2406 = vadd.f32 %v2404, 1e-05
    %v2407 = vrsqrt.pop %v2405
    %v2408 = vrsqrt.pop %v2406
    %v2409 = vmul.f32 %v2393, %v2407
    %v2410 = vmul.f32 %v2394, %v2408
    %v2411 = vlaneseq
    %v2412 = vshrl.u32 %v2411, 7
    %v2413 = vsub.s32 2, %v2412
    %v2414 = vrot.slane %v1384, %v2413
    %v2415 = vmul.f32 %v2409, %v2414
    %v2416 = vmul.f32 %v2410, %v2414
    %v2417 = vlaneseq
    %v2418 = vshrl.u32 %v2417, 7
    %v2419 = vsub.s32 3, %v2418
    %v2420 = vrot.slane %v1384, %v2419
    %v2421 = vadd.f32 %v2415, %v2420
    %v2422 = vadd.f32 %v2416, %v2420
    %v2423 = vlaneseq
    %v2424 = vshrl.u32 %v2423, 7
    %v2425 = vsub.s32 4, %v2424
    %v2426 = vrot.slane %v1384, %v2425
    %v2428 = vsel %vm112, %v2421, 0
    %v2431 = vsel %vm112, %v2422, 0
    %2433 = vmatprep.subr.mxu0 0.0
    %2434 = vmatpush1.msra.mxu0 %v1372
    %2435 = vmatprep.subr.mxu0 0.0
    %2436 = vmatpush1.msra.mxu0 %v1373
    %2437 = vmatprep.subr.mxu0 0.0
    %2438 = vmatpush1.msra.mxu0 %v1374
    %2439 = vmatprep.subr.mxu0 0.0
    %2440 = vmatpush1.msra.mxu0 %v1375
    %2441 = vmatprep.subr.mxu0 0.0
    %2442 = vmatpush1.msra.mxu0 0.0
    %2443 = vmatprep.subr.mxu0 0.0
    %2444 = vmatpush1.msra.mxu0 0.0
    %2445 = vmatprep.subr.mxu0 0.0
    %2446 = vmatpush1.msra.mxu0 0.0
    %2447 = vmatprep.subr.mxu0 0.0
    %2448 = vmatpush1.msra.mxu0 0.0
    %2449 = vmatprep.subr.mxu0 0.0
    %2450 = vmatpush1.msra.mxu0 0.0
    %2451 = vmatprep.subr.mxu0 0.0
    %2452 = vmatpush1.msra.mxu0 0.0
    %2453 = vmatprep.subr.mxu0 0.0
    %2454 = vmatpush1.msra.mxu0 0.0
    %2455 = vmatprep.subr.mxu0 0.0
    %2456 = vmatpush1.msra.mxu0 0.0
    %2457 = vmatprep.subr.mxu0 0.0
    %2458 = vmatpush1.msra.mxu0 0.0
    %2459 = vmatprep.subr.mxu0 0.0
    %2460 = vmatpush1.msra.mxu0 0.0
    %2461 = vmatprep.subr.mxu0 0.0
    %2462 = vmatpush1.msra.mxu0 0.0
    %2463 = vmatprep.subr.mxu0 0.0
    %2464 = vmatpush1.msra.mxu0 0.0
    %2465 = vmatprep.subr.mxu0 0.0
    %2466 = vmatpush1.msra.mxu0 0.0
    %2467 = vmatprep.subr.mxu0 0.0
    %2468 = vmatpush1.msra.mxu0 0.0
    %2469 = vmatprep.subr.mxu0 0.0
    %2470 = vmatpush1.msra.mxu0 0.0
    %2471 = vmatprep.subr.mxu0 0.0
    %2472 = vmatpush1.msra.mxu0 0.0
    %2473 = vmatprep.subr.mxu0 0.0
    %2474 = vmatpush1.msra.mxu0 0.0
    %2475 = vmatprep.subr.mxu0 0.0
    %2476 = vmatpush1.msra.mxu0 0.0
    %2477 = vmatprep.subr.mxu0 0.0
    %2478 = vmatpush1.msra.mxu0 0.0
    %2479 = vmatprep.subr.mxu0 0.0
    %2480 = vmatpush1.msra.mxu0 0.0
    %2481 = vmatprep.subr.mxu0 0.0
    %2482 = vmatpush1.msra.mxu0 0.0
    %2483 = vmatprep.subr.mxu0 0.0
    %2484 = vmatpush1.msra.mxu0 0.0
    %2485 = vmatprep.subr.mxu0 0.0
    %2486 = vmatpush1.msra.mxu0 0.0
    %2487 = vmatprep.subr.mxu0 0.0
    %2488 = vmatpush1.msra.mxu0 0.0
    %2489 = vmatprep.subr.mxu0 0.0
    %2490 = vmatpush1.msra.mxu0 0.0
    %2491 = vmatprep.subr.mxu0 0.0
    %2492 = vmatpush1.msra.mxu0 0.0
    %2493 = vmatprep.subr.mxu0 0.0
    %2494 = vmatpush1.msra.mxu0 0.0
    %2495 = vmatprep.subr.mxu0 0.0
    %2496 = vmatpush1.msra.mxu0 0.0
    %2497 = vmatprep.mubr.f32.mxu0 0.0
    %2498 = vmatmul.mubr.f32.gmra.mrb[0].mxu0 %v2428
    %v2499 = vpop.f32.mrb[0].mxu0
    %v2500 = vadd.f32 %v2426, %v2499
    %v2501 = vpop.f32.mrb[0].mxu0
    %2502 = vmatprep.mubr.f32.mxu0 0.0
    %2503 = vmatmul.mubr.f32.gmra.mrb[0].mxu0 %v2431
    %v2504 = vpop.f32.mrb[0].mxu0
    %v2505 = vadd.f32 %v2426, %v2504
    %v2506 = vpop.f32.mrb[0].mxu0
    %2507 = vdwg.mxu0
    %v2508 = vmax.f32 %v2500, 0.0
    %v2509 = vmax.f32 %v2505, 0.0
    %v2510 = vlaneseq
    %v2511 = vshrl.u32 %v2510, 7
    %v2512 = vsub.s32 5, %v2511
    %v2513 = vrot.slane %v1384, %v2512
    %v2515 = vsel %vm1242, %v2508, 0
    %v2518 = vsel %vm1242, %v2509, 0
    %2520 = vmatprep.subr.mxu0 0.0
    %2521 = vmatpush1.msra.mxu0 %v1376
    %2522 = vmatprep.subr.mxu0 0.0
    %2523 = vmatpush1.msra.mxu0 %v1377
    %2524 = vmatprep.subr.mxu0 0.0
    %2525 = vmatpush1.msra.mxu0 %v1378
    %2526 = vmatprep.subr.mxu0 0.0
    %2527 = vmatpush1.msra.mxu0 %v1379
    %2528 = vmatprep.subr.mxu0 0.0
    %2529 = vmatpush1.msra.mxu0 %v1380
    %2530 = vmatprep.subr.mxu0 0.0
    %2531 = vmatpush1.msra.mxu0 %v1381
    %2532 = vmatprep.subr.mxu0 0.0
    %2533 = vmatpush1.msra.mxu0 %v1382
    %2534 = vmatprep.subr.mxu0 0.0
    %2535 = vmatpush1.msra.mxu0 %v1383
    %2536 = vmatprep.subr.mxu0 0.0
    %2537 = vmatpush1.msra.mxu0 0.0
    %2538 = vmatprep.subr.mxu0 0.0
    %2539 = vmatpush1.msra.mxu0 0.0
    %2540 = vmatprep.subr.mxu0 0.0
    %2541 = vmatpush1.msra.mxu0 0.0
    %2542 = vmatprep.subr.mxu0 0.0
    %2543 = vmatpush1.msra.mxu0 0.0
    %2544 = vmatprep.subr.mxu0 0.0
    %2545 = vmatpush1.msra.mxu0 0.0
    %2546 = vmatprep.subr.mxu0 0.0
    %2547 = vmatpush1.msra.mxu0 0.0
    %2548 = vmatprep.subr.mxu0 0.0
    %2549 = vmatpush1.msra.mxu0 0.0
    %2550 = vmatprep.subr.mxu0 0.0
    %2551 = vmatpush1.msra.mxu0 0.0
    %2552 = vmatprep.subr.mxu0 0.0
    %2553 = vmatpush1.msra.mxu0 0.0
    %2554 = vmatprep.subr.mxu0 0.0
    %2555 = vmatpush1.msra.mxu0 0.0
    %2556 = vmatprep.subr.mxu0 0.0
    %2557 = vmatpush1.msra.mxu0 0.0
    %2558 = vmatprep.subr.mxu0 0.0
    %2559 = vmatpush1.msra.mxu0 0.0
    %2560 = vmatprep.subr.mxu0 0.0
    %2561 = vmatpush1.msra.mxu0 0.0
    %2562 = vmatprep.subr.mxu0 0.0
    %2563 = vmatpush1.msra.mxu0 0.0
    %2564 = vmatprep.subr.mxu0 0.0
    %2565 = vmatpush1.msra.mxu0 0.0
    %2566 = vmatprep.subr.mxu0 0.0
    %2567 = vmatpush1.msra.mxu0 0.0
    %2568 = vmatprep.subr.mxu0 0.0
    %2569 = vmatpush1.msra.mxu0 0.0
    %2570 = vmatprep.subr.mxu0 0.0
    %2571 = vmatpush1.msra.mxu0 0.0
    %2572 = vmatprep.subr.mxu0 0.0
    %2573 = vmatpush1.msra.mxu0 0.0
    %2574 = vmatprep.subr.mxu0 0.0
    %2575 = vmatpush1.msra.mxu0 0.0
    %2576 = vmatprep.subr.mxu0 0.0
    %2577 = vmatpush1.msra.mxu0 0.0
    %2578 = vmatprep.subr.mxu0 0.0
    %2579 = vmatpush1.msra.mxu0 0.0
    %2580 = vmatprep.subr.mxu0 0.0
    %2581 = vmatpush1.msra.mxu0 0.0
    %2582 = vmatprep.subr.mxu0 0.0
    %2583 = vmatpush1.msra.mxu0 0.0
    %2584 = vmatprep.mubr.f32.mxu0 0.0
    %2585 = vmatmul.mubr.f32.gmra.mrb[0].mxu0 %v2515
    %v2586 = vpop.f32.mrb[0].mxu0
    %v2587 = vadd.f32 %v2513, %v2586
    %v2588 = vpop.f32.mrb[0].mxu0
    %2589 = vmatprep.mubr.f32.mxu0 0.0
    %2590 = vmatmul.mubr.f32.gmra.mrb[0].mxu0 %v2518
    %v2591 = vpop.f32.mrb[0].mxu0
    %v2592 = vadd.f32 %v2513, %v2591
    %v2593 = vpop.f32.mrb[0].mxu0
    %2594 = vdwg.mxu0
    %v2595 = vadd.f32 %v2421, %v2587
    %v2596 = vadd.f32 %v2422, %v2592
    %v2597 = vsel %vm112, %v2595, 0.0
    %2598 = vadd.xlane.f32.xlu0 %v2597
    %v2599 = vpop.xlane.xlu0 %2598
    %v2600 = vsel %vm112, %v2596, 0.0
    %2601 = vadd.xlane.f32.xlu0 %v2600
    %v2602 = vpop.xlane.xlu0 %2601
    %v2603 = vmul.f32 %v2599, %v1118
    %v2604 = vmul.f32 %v2602, %v1118
    %v2605 = vsub.f32 %v2595, %v2603
    %v2606 = vsub.f32 %v2596, %v2604
    %v2607 = vmul.f32 %v2605, %v2605
    %v2608 = vmul.f32 %v2606, %v2606
    %v2609 = vsel %vm112, %v2607, 0.0
    %2610 = vadd.xlane.f32.xlu0 %v2609
    %v2611 = vpop.xlane.xlu0 %2610
    %v2612 = vsel %vm112, %v2608, 0.0
    %2613 = vadd.xlane.f32.xlu0 %v2612
    %v2614 = vpop.xlane.xlu0 %2613
    %v2615 = vmul.f32 %v2611, %v1118
    %v2616 = vmul.f32 %v2614, %v1118
    %v2617 = vadd.f32 %v2615, 1e-05
    %v2618 = vadd.f32 %v2616, 1e-05
    %v2619 = vrsqrt.pop %v2617
    %v2620 = vrsqrt.pop %v2618
    %v2621 = vmul.f32 %v2605, %v2619
    %v2622 = vmul.f32 %v2606, %v2620
    %v2623 = vlaneseq
    %v2624 = vshrl.u32 %v2623, 7
    %v2625 = vsub.s32 6, %v2624
    %v2626 = vrot.slane %v1384, %v2625
    %v2627 = vmul.f32 %v2621, %v2626
    %v2628 = vmul.f32 %v2622, %v2626
    %v2629 = vlaneseq
    %v2630 = vshrl.u32 %v2629, 7
    %v2631 = vsub.s32 7, %v2630
    %v2632 = vrot.slane %v1384, %v2631
    %v2633 = vadd.f32 %v2627, %v2632
    %v2634 = vadd.f32 %v2628, %v2632
    %v2635 = vld [vmem:[#allocation5 + $0x150] sm:$0x1]
    %v2636 = vld [vmem:[#allocation5 + $0x151] sm:$0x1]
    %v2637 = vsel %vm112, %v2633, 0.0
    %2638 = vadd.xlane.f32.xlu0 %v2637
    %v2639 = vpop.xlane.xlu0 %2638
    %v2640 = vsel %vm112, %v2634, 0.0
    %2641 = vadd.xlane.f32.xlu0 %v2640
    %v2642 = vpop.xlane.xlu0 %2641
    %v2643 = vmul.f32 %v2639, %v1118
    %v2644 = vmul.f32 %v2642, %v1118
    %v2645 = vsub.f32 %v2633, %v2643
    %v2646 = vsub.f32 %v2634, %v2644
    %v2647 = vmul.f32 %v2645, %v2645
    %v2648 = vmul.f32 %v2646, %v2646
    %v2649 = vsel %vm112, %v2647, 0.0
    %2650 = vadd.xlane.f32.xlu0 %v2649
    %v2651 = vpop.xlane.xlu0 %2650
    %v2652 = vsel %vm112, %v2648, 0.0
    %2653 = vadd.xlane.f32.xlu0 %v2652
    %v2654 = vpop.xlane.xlu0 %2653
    %v2655 = vmul.f32 %v2651, %v1118
    %v2656 = vmul.f32 %v2654, %v1118
    %v2657 = vadd.f32 %v2655, 1e-05
    %v2658 = vadd.f32 %v2656, 1e-05
    %v2659 = vrsqrt.pop %v2657
    %v2660 = vrsqrt.pop %v2658
    %v2661 = vmul.f32 %v2645, %v2659
    %v2662 = vmul.f32 %v2646, %v2660
    %v2663 = vlaneseq
    %v2664 = vshrl.u32 %v2663, 7
    %v2665 = vsub.s32 0, %v2664
    %v2666 = vrot.slane %v2635, %v2665
    %v2667 = vmul.f32 %v2661, %v2666
    %v2668 = vmul.f32 %v2662, %v2666
    %v2669 = vlaneseq
    %v2670 = vshrl.u32 %v2669, 7
    %v2671 = vsub.s32 0, %v2670
    %v2672 = vrot.slane %v2636, %v2671
    %v2673 = vadd.f32 %v2667, %v2672
    %v2674 = vadd.f32 %v2668, %v2672
    %2675 = vst.msk [vmem:[#allocation7] sm:$0xff] %vm112, %v2673
    %2676 = vst.msk [vmem:[#allocation7 + $0x8] sm:$0xff] %vm112, %v2674
    // Predicated region
    $region18: #{tpu_custom_call.1} parent=1 // pred_check
      _
    $region19: #{tpu_custom_call.1} parent=1 // pred_check_branch
      %2678 = sbr.rel (0) target = $region21
    $region20: #{tpu_custom_call.1} parent=1 // pred_region
      %s2680 = ssub.s32 256, 256
      %2681 = vsyncadd [#allocation4], %s2680
      %s2682 = sshll.u32 [#allocation7], 4
      %s2683 = int_to_ptr.vmem [resolvable:$true] %s2682
      %2688 = dma.vmem_to_hbm [thread:$0]  %s2683, 256, %s2, [#allocation4], 128, 128, 8
    $region21: #{tpu_custom_call.1} parent=1 // pred_fallthru
      _
    // Predicated region
    $region22: #{tpu_custom_call.1} parent=1 // pred_check
      _
    $region23: #{tpu_custom_call.1} parent=1 // pred_check_branch
      %2690 = sbr.rel (0) target = $region25
    $region24: #{tpu_custom_call.1} parent=1 // pred_region
      %2691 = dma.done [#allocation4], 256
    $region25: #{tpu_custom_call.1} parent=1 // pred_fallthru
      _
    %2692 = vsyncpa [#allocation3], 1
    %2693 = vsyncpa [#allocation6], 1
    %2694 = vsyncpa [#allocation4], 1

</llo_original>
